<compile_context>
chip_gen: v7x
topology: tpu7x:2x2x1
jax: 0.10.0
libtpu: 0.0.40
codegen_flags: <defaults>
</compile_context>

<pallas_src>
import math

import jax
import jax.numpy as jnp
from jax.experimental import pallas as pl
from jax.experimental.pallas import tpu as pltpu


# ----------------------------------------------------------------------------
# Fully fused forward kernel
# ----------------------------------------------------------------------------
def _fused_signal_classifier_kernel(
    x1_ref,                        # (Bb, L/2, c1k) bf16  conv1 im2col (wrapper)
    w1_ref, b1_ref,                # (c1k, 64) bf16, (1, 64) f32   (BN folded)
    w2_ref, b2_ref,                # (320, 128) bf16, (1, 128) f32 (BN folded)
    w3_ref, b3_ref,                # (384, 256) bf16, (1, 256) f32 (BN folded)
    fw1_ref, fb1_ref,              # (L3*256, 512) bf16, (1, 512) f32
    fw2_ref, fb2_ref,              # (512, 256) bf16, (1, 256) f32
    fw3_ref, fb3_ref,              # (256, 128) f32, (1, 128) f32 (lane-padded)
    o_ref,                         # (Bb, 128) f32  lane-padded logits
    ev2_ref, od2_ref,              # (Bb, L/8 + 2, 64)  f32 conv2 phase scratch
    ev3_ref, od3_ref,              # (Bb, L/32 + 1, 128) f32 conv3 phase scratch
):
    Bb, Lc1, c1k = x1_ref.shape    # Lc1 = L/2 = conv1 output length
    n1 = Lc1 // 4                  # conv2 output length (= L/8)
    n2 = n1 // 4                   # conv3 output length (= L/32)
    L3 = n2 // 2                   # flattened length    (= L/64)

    # ---- conv1 + bn1 (folded) + relu: one wide matmul over im2col input ----
    z1 = jnp.dot(x1_ref[...].reshape(Bb * Lc1, c1k), w1_ref[...],
                 preferred_element_type=jnp.float32)
    z1 = jnp.maximum(z1 + b1_ref[...], 0.0)            # (Bb*L/2, 64) f32

    # ---- pool1, produced directly as even / odd pooled rows --------------
    z1 = z1.reshape(Bb, n1, 4, 64)
    h1e = jnp.maximum(z1[:, :, 0, :], z1[:, :, 1, :])  # pooled rows 0,2,4,...
    h1o = jnp.maximum(z1[:, :, 2, :], z1[:, :, 3, :])  # pooled rows 1,3,5,...

    # ---- conv2 (K=5, stride 2, pad 2): phase-padded scratch, halo-only zero --
    zr64 = jnp.zeros((Bb, 1, 64), jnp.float32)
    ev2_ref[:, 0:1, :] = zr64
    ev2_ref[:, n1 + 1:n1 + 2, :] = zr64
    od2_ref[:, 0:1, :] = zr64
    od2_ref[:, n1 + 1:n1 + 2, :] = zr64
    ev2_ref[:, 1:n1 + 1, :] = h1e                      # even padded rows
    od2_ref[:, 1:n1 + 1, :] = h1o                      # odd  padded rows
    # Tap k of output t reads padded row 2t+k = phase (k%2), offset t + k//2.
    a2 = jnp.concatenate([
        ev2_ref[:, 0:n1, :],          # k=0
        od2_ref[:, 0:n1, :],          # k=1
        ev2_ref[:, 1:n1 + 1, :],      # k=2
        od2_ref[:, 1:n1 + 1, :],      # k=3
        ev2_ref[:, 2:n1 + 2, :],      # k=4
    ], axis=-1).astype(jnp.bfloat16)                   # (Bb, n1, 320)
    z2 = jnp.dot(a2.reshape(Bb * n1, 5 * 64), w2_ref[...],
                 preferred_element_type=jnp.float32)
    z2 = jnp.maximum(z2 + b2_ref[...], 0.0)            # (Bb*n1, 128)

    # ---- pool2 (even / odd split again) ----
    z2 = z2.reshape(Bb, n2, 4, 128)
    h2e = jnp.maximum(z2[:, :, 0, :], z2[:, :, 1, :])
    h2o = jnp.maximum(z2[:, :, 2, :], z2[:, :, 3, :])

    # ---- conv3 (K=3, stride 2, pad 1) ----
    zr128 = jnp.zeros((Bb, 1, 128), jnp.float32)
    ev3_ref[:, 0:1, :] = zr128                         # padded row 0 (halo)
    ev3_ref[:, 1:n2 + 1, :] = h2o                      # even padded rows 2,4,...
    od3_ref[:, 0:n2, :] = h2e                          # odd  padded rows 1,3,...
    od3_ref[:, n2:n2 + 1, :] = zr128                   # padded row L2+1 (halo)
    a3 = jnp.concatenate([
        ev3_ref[:, 0:n2, :],          # k=0
        od3_ref[:, 0:n2, :],          # k=1
        ev3_ref[:, 1:n2 + 1, :],      # k=2
    ], axis=-1).astype(jnp.bfloat16)                   # (Bb, n2, 384)
    z3 = jnp.dot(a3.reshape(Bb * n2, 3 * 128), w3_ref[...],
                 preferred_element_type=jnp.float32)
    z3 = jnp.maximum(z3 + b3_ref[...], 0.0)            # (Bb*n2, 256)

    # ---- pool3 + position-major flatten ----
    z3 = z3.reshape(Bb, L3, 2, 256)
    h3 = jnp.maximum(z3[:, :, 0, :], z3[:, :, 1, :])   # (Bb, L3, 256)
    flat = jnp.concatenate([h3[:, l, :] for l in range(L3)],
                           axis=-1).astype(jnp.bfloat16)   # (Bb, L3*256)

    # ---- MLP head; dropout = identity in eval ----
    h_fc1 = jnp.dot(flat, fw1_ref[...], preferred_element_type=jnp.float32)
    h_fc1 = jnp.maximum(h_fc1 + fb1_ref[...], 0.0)
    h_fc2 = jnp.dot(h_fc1.astype(jnp.bfloat16), fw2_ref[...],
                    preferred_element_type=jnp.float32)
    h_fc2 = jnp.maximum(h_fc2 + fb2_ref[...], 0.0)
    o_ref[...] = jnp.dot(h_fc2, fw3_ref[...],
                         preferred_element_type=jnp.float32) + fb3_ref[...]


# ----------------------------------------------------------------------------
# Wrapper: weight folding / layout prep + the single pallas_call
# ----------------------------------------------------------------------------
def _fold_conv_bn(w, b, gamma, beta, rmean, rvar, eps=1e-5):
    # BatchNorm1d (eval) folded into the conv:
    #   BN(conv(x,w)+b) == conv(x, w*s) + ((b - rmean)*s + beta),
    #   s = gamma / sqrt(rvar + eps)
    s = gamma / jnp.sqrt(rvar + eps)
    w_taps = jnp.transpose(w, (2, 1, 0)) * s[None, None, :]   # (K, C_in, C_out)
    K, C_in, C_out = w_taps.shape
    w_mat = w_taps.reshape(K * C_in, C_out).astype(jnp.bfloat16)  # tap-major rows
    b_eff = ((b - rmean) * s + beta).reshape(1, -1).astype(jnp.float32)
    return w_mat, b_eff


def _pick_batch_block(B, L):
    # The batch block is the M dimension of every matmul: make it as large as
    # practical (fills MXU rows, amortizes grid-step overhead) while keeping
    # the per-block activation + scratch working set ~16 MiB so it fits v7x's
    # 64 MiB VMEM with headroom; only split into multiple-of-8 blocks.
    cap = max(8, min(128, (16 * 1024 * 1024) // (512 * L)))
    if B <= cap:
        return B
    best = None
    for cand in range(8, cap + 1, 8):
        if B % cand == 0:
            best = cand
    return best if best is not None else B


@jax.jit
def signal_classifier_forward(params, x):
    """x: (B, C_in, L) NCL, same as the PyTorch Conv1d input.  Eval mode."""
    B, C_in, L = x.shape
    assert L % 64 == 0, "3x (stride-2 conv + pool/2) pipeline needs L % 64 == 0"
    Lc1 = L // 2                        # conv1 output length
    L3 = L // 64                        # length after conv3 + pool3
    # explicit evenness checks for the even/odd phase decomposition
    assert Lc1 % 4 == 0 and (L // 8) % 4 == 0 and (L // 32) % 2 == 0

    c3 = 256
    d_fc1 = params["fw1"].shape[1]      # 512
    n_cls = params["fw3"].shape[1]
    assert params["fw1"].shape[0] == c3 * L3
    ncls_pad = ((n_cls + 127) // 128) * 128

    # --- parameter prep (tiny, weight-only XLA ops) ---
    w1m, b1e = _fold_conv_bn(params["w1"], params["b1"], params["g1"],
                             params["be1"], params["rm1"], params["rv1"])
    w2m, b2e = _fold_conv_bn(params["w2"], params["b2"], params["g2"],
                             params["be2"], params["rm2"], params["rv2"])
    w3m, b3e = _fold_conv_bn(params["w3"], params["b3"], params["g3"],
                             params["be3"], params["rm3"], params["rv3"])
    c1_rows = 7 * C_in
    c1k = ((c1_rows + 7) // 8) * 8
    w1m = jnp.pad(w1m, ((0, c1k - c1_rows), (0, 0)))

    # fc1 rows reordered from torch's channel-major flatten (c*L3 + l) to the
    # kernel's position-major flatten (l*256 + c) -> fc1 is ONE matmul.
    fw1r = jnp.transpose(params["fw1"].reshape(c3, L3, d_fc1), (1, 0, 2))
    fw1r = fw1r.reshape(L3 * c3, d_fc1).astype(jnp.bfloat16)
    fb1e = params["fb1"].reshape(1, -1).astype(jnp.float32)
    fw2c = params["fw2"].astype(jnp.bfloat16)
    fb2e = params["fb2"].reshape(1, -1).astype(jnp.float32)
    # fc3 kept f32 (tiny) and lane-padded to 128 columns -> dense output store.
    fw3p = jnp.pad(params["fw3"].astype(jnp.float32),
                   ((0, 0), (0, ncls_pad - n_cls)))
    fb3p = jnp.pad(params["fb3"].reshape(1, -1).astype(jnp.float32),
                   ((0, 0), (0, ncls_pad - n_cls)))

    # --- conv1 im2col built in the wrapper (KB-scale), fed as (B, L/2, c1k) ---
    x_cl = jnp.transpose(x, (0, 2, 1)).astype(jnp.float32)      # (B, L, C_in)
    xp = jnp.pad(x_cl, ((0, 0), (3, 3), (0, 0)))                # (B, L+6, C_in)
    cols = [xp[:, k:k + L:2, :] for k in range(7)]              # padded idx 2t+k
    x1 = jnp.concatenate(cols, axis=-1)                         # (B, L/2, 7*C_in)
    x1 = jnp.pad(x1, ((0, 0), (0, 0), (0, c1k - c1_rows))).astype(jnp.bfloat16)

    bb = _pick_batch_block(B, L)
    nb = B // bb

    def const_spec(a):
        nd = a.ndim
        return pl.BlockSpec(a.shape, lambda i: (0,) * nd)

    # TODO(synk): constant weight inputs are still double-buffered by the
    # pipeline; single-buffering them (pl.Buffered(1) / scratch preload) would
    # reclaim weight-sized VMEM on v7x at large batch blocks.
    out_padded = pl.pallas_call(
        _fused_signal_classifier_kernel,
        out_shape=jax.ShapeDtypeStruct((B, ncls_pad), jnp.float32),
        grid=(nb,),
        in_specs=[
            pl.BlockSpec((bb, Lc1, c1k), lambda i: (i, 0, 0)),
            const_spec(w1m), const_spec(b1e),
            const_spec(w2m), const_spec(b2e),
            const_spec(w3m), const_spec(b3e),
            const_spec(fw1r), const_spec(fb1e),
            const_spec(fw2c), const_spec(fb2e),
            const_spec(fw3p), const_spec(fb3p),
        ],
        out_specs=pl.BlockSpec((bb, ncls_pad), lambda i: (i, 0)),
        scratch_shapes=[
            pltpu.VMEM((bb, L // 8 + 2, 64), jnp.float32),     # conv2 even phase
            pltpu.VMEM((bb, L // 8 + 2, 64), jnp.float32),     # conv2 odd phase
            pltpu.VMEM((bb, L // 32 + 1, 128), jnp.float32),   # conv3 even phase
            pltpu.VMEM((bb, L // 32 + 1, 128), jnp.float32),   # conv3 odd phase
        ],
        compiler_params=pltpu.CompilerParams(
            dimension_semantics=("parallel",),
            vmem_limit_bytes=64 * 1024 * 1024),
    )(x1, w1m, b1e, w2m, b2e, w3m, b3e, fw1r, fb1e, fw2c, fb2e, fw3p, fb3p)

    return out_padded[:, :n_cls]


# ----------------------------------------------------------------------------
# Pure-JAX reference (eval semantics) for a numerical sanity check
# ----------------------------------------------------------------------------
def _reference_forward(params, x, eps=1e-5):
    def stage(h, w, b, g, be, rm, rv, stride, pad):
        y = jax.lax.conv_general_dilated(
            h, w, window_strides=(stride,), padding=[(pad, pad)],
            dimension_numbers=("NCH", "OIH", "NCH"))
        y = y + b[None, :, None]
        y = (y - rm[None, :, None]) / jnp.sqrt(rv[None, :, None] + eps)
        y = y * g[None, :, None] + be[None, :, None]
        y = jnp.maximum(y, 0.0)
        return jax.lax.reduce_window(y, -jnp.inf, jax.lax.max,
                                     (1, 1, 2), (1, 1, 2), "VALID")

    h = stage(x, params["w1"], params["b1"], params["g1"], params["be1"],
              params["rm1"], params["rv1"], 2, 3)
    h = stage(h, params["w2"], params["b2"], params["g2"], params["be2"],
              params["rm2"], params["rv2"], 2, 2)
    h = stage(h, params["w3"], params["b3"], params["g3"], params["be3"],
              params["rm3"], params["rv3"], 2, 1)
    flat = h.reshape(h.shape[0], -1)                 # torch x.view(B, -1) order
    h1 = jnp.maximum(flat @ params["fw1"] + params["fb1"], 0.0)
    h2 = jnp.maximum(h1 @ params["fw2"] + params["fb2"], 0.0)
    return h2 @ params["fw3"] + params["fb3"]


# ----------------------------------------------------------------------------
# Deterministic synthetic parameters
# ----------------------------------------------------------------------------
def init_params(key, num_classes=11, input_channels=2, signal_length=128):
    ks = jax.random.split(key, 16)

    def conv_w(k, cout, cin, ksz):
        return (jax.random.normal(k, (cout, cin, ksz), jnp.float32)
                / math.sqrt(cin * ksz))

    def lin_w(k, fin, fout):
        return jax.random.normal(k, (fin, fout), jnp.float32) / math.sqrt(fin)

    def bn(k, c):   # eval-mode BatchNorm stats (randomized to exercise folding)
        k1, k2, k3, k4 = jax.random.split(k, 4)
        gamma = 1.0 + 0.1 * jax.random.normal(k1, (c,), jnp.float32)
        beta = 0.1 * jax.random.normal(k2, (c,), jnp.float32)
        rmean = 0.1 * jax.random.normal(k3, (c,), jnp.float32)
        rvar = jax.random.uniform(k4, (c,), jnp.float32, minval=0.5, maxval=1.5)
        return gamma, beta, rmean, rvar

    flat_dim = 256 * (signal_length // 64)
    # TODO(synk): reference flatten_dim = 256*(signal_length//32) is inconsistent
    # with the actual activation size and would crash in PyTorch; fc1 is sized
    # from the actual flattened size 256*(signal_length//64).

    p = {}
    p["w1"] = conv_w(ks[0], 64, input_channels, 7)
    p["b1"] = 0.01 * jax.random.normal(ks[1], (64,), jnp.float32)
    p["g1"], p["be1"], p["rm1"], p["rv1"] = bn(ks[2], 64)
    p["w2"] = conv_w(ks[3], 128, 64, 5)
    p["b2"] = 0.01 * jax.random.normal(ks[4], (128,), jnp.float32)
    p["g2"], p["be2"], p["rm2"], p["rv2"] = bn(ks[5], 128)
    p["w3"] = conv_w(ks[6], 256, 128, 3)
    p["b3"] = 0.01 * jax.random.normal(ks[7], (256,), jnp.float32)
    p["g3"], p["be3"], p["rm3"], p["rv3"] = bn(ks[8], 256)
    p["fw1"] = lin_w(ks[9], flat_dim, 512)
    p["fb1"] = 0.01 * jax.random.normal(ks[10], (512,), jnp.float32)
    p["fw2"] = lin_w(ks[11], 512, 256)
    p["fb2"] = 0.01 * jax.random.normal(ks[12], (256,), jnp.float32)
    p["fw3"] = lin_w(ks[13], 256, num_classes)
    p["fb3"] = 0.01 * jax.random.normal(ks[14], (num_classes,), jnp.float32)
    return p


if __name__ == "__main__":
    key = jax.random.PRNGKey(0)
    k_param, k_x = jax.random.split(key)

    B, C_IN, L = 2, 2, 128          # small shapes consistent with the module
    NUM_CLASSES = 11

    params = init_params(k_param, num_classes=NUM_CLASSES,
                         input_channels=C_IN, signal_length=L)
    x = jax.random.normal(k_x, (B, C_IN, L), jnp.float32)

    logits = signal_classifier_forward(params, x)
    jax.block_until_ready(logits)

    assert logits.shape == (B, NUM_CLASSES), logits.shape
    assert bool(jnp.all(jnp.isfinite(logits)))

    # Numerical sanity check vs. pure-JAX reference (bf16 matmul operands in
    # the kernel -> loose tolerance; structural bugs would be O(1) off).
    ref = _reference_forward(params, x)
    err = float(jnp.max(jnp.abs(logits - ref)))
    assert err < 0.1, f"max |kernel - reference| = {err}"

    print("KERNEL_OK")
</pallas_src>

<mosaic_0001>
module attributes {stable_mosaic.version = 11 : i64} {
  func.func @_fused_signal_classifier_kernel(%arg0: i32, %arg1: memref<2x64x16xbf16, #tpu.memory_space<vmem>>, %arg2: memref<16x64xbf16, #tpu.memory_space<vmem>>, %arg3: memref<1x64xf32, #tpu.memory_space<vmem>>, %arg4: memref<320x128xbf16, #tpu.memory_space<vmem>>, %arg5: memref<1x128xf32, #tpu.memory_space<vmem>>, %arg6: memref<384x256xbf16, #tpu.memory_space<vmem>>, %arg7: memref<1x256xf32, #tpu.memory_space<vmem>>, %arg8: memref<512x512xbf16, #tpu.memory_space<vmem>>, %arg9: memref<1x512xf32, #tpu.memory_space<vmem>>, %arg10: memref<512x256xbf16, #tpu.memory_space<vmem>>, %arg11: memref<1x256xf32, #tpu.memory_space<vmem>>, %arg12: memref<256x128xf32, #tpu.memory_space<vmem>>, %arg13: memref<1x128xf32, #tpu.memory_space<vmem>>, %arg14: memref<2x128xf32, #tpu.memory_space<vmem>>, %arg15: memref<2x18x64xf32, #tpu.memory_space<vmem>>, %arg16: memref<2x18x64xf32, #tpu.memory_space<vmem>>, %arg17: memref<2x5x128xf32, #tpu.memory_space<vmem>>, %arg18: memref<2x5x128xf32, #tpu.memory_space<vmem>>) attributes {dimension_semantics = [#tpu.dimension_semantics<parallel>], iteration_bounds = array<i64: 1>, scalar_prefetch = 0 : i64, scratch_operands = 4 : i64, tpu.core_type = #tpu.core_type<tc>, window_params = [{transform_indices = @transform_0, window_bounds = array<i64: 2, 64, 16>}, {pipeline_mode = #tpu.pipeline_mode<synchronous>, transform_indices = @transform_1, window_bounds = array<i64: 16, 64>}, {pipeline_mode = #tpu.pipeline_mode<synchronous>, transform_indices = @transform_2, window_bounds = array<i64: 1, 64>}, {pipeline_mode = #tpu.pipeline_mode<synchronous>, transform_indices = @transform_3, window_bounds = array<i64: 320, 128>}, {pipeline_mode = #tpu.pipeline_mode<synchronous>, transform_indices = @transform_4, window_bounds = array<i64: 1, 128>}, {pipeline_mode = #tpu.pipeline_mode<synchronous>, transform_indices = @transform_5, window_bounds = array<i64: 384, 256>}, {pipeline_mode = #tpu.pipeline_mode<synchronous>, transform_indices = @transform_6, window_bounds = array<i64: 1, 256>}, {pipeline_mode = #tpu.pipeline_mode<synchronous>, transform_indices = @transform_7, window_bounds = array<i64: 512, 512>}, {pipeline_mode = #tpu.pipeline_mode<synchronous>, transform_indices = @transform_8, window_bounds = array<i64: 1, 512>}, {pipeline_mode = #tpu.pipeline_mode<synchronous>, transform_indices = @transform_9, window_bounds = array<i64: 512, 256>}, {pipeline_mode = #tpu.pipeline_mode<synchronous>, transform_indices = @transform_10, window_bounds = array<i64: 1, 256>}, {pipeline_mode = #tpu.pipeline_mode<synchronous>, transform_indices = @transform_11, window_bounds = array<i64: 256, 128>}, {pipeline_mode = #tpu.pipeline_mode<synchronous>, transform_indices = @transform_12, window_bounds = array<i64: 1, 128>}, {transform_indices = @transform_13, window_bounds = array<i64: 2, 128>}]} {
    %c0 = arith.constant 0 : index
    %c0_0 = arith.constant 0 : index
    %c0_1 = arith.constant 0 : index
    %0 = vector.load %arg1[%c0, %c0_0, %c0_1] : memref<2x64x16xbf16, #tpu.memory_space<vmem>>, vector<2x64x16xbf16>
    %1 = vector.shape_cast %0 : vector<2x64x16xbf16> to vector<128x16xbf16>
    %c0_2 = arith.constant 0 : index
    %c0_3 = arith.constant 0 : index
    %2 = vector.load %arg2[%c0_2, %c0_3] : memref<16x64xbf16, #tpu.memory_space<vmem>>, vector<16x64xbf16>
    %cst = arith.constant dense<0.000000e+00> : vector<128x64xf32>
    %3 = tpu.matmul %1, %2, %cst {dimension_numbers = #tpu.dot_dimension_numbers<[1], [0], [0], [1], [0, 0, 1, 1], [], []>} : vector<128x16xbf16>, vector<16x64xbf16>, vector<128x64xf32> -> vector<128x64xf32>
    %c0_4 = arith.constant 0 : index
    %c0_5 = arith.constant 0 : index
    %4 = vector.load %arg3[%c0_4, %c0_5] : memref<1x64xf32, #tpu.memory_space<vmem>>, vector<1x64xf32>
    %5 = vector.broadcast %4 : vector<1x64xf32> to vector<128x64xf32>
    %6 = arith.addf %3, %5 : vector<128x64xf32>
    %cst_6 = arith.constant 0.000000e+00 : f32
    %7 = vector.broadcast %cst_6 : f32 to vector<128x64xf32>
    %8 = arith.maximumf %6, %7 : vector<128x64xf32>
    %9 = vector.shape_cast %8 : vector<128x64xf32> to vector<2x16x4x64xf32>
    %10 = vector.extract_strided_slice %9 {offsets = [0, 0, 0, 0], sizes = [2, 16, 1, 64], strides = [1, 1, 1, 1]} : vector<2x16x4x64xf32> to vector<2x16x1x64xf32>
    %11 = vector.shape_cast %10 : vector<2x16x1x64xf32> to vector<2x16x64xf32>
    %12 = vector.extract_strided_slice %9 {offsets = [0, 0, 1, 0], sizes = [2, 16, 1, 64], strides = [1, 1, 1, 1]} : vector<2x16x4x64xf32> to vector<2x16x1x64xf32>
    %13 = vector.shape_cast %12 : vector<2x16x1x64xf32> to vector<2x16x64xf32>
    %14 = arith.maximumf %11, %13 : vector<2x16x64xf32>
    %15 = vector.extract_strided_slice %9 {offsets = [0, 0, 2, 0], sizes = [2, 16, 1, 64], strides = [1, 1, 1, 1]} : vector<2x16x4x64xf32> to vector<2x16x1x64xf32>
    %16 = vector.shape_cast %15 : vector<2x16x1x64xf32> to vector<2x16x64xf32>
    %17 = vector.extract_strided_slice %9 {offsets = [0, 0, 3, 0], sizes = [2, 16, 1, 64], strides = [1, 1, 1, 1]} : vector<2x16x4x64xf32> to vector<2x16x1x64xf32>
    %18 = vector.shape_cast %17 : vector<2x16x1x64xf32> to vector<2x16x64xf32>
    %19 = arith.maximumf %16, %18 : vector<2x16x64xf32>
    %cst_7 = arith.constant 0.000000e+00 : f32
    %20 = vector.broadcast %cst_7 : f32 to vector<2x1x64xf32>
    %c0_8 = arith.constant 0 : index
    %c0_9 = arith.constant 0 : index
    %c0_10 = arith.constant 0 : index
    %21 = vector.load %arg15[%c0_8, %c0_9, %c0_10] : memref<2x18x64xf32, #tpu.memory_space<vmem>>, vector<2x1x64xf32>
    tpu.vector_store %arg15[%c0_8, %c0_9, %c0_10], %20 {strides = array<i32>} : memref<2x18x64xf32, #tpu.memory_space<vmem>>, vector<2x1x64xf32>,
    %c0_11 = arith.constant 0 : index
    %c17 = arith.constant 17 : index
    %c0_12 = arith.constant 0 : index
    %22 = vector.load %arg15[%c0_11, %c17, %c0_12] : memref<2x18x64xf32, #tpu.memory_space<vmem>>, vector<2x1x64xf32>
    tpu.vector_store %arg15[%c0_11, %c17, %c0_12], %20 {strides = array<i32>} : memref<2x18x64xf32, #tpu.memory_space<vmem>>, vector<2x1x64xf32>,
    %c0_13 = arith.constant 0 : index
    %c0_14 = arith.constant 0 : index
    %c0_15 = arith.constant 0 : index
    %23 = vector.load %arg16[%c0_13, %c0_14, %c0_15] : memref<2x18x64xf32, #tpu.memory_space<vmem>>, vector<2x1x64xf32>
    tpu.vector_store %arg16[%c0_13, %c0_14, %c0_15], %20 {strides = array<i32>} : memref<2x18x64xf32, #tpu.memory_space<vmem>>, vector<2x1x64xf32>,
    %c0_16 = arith.constant 0 : index
    %c17_17 = arith.constant 17 : index
    %c0_18 = arith.constant 0 : index
    %24 = vector.load %arg16[%c0_16, %c17_17, %c0_18] : memref<2x18x64xf32, #tpu.memory_space<vmem>>, vector<2x1x64xf32>
    tpu.vector_store %arg16[%c0_16, %c17_17, %c0_18], %20 {strides = array<i32>} : memref<2x18x64xf32, #tpu.memory_space<vmem>>, vector<2x1x64xf32>,
    %c0_19 = arith.constant 0 : index
    %c1 = arith.constant 1 : index
    %c0_20 = arith.constant 0 : index
    %25 = vector.load %arg15[%c0_19, %c1, %c0_20] : memref<2x18x64xf32, #tpu.memory_space<vmem>>, vector<2x16x64xf32>
    tpu.vector_store %arg15[%c0_19, %c1, %c0_20], %14 {strides = array<i32>} : memref<2x18x64xf32, #tpu.memory_space<vmem>>, vector<2x16x64xf32>,
    %c0_21 = arith.constant 0 : index
    %c1_22 = arith.constant 1 : index
    %c0_23 = arith.constant 0 : index
    %26 = vector.load %arg16[%c0_21, %c1_22, %c0_23] : memref<2x18x64xf32, #tpu.memory_space<vmem>>, vector<2x16x64xf32>
    tpu.vector_store %arg16[%c0_21, %c1_22, %c0_23], %19 {strides = array<i32>} : memref<2x18x64xf32, #tpu.memory_space<vmem>>, vector<2x16x64xf32>,
    %c0_24 = arith.constant 0 : index
    %c0_25 = arith.constant 0 : index
    %c0_26 = arith.constant 0 : index
    %27 = vector.load %arg15[%c0_24, %c0_25, %c0_26] : memref<2x18x64xf32, #tpu.memory_space<vmem>>, vector<2x16x64xf32>
    %c0_27 = arith.constant 0 : index
    %c0_28 = arith.constant 0 : index
    %c0_29 = arith.constant 0 : index
    %28 = vector.load %arg16[%c0_27, %c0_28, %c0_29] : memref<2x18x64xf32, #tpu.memory_space<vmem>>, vector<2x16x64xf32>
    %c0_30 = arith.constant 0 : index
    %c1_31 = arith.constant 1 : index
    %c0_32 = arith.constant 0 : index
    %29 = vector.load %arg15[%c0_30, %c1_31, %c0_32] : memref<2x18x64xf32, #tpu.memory_space<vmem>>, vector<2x16x64xf32>
    %c0_33 = arith.constant 0 : index
    %c1_34 = arith.constant 1 : index
    %c0_35 = arith.constant 0 : index
    %30 = vector.load %arg16[%c0_33, %c1_34, %c0_35] : memref<2x18x64xf32, #tpu.memory_space<vmem>>, vector<2x16x64xf32>
    %c0_36 = arith.constant 0 : index
    %c2 = arith.constant 2 : index
    %c0_37 = arith.constant 0 : index
    %31 = vector.load %arg15[%c0_36, %c2, %c0_37] : memref<2x18x64xf32, #tpu.memory_space<vmem>>, vector<2x16x64xf32>
    %32 = tpu.concatenate %27, %28, %29, %30, %31 in 2 : vector<2x16x64xf32>, vector<2x16x64xf32>, vector<2x16x64xf32>, vector<2x16x64xf32>, vector<2x16x64xf32> -> vector<2x16x320xf32>
    %33 = arith.truncf %32 : vector<2x16x320xf32> to vector<2x16x320xbf16>
    %34 = vector.shape_cast %33 : vector<2x16x320xbf16> to vector<32x320xbf16>
    %c0_38 = arith.constant 0 : index
    %c0_39 = arith.constant 0 : index
    %35 = vector.load %arg4[%c0_38, %c0_39] : memref<320x128xbf16, #tpu.memory_space<vmem>>, vector<320x128xbf16>
    %cst_40 = arith.constant dense<0.000000e+00> : vector<32x128xf32>
    %36 = tpu.matmul %34, %35, %cst_40 {dimension_numbers = #tpu.dot_dimension_numbers<[1], [0], [0], [1], [0, 0, 1, 1], [], []>} : vector<32x320xbf16>, vector<320x128xbf16>, vector<32x128xf32> -> vector<32x128xf32>
    %c0_41 = arith.constant 0 : index
    %c0_42 = arith.constant 0 : index
    %37 = vector.load %arg5[%c0_41, %c0_42] : memref<1x128xf32, #tpu.memory_space<vmem>>, vector<1x128xf32>
    %38 = vector.broadcast %37 : vector<1x128xf32> to vector<32x128xf32>
    %39 = arith.addf %36, %38 : vector<32x128xf32>
    %cst_43 = arith.constant 0.000000e+00 : f32
    %40 = vector.broadcast %cst_43 : f32 to vector<32x128xf32>
    %41 = arith.maximumf %39, %40 : vector<32x128xf32>
    %42 = vector.shape_cast %41 : vector<32x128xf32> to vector<2x4x4x128xf32>
    %43 = vector.extract_strided_slice %42 {offsets = [0, 0, 0, 0], sizes = [2, 4, 1, 128], strides = [1, 1, 1, 1]} : vector<2x4x4x128xf32> to vector<2x4x1x128xf32>
    %44 = vector.shape_cast %43 : vector<2x4x1x128xf32> to vector<2x4x128xf32>
    %45 = vector.extract_strided_slice %42 {offsets = [0, 0, 1, 0], sizes = [2, 4, 1, 128], strides = [1, 1, 1, 1]} : vector<2x4x4x128xf32> to vector<2x4x1x128xf32>
    %46 = vector.shape_cast %45 : vector<2x4x1x128xf32> to vector<2x4x128xf32>
    %47 = arith.maximumf %44, %46 : vector<2x4x128xf32>
    %48 = vector.extract_strided_slice %42 {offsets = [0, 0, 2, 0], sizes = [2, 4, 1, 128], strides = [1, 1, 1, 1]} : vector<2x4x4x128xf32> to vector<2x4x1x128xf32>
    %49 = vector.shape_cast %48 : vector<2x4x1x128xf32> to vector<2x4x128xf32>
    %50 = vector.extract_strided_slice %42 {offsets = [0, 0, 3, 0], sizes = [2, 4, 1, 128], strides = [1, 1, 1, 1]} : vector<2x4x4x128xf32> to vector<2x4x1x128xf32>
    %51 = vector.shape_cast %50 : vector<2x4x1x128xf32> to vector<2x4x128xf32>
    %52 = arith.maximumf %49, %51 : vector<2x4x128xf32>
    %cst_44 = arith.constant 0.000000e+00 : f32
    %53 = vector.broadcast %cst_44 : f32 to vector<2x1x128xf32>
    %c0_45 = arith.constant 0 : index
    %c0_46 = arith.constant 0 : index
    %c0_47 = arith.constant 0 : index
    %54 = vector.load %arg17[%c0_45, %c0_46, %c0_47] : memref<2x5x128xf32, #tpu.memory_space<vmem>>, vector<2x1x128xf32>
    tpu.vector_store %arg17[%c0_45, %c0_46, %c0_47], %53 {strides = array<i32>} : memref<2x5x128xf32, #tpu.memory_space<vmem>>, vector<2x1x128xf32>,
    %c0_48 = arith.constant 0 : index
    %c1_49 = arith.constant 1 : index
    %c0_50 = arith.constant 0 : index
    %55 = vector.load %arg17[%c0_48, %c1_49, %c0_50] : memref<2x5x128xf32, #tpu.memory_space<vmem>>, vector<2x4x128xf32>
    tpu.vector_store %arg17[%c0_48, %c1_49, %c0_50], %52 {strides = array<i32>} : memref<2x5x128xf32, #tpu.memory_space<vmem>>, vector<2x4x128xf32>,
    %c0_51 = arith.constant 0 : index
    %c0_52 = arith.constant 0 : index
    %c0_53 = arith.constant 0 : index
    %56 = vector.load %arg18[%c0_51, %c0_52, %c0_53] : memref<2x5x128xf32, #tpu.memory_space<vmem>>, vector<2x4x128xf32>
    tpu.vector_store %arg18[%c0_51, %c0_52, %c0_53], %47 {strides = array<i32>} : memref<2x5x128xf32, #tpu.memory_space<vmem>>, vector<2x4x128xf32>,
    %c0_54 = arith.constant 0 : index
    %c4 = arith.constant 4 : index
    %c0_55 = arith.constant 0 : index
    %57 = vector.load %arg18[%c0_54, %c4, %c0_55] : memref<2x5x128xf32, #tpu.memory_space<vmem>>, vector<2x1x128xf32>
    tpu.vector_store %arg18[%c0_54, %c4, %c0_55], %53 {strides = array<i32>} : memref<2x5x128xf32, #tpu.memory_space<vmem>>, vector<2x1x128xf32>,
    %c0_56 = arith.constant 0 : index
    %c0_57 = arith.constant 0 : index
    %c0_58 = arith.constant 0 : index
    %58 = vector.load %arg17[%c0_56, %c0_57, %c0_58] : memref<2x5x128xf32, #tpu.memory_space<vmem>>, vector<2x4x128xf32>
    %c0_59 = arith.constant 0 : index
    %c0_60 = arith.constant 0 : index
    %c0_61 = arith.constant 0 : index
    %59 = vector.load %arg18[%c0_59, %c0_60, %c0_61] : memref<2x5x128xf32, #tpu.memory_space<vmem>>, vector<2x4x128xf32>
    %c0_62 = arith.constant 0 : index
    %c1_63 = arith.constant 1 : index
    %c0_64 = arith.constant 0 : index
    %60 = vector.load %arg17[%c0_62, %c1_63, %c0_64] : memref<2x5x128xf32, #tpu.memory_space<vmem>>, vector<2x4x128xf32>
    %61 = tpu.concatenate %58, %59, %60 in 2 : vector<2x4x128xf32>, vector<2x4x128xf32>, vector<2x4x128xf32> -> vector<2x4x384xf32>
    %62 = arith.truncf %61 : vector<2x4x384xf32> to vector<2x4x384xbf16>
    %63 = vector.shape_cast %62 : vector<2x4x384xbf16> to vector<8x384xbf16>
    %c0_65 = arith.constant 0 : index
    %c0_66 = arith.constant 0 : index
    %64 = vector.load %arg6[%c0_65, %c0_66] : memref<384x256xbf16, #tpu.memory_space<vmem>>, vector<384x256xbf16>
    %cst_67 = arith.constant dense<0.000000e+00> : vector<8x256xf32>
    %65 = tpu.matmul %63, %64, %cst_67 {dimension_numbers = #tpu.dot_dimension_numbers<[1], [0], [0], [1], [0, 0, 1, 1], [], []>} : vector<8x384xbf16>, vector<384x256xbf16>, vector<8x256xf32> -> vector<8x256xf32>
    %c0_68 = arith.constant 0 : index
    %c0_69 = arith.constant 0 : index
    %66 = vector.load %arg7[%c0_68, %c0_69] : memref<1x256xf32, #tpu.memory_space<vmem>>, vector<1x256xf32>
    %67 = vector.broadcast %66 : vector<1x256xf32> to vector<8x256xf32>
    %68 = arith.addf %65, %67 : vector<8x256xf32>
    %cst_70 = arith.constant 0.000000e+00 : f32
    %69 = vector.broadcast %cst_70 : f32 to vector<8x256xf32>
    %70 = arith.maximumf %68, %69 : vector<8x256xf32>
    %71 = vector.shape_cast %70 : vector<8x256xf32> to vector<2x2x2x256xf32>
    %72 = vector.extract_strided_slice %71 {offsets = [0, 0, 0, 0], sizes = [2, 2, 1, 256], strides = [1, 1, 1, 1]} : vector<2x2x2x256xf32> to vector<2x2x1x256xf32>
    %73 = vector.shape_cast %72 : vector<2x2x1x256xf32> to vector<2x2x256xf32>
    %74 = vector.extract_strided_slice %71 {offsets = [0, 0, 1, 0], sizes = [2, 2, 1, 256], strides = [1, 1, 1, 1]} : vector<2x2x2x256xf32> to vector<2x2x1x256xf32>
    %75 = vector.shape_cast %74 : vector<2x2x1x256xf32> to vector<2x2x256xf32>
    %76 = arith.maximumf %73, %75 : vector<2x2x256xf32>
    %77 = vector.extract_strided_slice %76 {offsets = [0, 0, 0], sizes = [2, 1, 256], strides = [1, 1, 1]} : vector<2x2x256xf32> to vector<2x1x256xf32>
    %78 = vector.shape_cast %77 : vector<2x1x256xf32> to vector<2x256xf32>
    %79 = vector.extract_strided_slice %76 {offsets = [0, 1, 0], sizes = [2, 1, 256], strides = [1, 1, 1]} : vector<2x2x256xf32> to vector<2x1x256xf32>
    %80 = vector.shape_cast %79 : vector<2x1x256xf32> to vector<2x256xf32>
    %81 = tpu.concatenate %78, %80 in 1 : vector<2x256xf32>, vector<2x256xf32> -> vector<2x512xf32>
    %82 = arith.truncf %81 : vector<2x512xf32> to vector<2x512xbf16>
    %c0_71 = arith.constant 0 : index
    %c0_72 = arith.constant 0 : index
    %83 = vector.load %arg8[%c0_71, %c0_72] : memref<512x512xbf16, #tpu.memory_space<vmem>>, vector<512x512xbf16>
    %cst_73 = arith.constant dense<0.000000e+00> : vector<2x512xf32>
    %84 = tpu.matmul %82, %83, %cst_73 {dimension_numbers = #tpu.dot_dimension_numbers<[1], [0], [0], [1], [0, 0, 1, 1], [], []>} : vector<2x512xbf16>, vector<512x512xbf16>, vector<2x512xf32> -> vector<2x512xf32>
    %c0_74 = arith.constant 0 : index
    %c0_75 = arith.constant 0 : index
    %85 = vector.load %arg9[%c0_74, %c0_75] : memref<1x512xf32, #tpu.memory_space<vmem>>, vector<1x512xf32>
    %86 = vector.broadcast %85 : vector<1x512xf32> to vector<2x512xf32>
    %87 = arith.addf %84, %86 : vector<2x512xf32>
    %cst_76 = arith.constant 0.000000e+00 : f32
    %88 = vector.broadcast %cst_76 : f32 to vector<2x512xf32>
    %89 = arith.maximumf %87, %88 : vector<2x512xf32>
    %90 = arith.truncf %89 : vector<2x512xf32> to vector<2x512xbf16>
    %c0_77 = arith.constant 0 : index
    %c0_78 = arith.constant 0 : index
    %91 = vector.load %arg10[%c0_77, %c0_78] : memref<512x256xbf16, #tpu.memory_space<vmem>>, vector<512x256xbf16>
    %cst_79 = arith.constant dense<0.000000e+00> : vector<2x256xf32>
    %92 = tpu.matmul %90, %91, %cst_79 {dimension_numbers = #tpu.dot_dimension_numbers<[1], [0], [0], [1], [0, 0, 1, 1], [], []>} : vector<2x512xbf16>, vector<512x256xbf16>, vector<2x256xf32> -> vector<2x256xf32>
    %c0_80 = arith.constant 0 : index
    %c0_81 = arith.constant 0 : index
    %93 = vector.load %arg11[%c0_80, %c0_81] : memref<1x256xf32, #tpu.memory_space<vmem>>, vector<1x256xf32>
    %94 = vector.broadcast %93 : vector<1x256xf32> to vector<2x256xf32>
    %95 = arith.addf %92, %94 : vector<2x256xf32>
    %cst_82 = arith.constant 0.000000e+00 : f32
    %96 = vector.broadcast %cst_82 : f32 to vector<2x256xf32>
    %97 = arith.maximumf %95, %96 : vector<2x256xf32>
    %c0_83 = arith.constant 0 : index
    %c0_84 = arith.constant 0 : index
    %98 = vector.load %arg12[%c0_83, %c0_84] : memref<256x128xf32, #tpu.memory_space<vmem>>, vector<256x128xf32>
    %cst_85 = arith.constant dense<0.000000e+00> : vector<2x128xf32>
    %99 = tpu.matmul %97, %98, %cst_85 {dimension_numbers = #tpu.dot_dimension_numbers<[1], [0], [0], [1], [0, 0, 1, 1], [], []>} : vector<2x256xf32>, vector<256x128xf32>, vector<2x128xf32> -> vector<2x128xf32>
    %c0_86 = arith.constant 0 : index
    %c0_87 = arith.constant 0 : index
    %100 = vector.load %arg13[%c0_86, %c0_87] : memref<1x128xf32, #tpu.memory_space<vmem>>, vector<1x128xf32>
    %101 = vector.broadcast %100 : vector<1x128xf32> to vector<2x128xf32>
    %102 = arith.addf %99, %101 : vector<2x128xf32>
    %c0_88 = arith.constant 0 : index
    %c0_89 = arith.constant 0 : index
    %103 = vector.load %arg14[%c0_88, %c0_89] : memref<2x128xf32, #tpu.memory_space<vmem>>, vector<2x128xf32>
    tpu.vector_store %arg14[%c0_88, %c0_89], %102 {strides = array<i32>} : memref<2x128xf32, #tpu.memory_space<vmem>>, vector<2x128xf32>,
    return
  }
  func.func @transform_0(%arg0: i32) -> (i32, i32, i32) {
    %c0_i32 = arith.constant 0 : i32
    %c0_i32_0 = arith.constant 0 : i32
    %c0_i32_1 = arith.constant 0 : i32
    return %arg0, %c0_i32, %c0_i32_0 : i32, i32, i32
  }
  func.func @transform_1(%arg0: i32) -> (i32, i32) {
    %c0_i32 = arith.constant 0 : i32
    %c0_i32_0 = arith.constant 0 : i32
    %c0_i32_1 = arith.constant 0 : i32
    return %c0_i32, %c0_i32_0 : i32, i32
  }
  func.func @transform_2(%arg0: i32) -> (i32, i32) {
    %c0_i32 = arith.constant 0 : i32
    %c0_i32_0 = arith.constant 0 : i32
    %c0_i32_1 = arith.constant 0 : i32
    return %c0_i32, %c0_i32_0 : i32, i32
  }
  func.func @transform_3(%arg0: i32) -> (i32, i32) {
    %c0_i32 = arith.constant 0 : i32
    %c0_i32_0 = arith.constant 0 : i32
    %c0_i32_1 = arith.constant 0 : i32
    return %c0_i32, %c0_i32_0 : i32, i32
  }
  func.func @transform_4(%arg0: i32) -> (i32, i32) {
    %c0_i32 = arith.constant 0 : i32
    %c0_i32_0 = arith.constant 0 : i32
    %c0_i32_1 = arith.constant 0 : i32
    return %c0_i32, %c0_i32_0 : i32, i32
  }
  func.func @transform_5(%arg0: i32) -> (i32, i32) {
    %c0_i32 = arith.constant 0 : i32
    %c0_i32_0 = arith.constant 0 : i32
    %c0_i32_1 = arith.constant 0 : i32
    return %c0_i32, %c0_i32_0 : i32, i32
  }
  func.func @transform_6(%arg0: i32) -> (i32, i32) {
    %c0_i32 = arith.constant 0 : i32
    %c0_i32_0 = arith.constant 0 : i32
    %c0_i32_1 = arith.constant 0 : i32
    return %c0_i32, %c0_i32_0 : i32, i32
  }
  func.func @transform_7(%arg0: i32) -> (i32, i32) {
    %c0_i32 = arith.constant 0 : i32
    %c0_i32_0 = arith.constant 0 : i32
    %c0_i32_1 = arith.constant 0 : i32
    return %c0_i32, %c0_i32_0 : i32, i32
  }
  func.func @transform_8(%arg0: i32) -> (i32, i32) {
    %c0_i32 = arith.constant 0 : i32
    %c0_i32_0 = arith.constant 0 : i32
    %c0_i32_1 = arith.constant 0 : i32
    return %c0_i32, %c0_i32_0 : i32, i32
  }
  func.func @transform_9(%arg0: i32) -> (i32, i32) {
    %c0_i32 = arith.constant 0 : i32
    %c0_i32_0 = arith.constant 0 : i32
    %c0_i32_1 = arith.constant 0 : i32
    return %c0_i32, %c0_i32_0 : i32, i32
  }
  func.func @transform_10(%arg0: i32) -> (i32, i32) {
    %c0_i32 = arith.constant 0 : i32
    %c0_i32_0 = arith.constant 0 : i32
    %c0_i32_1 = arith.constant 0 : i32
    return %c0_i32, %c0_i32_0 : i32, i32
  }
  func.func @transform_11(%arg0: i32) -> (i32, i32) {
    %c0_i32 = arith.constant 0 : i32
    %c0_i32_0 = arith.constant 0 : i32
    %c0_i32_1 = arith.constant 0 : i32
    return %c0_i32, %c0_i32_0 : i32, i32
  }
  func.func @transform_12(%arg0: i32) -> (i32, i32) {
    %c0_i32 = arith.constant 0 : i32
    %c0_i32_0 = arith.constant 0 : i32
    %c0_i32_1 = arith.constant 0 : i32
    return %c0_i32, %c0_i32_0 : i32, i32
  }
  func.func @transform_13(%arg0: i32) -> (i32, i32) {
    %c0_i32 = arith.constant 0 : i32
    %c0_i32_0 = arith.constant 0 : i32
    return %arg0, %c0_i32 : i32, i32
  }
}

</mosaic_0001>

<llo_original>
// kernel: signal_classifier_forward.1
$region0: #{signal_classifier_forward.1}
  #allocation0 [shape = 'u32[]', space=smem, size = 0x4, offset = 0x4, fixed_abs, tag = 'smem constant byte address 0x4 - core index']
  #allocation1 [shape = 'u32[144,128]{1,0:T(1,128)}', space=vmem, size = 0x12000, scoped, tag = 'internal scratch']
  #allocation2 [shape = 'f32[2,18,64]{2,1,0:T(8,128)}', space=vmem, size = 0x6000, scoped, tag = 'scratch operand']
  #allocation3 [shape = 'f32[2,18,64]{2,1,0:T(8,128)}', space=vmem, size = 0x6000, scoped, tag = 'scratch operand']
  #allocation4 [shape = 'f32[2,5,128]{2,1,0:T(8,128)}', space=vmem, size = 0x2000, scoped, tag = 'scratch operand']
  #allocation5 [shape = 'f32[2,5,128]{2,1,0:T(8,128)}', space=vmem, size = 0x2000, scoped, tag = 'scratch operand']
  %s0 = inlined_call_operand.hbm [shape: bf16[2,64,16], index: 0, kind: input, shape index: {}]
  %s1 = inlined_call_operand.hbm [shape: bf16[16,64], index: 1, kind: input, shape index: {}]
  %s2 = inlined_call_operand.hbm [shape: f32[1,64], index: 2, kind: input, shape index: {}]
  %s3 = inlined_call_operand.hbm [shape: bf16[320,128], index: 3, kind: input, shape index: {}]
  %s4 = inlined_call_operand.hbm [shape: f32[1,128], index: 4, kind: input, shape index: {}]
  %s5 = inlined_call_operand.hbm [shape: bf16[384,256], index: 5, kind: input, shape index: {}]
  %s6 = inlined_call_operand.hbm [shape: f32[1,256], index: 6, kind: input, shape index: {}]
  %s7 = inlined_call_operand.hbm [shape: bf16[512,512], index: 7, kind: input, shape index: {}]
  %s8 = inlined_call_operand.hbm [shape: f32[1,512], index: 8, kind: input, shape index: {}]
  %s9 = inlined_call_operand.hbm [shape: bf16[512,256], index: 9, kind: input, shape index: {}]
  %s10 = inlined_call_operand.hbm [shape: f32[1,256], index: 10, kind: input, shape index: {}]
  %s11 = inlined_call_operand.hbm [shape: f32[256,128], index: 11, kind: input, shape index: {}]
  %s12 = inlined_call_operand.hbm [shape: f32[1,128], index: 12, kind: input, shape index: {}]
  %s13 = inlined_call_operand.hbm [shape: f32[2,128], index: 13, kind: output, shape index: {}]
  %s14 = sld [smem:[#allocation0]]
  $region114: #{signal_classifier_forward.1} parent=0
    _
  %s16 = ssub.s32 1, %s14
  %s17 = scalar_select 0, %s16, %s14
  $region1: #{signal_classifier_forward.1} parent=0
    #allocation6 [shape = 'u8[32768]{0}', space=vmem, size = 0x8000, scoped, tag = 'input window, operand 0, single buffered']
    #allocation7 [shape = 's32[1]{0}', space=sflag, size = 0x4, scoped, tag = 'scoped memory for signal_classifier_forward.1']
    #allocation8 [shape = 's32[1]{0}', space=sflag, size = 0x4, scoped, tag = 'scoped memory for signal_classifier_forward.1']
    #allocation9 [shape = 'u8[4096]{0}', space=vmem, size = 0x1000, scoped, tag = 'input window, operand 1, single buffered']
    #allocation10 [shape = 's32[1]{0}', space=sflag, size = 0x4, scoped, tag = 'scoped memory for signal_classifier_forward.1']
    #allocation11 [shape = 'u8[512]{0}', space=vmem, size = 0x400, scoped, tag = 'input window, operand 2, single buffered']
    #allocation12 [shape = 'u8[81920]{0}', space=vmem, size = 0x14000, scoped, tag = 'input window, operand 3, single buffered']
    #allocation13 [shape = 's32[1]{0}', space=sflag, size = 0x4, scoped, tag = 'scoped memory for signal_classifier_forward.1']
    #allocation14 [shape = 'u8[512]{0}', space=vmem, size = 0x400, scoped, tag = 'input window, operand 4, single buffered']
    #allocation15 [shape = 'u8[196608]{0}', space=vmem, size = 0x30000, scoped, tag = 'input window, operand 5, single buffered']
    #allocation16 [shape = 's32[1]{0}', space=sflag, size = 0x4, scoped, tag = 'scoped memory for signal_classifier_forward.1']
    #allocation17 [shape = 'u8[1024]{0}', space=vmem, size = 0x400, scoped, tag = 'input window, operand 6, single buffered']
    #allocation18 [shape = 'u8[524288]{0}', space=vmem, size = 0x80000, scoped, tag = 'input window, operand 7, single buffered']
    #allocation19 [shape = 's32[1]{0}', space=sflag, size = 0x4, scoped, tag = 'scoped memory for signal_classifier_forward.1']
    #allocation20 [shape = 'u8[2048]{0}', space=vmem, size = 0x800, scoped, tag = 'input window, operand 8, single buffered']
    #allocation21 [shape = 'u8[262144]{0}', space=vmem, size = 0x40000, scoped, tag = 'input window, operand 9, single buffered']
    #allocation22 [shape = 's32[1]{0}', space=sflag, size = 0x4, scoped, tag = 'scoped memory for signal_classifier_forward.1']
    #allocation23 [shape = 'u8[1024]{0}', space=vmem, size = 0x400, scoped, tag = 'input window, operand 10, single buffered']
    #allocation24 [shape = 'u8[131072]{0}', space=vmem, size = 0x20000, scoped, tag = 'input window, operand 11, single buffered']
    #allocation25 [shape = 's32[1]{0}', space=sflag, size = 0x4, scoped, tag = 'scoped memory for signal_classifier_forward.1']
    #allocation26 [shape = 'u8[512]{0}', space=vmem, size = 0x400, scoped, tag = 'input window, operand 12, single buffered']
    #allocation27 [shape = 'u8[1024]{0}', space=vmem, size = 0x400, scoped, tag = 'output window, operand 0, single buffered']
    %18 = vsyncpa [#allocation7], 0
    %19 = vsyncpa [#allocation10], 0
    %20 = vsyncpa [#allocation13], 0
    %21 = vsyncpa [#allocation16], 0
    %22 = vsyncpa [#allocation19], 0
    %23 = vsyncpa [#allocation22], 0
    %24 = vsyncpa [#allocation25], 0
    %25 = vsyncpa [#allocation8], 0
    // Predicated region
    $region2: #{signal_classifier_forward.1} parent=1 // pred_check
      _
    $region3: #{signal_classifier_forward.1} parent=1 // pred_check_branch
      %27 = sbr.rel (0) target = $region5
    $region4: #{signal_classifier_forward.1} parent=1 // pred_region
      %s29 = ssub.s32 1024, 1024
      %30 = vsyncadd [#allocation7], %s29
      %s31 = sshll.u32 [#allocation6], 4
      %s32 = int_to_ptr.vmem [resolvable:$true] %s31
      %37 = dma.hbm_to_vmem [thread:$0]  %s0, 1024, %s32, [#allocation7], 64, 64, 4
    $region5: #{signal_classifier_forward.1} parent=1 // pred_fallthru
      _
    // Predicated region
    $region6: #{signal_classifier_forward.1} parent=1 // pred_check
      _
    $region7: #{signal_classifier_forward.1} parent=1 // pred_check_branch
      %39 = sbr.rel (0) target = $region9
    $region8: #{signal_classifier_forward.1} parent=1 // pred_region
      %s41 = ssub.s32 128, 128
      %42 = vsyncadd [#allocation10], %s41
      %s43 = sshll.u32 [#allocation9], 4
      %s44 = int_to_ptr.vmem [resolvable:$true] %s43
      %49 = dma.hbm_to_vmem [thread:$0]  %s1, 128, %s44, [#allocation10], 64, 64, 4
    $region9: #{signal_classifier_forward.1} parent=1 // pred_fallthru
      _
    // Predicated region
    $region10: #{signal_classifier_forward.1} parent=1 // pred_check
      _
    $region11: #{signal_classifier_forward.1} parent=1 // pred_check_branch
      %51 = sbr.rel (0) target = $region13
    $region12: #{signal_classifier_forward.1} parent=1 // pred_region
      %s53 = ssub.s32 16, 16
      %54 = vsyncadd [#allocation10], %s53
      %s56 = sshll.u32 [#allocation11], 4
      %s57 = int_to_ptr.vmem [resolvable:$true] %s56
      %59 = dma.hbm_to_vmem [thread:$0]  %s2, 16, %s57, [#allocation10]
    $region13: #{signal_classifier_forward.1} parent=1 // pred_fallthru
      _
    // Predicated region
    $region14: #{signal_classifier_forward.1} parent=1 // pred_check
      _
    $region15: #{signal_classifier_forward.1} parent=1 // pred_check_branch
      %61 = sbr.rel (0) target = $region17
    $region16: #{signal_classifier_forward.1} parent=1 // pred_region
      %s63 = ssub.s32 2560, 2560
      %64 = vsyncadd [#allocation13], %s63
      %s65 = sshll.u32 [#allocation12], 4
      %s66 = int_to_ptr.vmem [resolvable:$true] %s65
      %71 = dma.hbm_to_vmem [thread:$0]  %s3, 2560, %s66, [#allocation13], 64, 64, 4
    $region17: #{signal_classifier_forward.1} parent=1 // pred_fallthru
      _
    // Predicated region
    $region18: #{signal_classifier_forward.1} parent=1 // pred_check
      _
    $region19: #{signal_classifier_forward.1} parent=1 // pred_check_branch
      %73 = sbr.rel (0) target = $region21
    $region20: #{signal_classifier_forward.1} parent=1 // pred_region
      %s75 = ssub.s32 16, 16
      %76 = vsyncadd [#allocation13], %s75
      %s78 = sshll.u32 [#allocation14], 4
      %s79 = int_to_ptr.vmem [resolvable:$true] %s78
      %81 = dma.hbm_to_vmem [thread:$0]  %s4, 16, %s79, [#allocation13]
    $region21: #{signal_classifier_forward.1} parent=1 // pred_fallthru
      _
    // Predicated region
    $region22: #{signal_classifier_forward.1} parent=1 // pred_check
      _
    $region23: #{signal_classifier_forward.1} parent=1 // pred_check_branch
      %83 = sbr.rel (0) target = $region25
    $region24: #{signal_classifier_forward.1} parent=1 // pred_region
      %s85 = ssub.s32 6144, 6144
      %86 = vsyncadd [#allocation16], %s85
      %s87 = sshll.u32 [#allocation15], 4
      %s88 = int_to_ptr.vmem [resolvable:$true] %s87
      %93 = dma.hbm_to_vmem [thread:$0]  %s5, 6144, %s88, [#allocation16], 128, 128, 8
    $region25: #{signal_classifier_forward.1} parent=1 // pred_fallthru
      _
    // Predicated region
    $region26: #{signal_classifier_forward.1} parent=1 // pred_check
      _
    $region27: #{signal_classifier_forward.1} parent=1 // pred_check_branch
      %95 = sbr.rel (0) target = $region29
    $region28: #{signal_classifier_forward.1} parent=1 // pred_region
      %s97 = ssub.s32 32, 32
      %98 = vsyncadd [#allocation16], %s97
      %s100 = sshll.u32 [#allocation17], 4
      %s101 = int_to_ptr.vmem [resolvable:$true] %s100
      %103 = dma.hbm_to_vmem [thread:$0]  %s6, 32, %s101, [#allocation16]
    $region29: #{signal_classifier_forward.1} parent=1 // pred_fallthru
      _
    // Predicated region
    $region30: #{signal_classifier_forward.1} parent=1 // pred_check
      _
    $region31: #{signal_classifier_forward.1} parent=1 // pred_check_branch
      %105 = sbr.rel (0) target = $region33
    $region32: #{signal_classifier_forward.1} parent=1 // pred_region
      %s107 = ssub.s32 16384, 16384
      %108 = vsyncadd [#allocation19], %s107
      %s109 = sshll.u32 [#allocation18], 4
      %s110 = int_to_ptr.vmem [resolvable:$true] %s109
      %115 = dma.hbm_to_vmem [thread:$0]  %s7, 16384, %s110, [#allocation19], 256, 256, 16
    $region33: #{signal_classifier_forward.1} parent=1 // pred_fallthru
      _
    // Predicated region
    $region34: #{signal_classifier_forward.1} parent=1 // pred_check
      _
    $region35: #{signal_classifier_forward.1} parent=1 // pred_check_branch
      %117 = sbr.rel (0) target = $region37
    $region36: #{signal_classifier_forward.1} parent=1 // pred_region
      %s119 = ssub.s32 64, 64
      %120 = vsyncadd [#allocation19], %s119
      %s122 = sshll.u32 [#allocation20], 4
      %s123 = int_to_ptr.vmem [resolvable:$true] %s122
      %125 = dma.hbm_to_vmem [thread:$0]  %s8, 64, %s123, [#allocation19]
    $region37: #{signal_classifier_forward.1} parent=1 // pred_fallthru
      _
    // Predicated region
    $region38: #{signal_classifier_forward.1} parent=1 // pred_check
      _
    $region39: #{signal_classifier_forward.1} parent=1 // pred_check_branch
      %127 = sbr.rel (0) target = $region41
    $region40: #{signal_classifier_forward.1} parent=1 // pred_region
      %s129 = ssub.s32 8192, 8192
      %130 = vsyncadd [#allocation22], %s129
      %s131 = sshll.u32 [#allocation21], 4
      %s132 = int_to_ptr.vmem [resolvable:$true] %s131
      %137 = dma.hbm_to_vmem [thread:$0]  %s9, 8192, %s132, [#allocation22], 128, 128, 8
    $region41: #{signal_classifier_forward.1} parent=1 // pred_fallthru
      _
    // Predicated region
    $region42: #{signal_classifier_forward.1} parent=1 // pred_check
      _
    $region43: #{signal_classifier_forward.1} parent=1 // pred_check_branch
      %139 = sbr.rel (0) target = $region45
    $region44: #{signal_classifier_forward.1} parent=1 // pred_region
      %s141 = ssub.s32 32, 32
      %142 = vsyncadd [#allocation22], %s141
      %s144 = sshll.u32 [#allocation23], 4
      %s145 = int_to_ptr.vmem [resolvable:$true] %s144
      %147 = dma.hbm_to_vmem [thread:$0]  %s10, 32, %s145, [#allocation22]
    $region45: #{signal_classifier_forward.1} parent=1 // pred_fallthru
      _
    // Predicated region
    $region46: #{signal_classifier_forward.1} parent=1 // pred_check
      _
    $region47: #{signal_classifier_forward.1} parent=1 // pred_check_branch
      %149 = sbr.rel (0) target = $region49
    $region48: #{signal_classifier_forward.1} parent=1 // pred_region
      %s151 = ssub.s32 4096, 4096
      %152 = vsyncadd [#allocation25], %s151
      %s153 = sshll.u32 [#allocation24], 4
      %s154 = int_to_ptr.vmem [resolvable:$true] %s153
      %159 = dma.hbm_to_vmem [thread:$0]  %s11, 4096, %s154, [#allocation25], 128, 128, 8
    $region49: #{signal_classifier_forward.1} parent=1 // pred_fallthru
      _
    // Predicated region
    $region50: #{signal_classifier_forward.1} parent=1 // pred_check
      _
    $region51: #{signal_classifier_forward.1} parent=1 // pred_check_branch
      %161 = sbr.rel (0) target = $region53
    $region52: #{signal_classifier_forward.1} parent=1 // pred_region
      %s163 = ssub.s32 16, 16
      %164 = vsyncadd [#allocation25], %s163
      %s166 = sshll.u32 [#allocation26], 4
      %s167 = int_to_ptr.vmem [resolvable:$true] %s166
      %169 = dma.hbm_to_vmem [thread:$0]  %s12, 16, %s167, [#allocation25]
    $region53: #{signal_classifier_forward.1} parent=1 // pred_fallthru
      _
    // Predicated region
    $region54: #{signal_classifier_forward.1} parent=1 // pred_check
      _
    $region55: #{signal_classifier_forward.1} parent=1 // pred_check_branch
      %171 = sbr.rel (0) target = $region57
    $region56: #{signal_classifier_forward.1} parent=1 // pred_region
      %172 = dma.done [#allocation7], 1024
    $region57: #{signal_classifier_forward.1} parent=1 // pred_fallthru
      _
    // Predicated region
    $region58: #{signal_classifier_forward.1} parent=1 // pred_check
      _
    $region59: #{signal_classifier_forward.1} parent=1 // pred_check_branch
      %174 = sbr.rel (0) target = $region61
    $region60: #{signal_classifier_forward.1} parent=1 // pred_region
      %175 = dma.done [#allocation10], 128
    $region61: #{signal_classifier_forward.1} parent=1 // pred_fallthru
      _
    // Predicated region
    $region62: #{signal_classifier_forward.1} parent=1 // pred_check
      _
    $region63: #{signal_classifier_forward.1} parent=1 // pred_check_branch
      %177 = sbr.rel (0) target = $region65
    $region64: #{signal_classifier_forward.1} parent=1 // pred_region
      %178 = dma.done [#allocation10], 16
    $region65: #{signal_classifier_forward.1} parent=1 // pred_fallthru
      _
    // Predicated region
    $region66: #{signal_classifier_forward.1} parent=1 // pred_check
      _
    $region67: #{signal_classifier_forward.1} parent=1 // pred_check_branch
      %180 = sbr.rel (0) target = $region69
    $region68: #{signal_classifier_forward.1} parent=1 // pred_region
      %181 = dma.done [#allocation13], 2560
    $region69: #{signal_classifier_forward.1} parent=1 // pred_fallthru
      _
    // Predicated region
    $region70: #{signal_classifier_forward.1} parent=1 // pred_check
      _
    $region71: #{signal_classifier_forward.1} parent=1 // pred_check_branch
      %183 = sbr.rel (0) target = $region73
    $region72: #{signal_classifier_forward.1} parent=1 // pred_region
      %184 = dma.done [#allocation13], 16
    $region73: #{signal_classifier_forward.1} parent=1 // pred_fallthru
      _
    // Predicated region
    $region74: #{signal_classifier_forward.1} parent=1 // pred_check
      _
    $region75: #{signal_classifier_forward.1} parent=1 // pred_check_branch
      %186 = sbr.rel (0) target = $region77
    $region76: #{signal_classifier_forward.1} parent=1 // pred_region
      %187 = dma.done [#allocation16], 6144
    $region77: #{signal_classifier_forward.1} parent=1 // pred_fallthru
      _
    // Predicated region
    $region78: #{signal_classifier_forward.1} parent=1 // pred_check
      _
    $region79: #{signal_classifier_forward.1} parent=1 // pred_check_branch
      %189 = sbr.rel (0) target = $region81
    $region80: #{signal_classifier_forward.1} parent=1 // pred_region
      %190 = dma.done [#allocation16], 32
    $region81: #{signal_classifier_forward.1} parent=1 // pred_fallthru
      _
    // Predicated region
    $region82: #{signal_classifier_forward.1} parent=1 // pred_check
      _
    $region83: #{signal_classifier_forward.1} parent=1 // pred_check_branch
      %192 = sbr.rel (0) target = $region85
    $region84: #{signal_classifier_forward.1} parent=1 // pred_region
      %193 = dma.done [#allocation19], 16384
    $region85: #{signal_classifier_forward.1} parent=1 // pred_fallthru
      _
    // Predicated region
    $region86: #{signal_classifier_forward.1} parent=1 // pred_check
      _
    $region87: #{signal_classifier_forward.1} parent=1 // pred_check_branch
      %195 = sbr.rel (0) target = $region89
    $region88: #{signal_classifier_forward.1} parent=1 // pred_region
      %196 = dma.done [#allocation19], 64
    $region89: #{signal_classifier_forward.1} parent=1 // pred_fallthru
      _
    // Predicated region
    $region90: #{signal_classifier_forward.1} parent=1 // pred_check
      _
    $region91: #{signal_classifier_forward.1} parent=1 // pred_check_branch
      %198 = sbr.rel (0) target = $region93
    $region92: #{signal_classifier_forward.1} parent=1 // pred_region
      %199 = dma.done [#allocation22], 8192
    $region93: #{signal_classifier_forward.1} parent=1 // pred_fallthru
      _
    // Predicated region
    $region94: #{signal_classifier_forward.1} parent=1 // pred_check
      _
    $region95: #{signal_classifier_forward.1} parent=1 // pred_check_branch
      %201 = sbr.rel (0) target = $region97
    $region96: #{signal_classifier_forward.1} parent=1 // pred_region
      %202 = dma.done [#allocation22], 32
    $region97: #{signal_classifier_forward.1} parent=1 // pred_fallthru
      _
    // Predicated region
    $region98: #{signal_classifier_forward.1} parent=1 // pred_check
      _
    $region99: #{signal_classifier_forward.1} parent=1 // pred_check_branch
      %204 = sbr.rel (0) target = $region101
    $region100: #{signal_classifier_forward.1} parent=1 // pred_region
      %205 = dma.done [#allocation25], 4096
    $region101: #{signal_classifier_forward.1} parent=1 // pred_fallthru
      _
    // Predicated region
    $region102: #{signal_classifier_forward.1} parent=1 // pred_check
      _
    $region103: #{signal_classifier_forward.1} parent=1 // pred_check_branch
      %207 = sbr.rel (0) target = $region105
    $region104: #{signal_classifier_forward.1} parent=1 // pred_region
      %208 = dma.done [#allocation25], 16
    $region105: #{signal_classifier_forward.1} parent=1 // pred_fallthru
      _
    %v210 = vld [vmem:[#allocation6] sm:$0xf]
    %v211 = vld [vmem:[#allocation6 + $0x4] sm:$0xf]
    %v212 = vld [vmem:[#allocation6 + $0x8] sm:$0xf]
    %v213 = vld [vmem:[#allocation6 + $0xc] sm:$0xf]
    %v214 = vld [vmem:[#allocation6 + $0x10] sm:$0xf]
    %v215 = vld [vmem:[#allocation6 + $0x14] sm:$0xf]
    %v216 = vld [vmem:[#allocation6 + $0x18] sm:$0xf]
    %v217 = vld [vmem:[#allocation6 + $0x1c] sm:$0xf]
    %v218 = vld [vmem:[#allocation6 + $0x20] sm:$0xf]
    %v219 = vld [vmem:[#allocation6 + $0x24] sm:$0xf]
    %v220 = vld [vmem:[#allocation6 + $0x28] sm:$0xf]
    %v221 = vld [vmem:[#allocation6 + $0x2c] sm:$0xf]
    %v222 = vld [vmem:[#allocation6 + $0x30] sm:$0xf]
    %v223 = vld [vmem:[#allocation6 + $0x34] sm:$0xf]
    %v224 = vld [vmem:[#allocation6 + $0x38] sm:$0xf]
    %v225 = vld [vmem:[#allocation6 + $0x3c] sm:$0xf]
    %v226 = vld [vmem:[#allocation9] sm:$0xf]
    %v227 = vld [vmem:[#allocation9 + $0x4] sm:$0xf]
    %v228 = vld [vmem:[#allocation11] sm:$0x1]
    %v230 = vlaneseq
    %v231 = vshrl.u32 %v230, 7
    %v232 = vsub.s32 0, %v231
    %v233 = vrot.slane %v228, %v232
    %v251 = vunpack.c.l.b16 %v210
    %v252 = vunpack.c.l.b16 %v211
    %v253 = vunpack.c.l.b16 %v212
    %v254 = vunpack.c.l.b16 %v213
    %v255 = vunpack.c.l.b16 %v214
    %v256 = vunpack.c.l.b16 %v215
    %v257 = vunpack.c.l.b16 %v216
    %v258 = vunpack.c.l.b16 %v217
    %v259 = vunpack.c.l.b16 %v218
    %v260 = vunpack.c.l.b16 %v219
    %v261 = vunpack.c.l.b16 %v220
    %v262 = vunpack.c.l.b16 %v221
    %v263 = vunpack.c.l.b16 %v222
    %v264 = vunpack.c.l.b16 %v223
    %v265 = vunpack.c.l.b16 %v224
    %v266 = vunpack.c.l.b16 %v225
    %v267 = vpack.c.b16 %v252, %v251
    %v268 = vpack.c.b16 %v254, %v253
    %v269 = vpack.c.b16 %v256, %v255
    %v270 = vpack.c.b16 %v258, %v257
    %v271 = vpack.c.b16 %v260, %v259
    %v272 = vpack.c.b16 %v262, %v261
    %v273 = vpack.c.b16 %v264, %v263
    %v274 = vpack.c.b16 %v266, %v265
    %v277 = vunpack.c.l.b16 %v226
    %v278 = vunpack.c.l.b16 %v227
    %v279 = vpack.c.b16 %v278, %v277
    %vm281 = vcmask 130048
    %v283 = vsel %vm281, %v267, 0
    %v286 = vsel %vm281, %v268, 0
    %v289 = vsel %vm281, %v269, 0
    %v292 = vsel %vm281, %v270, 0
    %v295 = vsel %vm281, %v271, 0
    %v298 = vsel %vm281, %v272, 0
    %v301 = vsel %vm281, %v273, 0
    %v304 = vsel %vm281, %v274, 0
    %306 = vmatprep.subr.bf16.mxu0 0
    %307 = vmatpush1.bf16.msra.mxu0 %v279
    %308 = vmatprep.subr.bf16.mxu0 0
    %309 = vmatpush1.bf16.msra.mxu0 0
    %310 = vmatprep.subr.bf16.mxu0 0
    %311 = vmatpush1.bf16.msra.mxu0 0
    %312 = vmatprep.subr.bf16.mxu0 0
    %313 = vmatpush1.bf16.msra.mxu0 0
    %314 = vmatprep.subr.bf16.mxu0 0
    %315 = vmatpush1.bf16.msra.mxu0 0
    %316 = vmatprep.subr.bf16.mxu0 0
    %317 = vmatpush1.bf16.msra.mxu0 0
    %318 = vmatprep.subr.bf16.mxu0 0
    %319 = vmatpush1.bf16.msra.mxu0 0
    %320 = vmatprep.subr.bf16.mxu0 0
    %321 = vmatpush1.bf16.msra.mxu0 0
    %322 = vmatprep.subr.bf16.mxu0 0
    %323 = vmatpush1.bf16.msra.mxu0 0
    %324 = vmatprep.subr.bf16.mxu0 0
    %325 = vmatpush1.bf16.msra.mxu0 0
    %326 = vmatprep.subr.bf16.mxu0 0
    %327 = vmatpush1.bf16.msra.mxu0 0
    %328 = vmatprep.subr.bf16.mxu0 0
    %329 = vmatpush1.bf16.msra.mxu0 0
    %330 = vmatprep.subr.bf16.mxu0 0
    %331 = vmatpush1.bf16.msra.mxu0 0
    %332 = vmatprep.subr.bf16.mxu0 0
    %333 = vmatpush1.bf16.msra.mxu0 0
    %334 = vmatprep.subr.bf16.mxu0 0
    %335 = vmatpush1.bf16.msra.mxu0 0
    %336 = vmatprep.subr.bf16.mxu0 0
    %337 = vmatpush1.bf16.msra.mxu0 0
    %338 = vmatprep.mubr.bf16.mxu0 0
    %339 = vmatmul.mubr.bf16.gmra.mrb[0].mxu0 %v283
    %v340 = vpop.f32.mrb[0].mxu0
    %v341 = vadd.f32 %v233, %v340
    %v342 = vpop.f32.mrb[0].mxu0
    %v343 = vpop.f32.mrb[0].mxu0
    %v344 = vadd.f32 %v233, %v343
    %v345 = vpop.f32.mrb[0].mxu0
    %346 = vmatprep.mubr.bf16.mxu0 0
    %347 = vmatmul.mubr.bf16.gmra.mrb[0].mxu0 %v286
    %v348 = vpop.f32.mrb[0].mxu0
    %v349 = vadd.f32 %v233, %v348
    %v350 = vpop.f32.mrb[0].mxu0
    %v351 = vpop.f32.mrb[0].mxu0
    %v352 = vadd.f32 %v233, %v351
    %v353 = vpop.f32.mrb[0].mxu0
    %354 = vmatprep.mubr.bf16.mxu0 0
    %355 = vmatmul.mubr.bf16.gmra.mrb[0].mxu0 %v289
    %v356 = vpop.f32.mrb[0].mxu0
    %v357 = vadd.f32 %v233, %v356
    %v358 = vpop.f32.mrb[0].mxu0
    %v359 = vpop.f32.mrb[0].mxu0
    %v360 = vadd.f32 %v233, %v359
    %v361 = vpop.f32.mrb[0].mxu0
    %362 = vmatprep.mubr.bf16.mxu0 0
    %363 = vmatmul.mubr.bf16.gmra.mrb[0].mxu0 %v292
    %v364 = vpop.f32.mrb[0].mxu0
    %v365 = vadd.f32 %v233, %v364
    %v366 = vpop.f32.mrb[0].mxu0
    %v367 = vpop.f32.mrb[0].mxu0
    %v368 = vadd.f32 %v233, %v367
    %v369 = vpop.f32.mrb[0].mxu0
    %370 = vmatprep.mubr.bf16.mxu0 0
    %371 = vmatmul.mubr.bf16.gmra.mrb[0].mxu0 %v295
    %v372 = vpop.f32.mrb[0].mxu0
    %v373 = vadd.f32 %v233, %v372
    %v374 = vpop.f32.mrb[0].mxu0
    %v375 = vpop.f32.mrb[0].mxu0
    %v376 = vadd.f32 %v233, %v375
    %v377 = vpop.f32.mrb[0].mxu0
    %378 = vmatprep.mubr.bf16.mxu0 0
    %379 = vmatmul.mubr.bf16.gmra.mrb[0].mxu0 %v298
    %v380 = vpop.f32.mrb[0].mxu0
    %v381 = vadd.f32 %v233, %v380
    %v382 = vpop.f32.mrb[0].mxu0
    %v383 = vpop.f32.mrb[0].mxu0
    %v384 = vadd.f32 %v233, %v383
    %v385 = vpop.f32.mrb[0].mxu0
    %386 = vmatprep.mubr.bf16.mxu0 0
    %387 = vmatmul.mubr.bf16.gmra.mrb[0].mxu0 %v301
    %v388 = vpop.f32.mrb[0].mxu0
    %v389 = vadd.f32 %v233, %v388
    %v390 = vpop.f32.mrb[0].mxu0
    %v391 = vpop.f32.mrb[0].mxu0
    %v392 = vadd.f32 %v233, %v391
    %v393 = vpop.f32.mrb[0].mxu0
    %394 = vmatprep.mubr.bf16.mxu0 0
    %395 = vmatmul.mubr.bf16.gmra.mrb[0].mxu0 %v304
    %v396 = vpop.f32.mrb[0].mxu0
    %v397 = vadd.f32 %v233, %v396
    %v398 = vpop.f32.mrb[0].mxu0
    %v399 = vpop.f32.mrb[0].mxu0
    %v400 = vadd.f32 %v233, %v399
    %v401 = vpop.f32.mrb[0].mxu0
    %402 = vdwg.mxu0
    %v403 = vmax.f32 %v341, 0.0
    %v404 = vmax.f32 %v344, 0.0
    %v405 = vmax.f32 %v349, 0.0
    %v406 = vmax.f32 %v352, 0.0
    %v407 = vmax.f32 %v357, 0.0
    %v408 = vmax.f32 %v360, 0.0
    %v409 = vmax.f32 %v365, 0.0
    %v410 = vmax.f32 %v368, 0.0
    %v411 = vmax.f32 %v373, 0.0
    %v412 = vmax.f32 %v376, 0.0
    %v413 = vmax.f32 %v381, 0.0
    %v414 = vmax.f32 %v384, 0.0
    %v415 = vmax.f32 %v389, 0.0
    %v416 = vmax.f32 %v392, 0.0
    %v417 = vmax.f32 %v397, 0.0
    %v418 = vmax.f32 %v400, 0.0
    %v435 = vcombine.high %v403, %v403
    %v436 = vcombine.high %v404, %v404
    %v437 = vcombine.high %v405, %v405
    %v438 = vcombine.high %v406, %v406
    %v439 = vcombine.high %v407, %v407
    %v440 = vcombine.high %v408, %v408
    %v441 = vcombine.high %v409, %v409
    %v442 = vcombine.high %v410, %v410
    %v443 = vcombine.high %v411, %v411
    %v444 = vcombine.high %v412, %v412
    %v445 = vcombine.high %v413, %v413
    %v446 = vcombine.high %v414, %v414
    %v447 = vcombine.high %v415, %v415
    %v448 = vcombine.high %v416, %v416
    %v449 = vcombine.high %v417, %v417
    %v450 = vcombine.high %v418, %v418
    %v467 = vrot.slane %v403, 5
    %v468 = vrot.slane %v467, 4
    %v469 = vrot.slane %v435, 5
    %v470 = vrot.slane %v469, 4
    %v471 = vrot.slane %v404, 5
    %v472 = vrot.slane %v471, 4
    %v473 = vrot.slane %v436, 5
    %v474 = vrot.slane %v473, 4
    %v475 = vrot.slane %v405, 5
    %v476 = vrot.slane %v475, 4
    %v477 = vrot.slane %v437, 5
    %v478 = vrot.slane %v477, 4
    %v479 = vrot.slane %v406, 5
    %v480 = vrot.slane %v479, 4
    %v481 = vrot.slane %v438, 5
    %v482 = vrot.slane %v481, 4
    %v483 = vrot.slane %v407, 5
    %v484 = vrot.slane %v483, 4
    %v485 = vrot.slane %v439, 5
    %v486 = vrot.slane %v485, 4
    %v487 = vrot.slane %v408, 5
    %v488 = vrot.slane %v487, 4
    %v489 = vrot.slane %v440, 5
    %v490 = vrot.slane %v489, 4
    %v491 = vrot.slane %v409, 5
    %v492 = vrot.slane %v491, 4
    %v493 = vrot.slane %v441, 5
    %v494 = vrot.slane %v493, 4
    %v495 = vrot.slane %v410, 5
    %v496 = vrot.slane %v495, 4
    %v497 = vrot.slane %v442, 5
    %v498 = vrot.slane %v497, 4
    %v499 = vrot.slane %v411, 5
    %v500 = vrot.slane %v499, 4
    %v501 = vrot.slane %v443, 5
    %v502 = vrot.slane %v501, 4
    %v503 = vrot.slane %v412, 5
    %v504 = vrot.slane %v503, 4
    %v505 = vrot.slane %v444, 5
    %v506 = vrot.slane %v505, 4
    %v507 = vrot.slane %v413, 5
    %v508 = vrot.slane %v507, 4
    %v509 = vrot.slane %v445, 5
    %v510 = vrot.slane %v509, 4
    %v511 = vrot.slane %v414, 5
    %v512 = vrot.slane %v511, 4
    %v513 = vrot.slane %v446, 5
    %v514 = vrot.slane %v513, 4
    %v515 = vrot.slane %v415, 5
    %v516 = vrot.slane %v515, 4
    %v517 = vrot.slane %v447, 5
    %v518 = vrot.slane %v517, 4
    %v519 = vrot.slane %v416, 5
    %v520 = vrot.slane %v519, 4
    %v521 = vrot.slane %v448, 5
    %v522 = vrot.slane %v521, 4
    %v523 = vrot.slane %v417, 5
    %v524 = vrot.slane %v523, 4
    %v525 = vrot.slane %v449, 5
    %v526 = vrot.slane %v525, 4
    %v527 = vrot.slane %v418, 5
    %v528 = vrot.slane %v527, 4
    %v529 = vrot.slane %v450, 5
    %v530 = vrot.slane %v529, 4
    %v563 = vmax.f32 %v403, %v468
    %v564 = vmax.f32 %v435, %v470
    %v565 = vmax.f32 %v404, %v472
    %v566 = vmax.f32 %v436, %v474
    %v567 = vmax.f32 %v405, %v476
    %v568 = vmax.f32 %v437, %v478
    %v569 = vmax.f32 %v406, %v480
    %v570 = vmax.f32 %v438, %v482
    %v571 = vmax.f32 %v407, %v484
    %v572 = vmax.f32 %v439, %v486
    %v573 = vmax.f32 %v408, %v488
    %v574 = vmax.f32 %v440, %v490
    %v575 = vmax.f32 %v409, %v492
    %v576 = vmax.f32 %v441, %v494
    %v577 = vmax.f32 %v410, %v496
    %v578 = vmax.f32 %v442, %v498
    %v579 = vmax.f32 %v411, %v500
    %v580 = vmax.f32 %v443, %v502
    %v581 = vmax.f32 %v412, %v504
    %v582 = vmax.f32 %v444, %v506
    %v583 = vmax.f32 %v413, %v508
    %v584 = vmax.f32 %v445, %v510
    %v585 = vmax.f32 %v414, %v512
    %v586 = vmax.f32 %v446, %v514
    %v587 = vmax.f32 %v415, %v516
    %v588 = vmax.f32 %v447, %v518
    %v589 = vmax.f32 %v416, %v520
    %v590 = vmax.f32 %v448, %v522
    %v591 = vmax.f32 %v417, %v524
    %v592 = vmax.f32 %v449, %v526
    %v593 = vmax.f32 %v418, %v528
    %v594 = vmax.f32 %v450, %v530
    %vm595 = vcmask 516096
    %596 = vst.msk [vmem:[#allocation2] sm:$0x1] %vm595, 0.0
    %597 = vst.msk [vmem:[#allocation2 + $0x18] sm:$0x1] %vm595, 0.0
    %598 = vst.msk [vmem:[#allocation2 + $0x11] sm:$0x1] %vm595, 0.0
    %599 = vst.msk [vmem:[#allocation2 + $0x29] sm:$0x1] %vm595, 0.0
    %600 = vst.msk [vmem:[#allocation3] sm:$0x1] %vm595, 0.0
    %601 = vst.msk [vmem:[#allocation3 + $0x18] sm:$0x1] %vm595, 0.0
    %602 = vst.msk [vmem:[#allocation3 + $0x11] sm:$0x1] %vm595, 0.0
    %603 = vst.msk [vmem:[#allocation3 + $0x29] sm:$0x1] %vm595, 0.0
    %v636 = vlaneseq
    %v637 = vshrl.u32 %v636, 7
    %v638 = vsub.s32 0, %v637
    %v639 = vrot.slane %v563, %v638
    %v640 = vlaneseq
    %v641 = vshrl.u32 %v640, 7
    %v642 = vsub.s32 0, %v641
    %v643 = vrot.slane %v564, %v642
    %v644 = vlaneseq
    %v645 = vshrl.u32 %v644, 7
    %v646 = vsub.s32 0, %v645
    %v647 = vrot.slane %v565, %v646
    %v648 = vlaneseq
    %v649 = vshrl.u32 %v648, 7
    %v650 = vsub.s32 0, %v649
    %v651 = vrot.slane %v566, %v650
    %v652 = vlaneseq
    %v653 = vshrl.u32 %v652, 7
    %v654 = vsub.s32 0, %v653
    %v655 = vrot.slane %v567, %v654
    %v656 = vlaneseq
    %v657 = vshrl.u32 %v656, 7
    %v658 = vsub.s32 0, %v657
    %v659 = vrot.slane %v568, %v658
    %v660 = vlaneseq
    %v661 = vshrl.u32 %v660, 7
    %v662 = vsub.s32 0, %v661
    %v663 = vrot.slane %v569, %v662
    %v664 = vlaneseq
    %v665 = vshrl.u32 %v664, 7
    %v666 = vsub.s32 0, %v665
    %v667 = vrot.slane %v570, %v666
    %v668 = vlaneseq
    %v669 = vshrl.u32 %v668, 7
    %v670 = vsub.s32 0, %v669
    %v671 = vrot.slane %v571, %v670
    %v672 = vlaneseq
    %v673 = vshrl.u32 %v672, 7
    %v674 = vsub.s32 0, %v673
    %v675 = vrot.slane %v572, %v674
    %v676 = vlaneseq
    %v677 = vshrl.u32 %v676, 7
    %v678 = vsub.s32 0, %v677
    %v679 = vrot.slane %v573, %v678
    %v680 = vlaneseq
    %v681 = vshrl.u32 %v680, 7
    %v682 = vsub.s32 0, %v681
    %v683 = vrot.slane %v574, %v682
    %v684 = vlaneseq
    %v685 = vshrl.u32 %v684, 7
    %v686 = vsub.s32 0, %v685
    %v687 = vrot.slane %v575, %v686
    %v688 = vlaneseq
    %v689 = vshrl.u32 %v688, 7
    %v690 = vsub.s32 0, %v689
    %v691 = vrot.slane %v576, %v690
    %v692 = vlaneseq
    %v693 = vshrl.u32 %v692, 7
    %v694 = vsub.s32 0, %v693
    %v695 = vrot.slane %v577, %v694
    %v696 = vlaneseq
    %v697 = vshrl.u32 %v696, 7
    %v698 = vsub.s32 0, %v697
    %v699 = vrot.slane %v578, %v698
    %v700 = vlaneseq
    %v701 = vshrl.u32 %v700, 7
    %v702 = vsub.s32 0, %v701
    %v703 = vrot.slane %v579, %v702
    %v704 = vlaneseq
    %v705 = vshrl.u32 %v704, 7
    %v706 = vsub.s32 0, %v705
    %v707 = vrot.slane %v580, %v706
    %v708 = vlaneseq
    %v709 = vshrl.u32 %v708, 7
    %v710 = vsub.s32 0, %v709
    %v711 = vrot.slane %v581, %v710
    %v712 = vlaneseq
    %v713 = vshrl.u32 %v712, 7
    %v714 = vsub.s32 0, %v713
    %v715 = vrot.slane %v582, %v714
    %v716 = vlaneseq
    %v717 = vshrl.u32 %v716, 7
    %v718 = vsub.s32 0, %v717
    %v719 = vrot.slane %v583, %v718
    %v720 = vlaneseq
    %v721 = vshrl.u32 %v720, 7
    %v722 = vsub.s32 0, %v721
    %v723 = vrot.slane %v584, %v722
    %v724 = vlaneseq
    %v725 = vshrl.u32 %v724, 7
    %v726 = vsub.s32 0, %v725
    %v727 = vrot.slane %v585, %v726
    %v728 = vlaneseq
    %v729 = vshrl.u32 %v728, 7
    %v730 = vsub.s32 0, %v729
    %v731 = vrot.slane %v586, %v730
    %v732 = vlaneseq
    %v733 = vshrl.u32 %v732, 7
    %v734 = vsub.s32 0, %v733
    %v735 = vrot.slane %v587, %v734
    %v736 = vlaneseq
    %v737 = vshrl.u32 %v736, 7
    %v738 = vsub.s32 0, %v737
    %v739 = vrot.slane %v588, %v738
    %v740 = vlaneseq
    %v741 = vshrl.u32 %v740, 7
    %v742 = vsub.s32 0, %v741
    %v743 = vrot.slane %v589, %v742
    %v744 = vlaneseq
    %v745 = vshrl.u32 %v744, 7
    %v746 = vsub.s32 0, %v745
    %v747 = vrot.slane %v590, %v746
    %v748 = vlaneseq
    %v749 = vshrl.u32 %v748, 7
    %v750 = vsub.s32 0, %v749
    %v751 = vrot.slane %v591, %v750
    %v752 = vlaneseq
    %v753 = vshrl.u32 %v752, 7
    %v754 = vsub.s32 0, %v753
    %v755 = vrot.slane %v592, %v754
    %v756 = vlaneseq
    %v757 = vshrl.u32 %v756, 7
    %v758 = vsub.s32 0, %v757
    %v759 = vrot.slane %v593, %v758
    %v760 = vlaneseq
    %v761 = vshrl.u32 %v760, 7
    %v762 = vsub.s32 0, %v761
    %v763 = vrot.slane %v594, %v762
    %vm764 = vcmask 1041409
    %v765 = vsel %vm764, %v643, %v639
    %vm766 = vcmask 1042434
    %v767 = vsel %vm766, %v647, %v765
    %vm768 = vcmask 1043459
    %v769 = vsel %vm768, %v651, %v767
    %vm770 = vcmask 1044484
    %v771 = vsel %vm770, %v655, %v769
    %vm772 = vcmask 1045509
    %v773 = vsel %vm772, %v659, %v771
    %vm774 = vcmask 1046534
    %v775 = vsel %vm774, %v663, %v773
    %vm776 = vcmask 1047559
    %v777 = vsel %vm776, %v667, %v775
    %v778 = vsel %vm764, %v675, %v671
    %v779 = vsel %vm766, %v679, %v778
    %v780 = vsel %vm768, %v683, %v779
    %v781 = vsel %vm770, %v687, %v780
    %v782 = vsel %vm772, %v691, %v781
    %v783 = vsel %vm774, %v695, %v782
    %v784 = vsel %vm776, %v699, %v783
    %v785 = vsel %vm764, %v707, %v703
    %v786 = vsel %vm766, %v711, %v785
    %v787 = vsel %vm768, %v715, %v786
    %v788 = vsel %vm770, %v719, %v787
    %v789 = vsel %vm772, %v723, %v788
    %v790 = vsel %vm774, %v727, %v789
    %v791 = vsel %vm776, %v731, %v790
    %v792 = vsel %vm764, %v739, %v735
    %v793 = vsel %vm766, %v743, %v792
    %v794 = vsel %vm768, %v747, %v793
    %v795 = vsel %vm770, %v751, %v794
    %v796 = vsel %vm772, %v755, %v795
    %v797 = vsel %vm774, %v759, %v796
    %v798 = vsel %vm776, %v763, %v797
    %vm803 = vcmask 523264
    %804 = vst.msk [vmem:[#allocation2 + $0x1] sm:$0xff] %vm803, %v777
    %805 = vst.msk [vmem:[#allocation2 + $0x9] sm:$0xff] %vm803, %v784
    %806 = vst.msk [vmem:[#allocation2 + $0x19] sm:$0xff] %vm803, %v791
    %807 = vst.msk [vmem:[#allocation2 + $0x21] sm:$0xff] %vm803, %v798
    %v808 = vlaneseq
    %v809 = vshrl.u32 %v808, 7
    %v810 = vsub.s32 2, %v809
    %v811 = vrot.slane %v563, %v810
    %v812 = vlaneseq
    %v813 = vshrl.u32 %v812, 7
    %v814 = vsub.s32 2, %v813
    %v815 = vrot.slane %v564, %v814
    %v816 = vlaneseq
    %v817 = vshrl.u32 %v816, 7
    %v818 = vsub.s32 2, %v817
    %v819 = vrot.slane %v565, %v818
    %v820 = vlaneseq
    %v821 = vshrl.u32 %v820, 7
    %v822 = vsub.s32 2, %v821
    %v823 = vrot.slane %v566, %v822
    %v824 = vlaneseq
    %v825 = vshrl.u32 %v824, 7
    %v826 = vsub.s32 2, %v825
    %v827 = vrot.slane %v567, %v826
    %v828 = vlaneseq
    %v829 = vshrl.u32 %v828, 7
    %v830 = vsub.s32 2, %v829
    %v831 = vrot.slane %v568, %v830
    %v832 = vlaneseq
    %v833 = vshrl.u32 %v832, 7
    %v834 = vsub.s32 2, %v833
    %v835 = vrot.slane %v569, %v834
    %v836 = vlaneseq
    %v837 = vshrl.u32 %v836, 7
    %v838 = vsub.s32 2, %v837
    %v839 = vrot.slane %v570, %v838
    %v840 = vlaneseq
    %v841 = vshrl.u32 %v840, 7
    %v842 = vsub.s32 2, %v841
    %v843 = vrot.slane %v571, %v842
    %v844 = vlaneseq
    %v845 = vshrl.u32 %v844, 7
    %v846 = vsub.s32 2, %v845
    %v847 = vrot.slane %v572, %v846
    %v848 = vlaneseq
    %v849 = vshrl.u32 %v848, 7
    %v850 = vsub.s32 2, %v849
    %v851 = vrot.slane %v573, %v850
    %v852 = vlaneseq
    %v853 = vshrl.u32 %v852, 7
    %v854 = vsub.s32 2, %v853
    %v855 = vrot.slane %v574, %v854
    %v856 = vlaneseq
    %v857 = vshrl.u32 %v856, 7
    %v858 = vsub.s32 2, %v857
    %v859 = vrot.slane %v575, %v858
    %v860 = vlaneseq
    %v861 = vshrl.u32 %v860, 7
    %v862 = vsub.s32 2, %v861
    %v863 = vrot.slane %v576, %v862
    %v864 = vlaneseq
    %v865 = vshrl.u32 %v864, 7
    %v866 = vsub.s32 2, %v865
    %v867 = vrot.slane %v577, %v866
    %v868 = vlaneseq
    %v869 = vshrl.u32 %v868, 7
    %v870 = vsub.s32 2, %v869
    %v871 = vrot.slane %v578, %v870
    %v872 = vlaneseq
    %v873 = vshrl.u32 %v872, 7
    %v874 = vsub.s32 2, %v873
    %v875 = vrot.slane %v579, %v874
    %v876 = vlaneseq
    %v877 = vshrl.u32 %v876, 7
    %v878 = vsub.s32 2, %v877
    %v879 = vrot.slane %v580, %v878
    %v880 = vlaneseq
    %v881 = vshrl.u32 %v880, 7
    %v882 = vsub.s32 2, %v881
    %v883 = vrot.slane %v581, %v882
    %v884 = vlaneseq
    %v885 = vshrl.u32 %v884, 7
    %v886 = vsub.s32 2, %v885
    %v887 = vrot.slane %v582, %v886
    %v888 = vlaneseq
    %v889 = vshrl.u32 %v888, 7
    %v890 = vsub.s32 2, %v889
    %v891 = vrot.slane %v583, %v890
    %v892 = vlaneseq
    %v893 = vshrl.u32 %v892, 7
    %v894 = vsub.s32 2, %v893
    %v895 = vrot.slane %v584, %v894
    %v896 = vlaneseq
    %v897 = vshrl.u32 %v896, 7
    %v898 = vsub.s32 2, %v897
    %v899 = vrot.slane %v585, %v898
    %v900 = vlaneseq
    %v901 = vshrl.u32 %v900, 7
    %v902 = vsub.s32 2, %v901
    %v903 = vrot.slane %v586, %v902
    %v904 = vlaneseq
    %v905 = vshrl.u32 %v904, 7
    %v906 = vsub.s32 2, %v905
    %v907 = vrot.slane %v587, %v906
    %v908 = vlaneseq
    %v909 = vshrl.u32 %v908, 7
    %v910 = vsub.s32 2, %v909
    %v911 = vrot.slane %v588, %v910
    %v912 = vlaneseq
    %v913 = vshrl.u32 %v912, 7
    %v914 = vsub.s32 2, %v913
    %v915 = vrot.slane %v589, %v914
    %v916 = vlaneseq
    %v917 = vshrl.u32 %v916, 7
    %v918 = vsub.s32 2, %v917
    %v919 = vrot.slane %v590, %v918
    %v920 = vlaneseq
    %v921 = vshrl.u32 %v920, 7
    %v922 = vsub.s32 2, %v921
    %v923 = vrot.slane %v591, %v922
    %v924 = vlaneseq
    %v925 = vshrl.u32 %v924, 7
    %v926 = vsub.s32 2, %v925
    %v927 = vrot.slane %v592, %v926
    %v928 = vlaneseq
    %v929 = vshrl.u32 %v928, 7
    %v930 = vsub.s32 2, %v929
    %v931 = vrot.slane %v593, %v930
    %v932 = vlaneseq
    %v933 = vshrl.u32 %v932, 7
    %v934 = vsub.s32 2, %v933
    %v935 = vrot.slane %v594, %v934
    %v936 = vsel %vm768, %v815, %v811
    %v937 = vsel %vm770, %v819, %v936
    %v938 = vsel %vm772, %v823, %v937
    %v939 = vsel %vm774, %v827, %v938
    %v940 = vsel %vm776, %v831, %v939
    %v941 = vsel %vm764, %v839, %v835
    %v942 = vsel %vm766, %v843, %v941
    %v943 = vsel %vm768, %v847, %v942
    %v944 = vsel %vm770, %v851, %v943
    %v945 = vsel %vm772, %v855, %v944
    %v946 = vsel %vm774, %v859, %v945
    %v947 = vsel %vm776, %v863, %v946
    %v948 = vsel %vm764, %v871, %v867
    %v949 = vsel %vm768, %v879, %v875
    %v950 = vsel %vm770, %v883, %v949
    %v951 = vsel %vm772, %v887, %v950
    %v952 = vsel %vm774, %v891, %v951
    %v953 = vsel %vm776, %v895, %v952
    %v954 = vsel %vm764, %v903, %v899
    %v955 = vsel %vm766, %v907, %v954
    %v956 = vsel %vm768, %v911, %v955
    %v957 = vsel %vm770, %v915, %v956
    %v958 = vsel %vm772, %v919, %v957
    %v959 = vsel %vm774, %v923, %v958
    %v960 = vsel %vm776, %v927, %v959
    %v961 = vsel %vm764, %v935, %v931
    %vm968 = vcmask 523266
    %969 = vst.msk [vmem:[#allocation3 - $0x1] sm:$0xfc] %vm968, %v940
    %970 = vst.msk [vmem:[#allocation3 + $0x7] sm:$0xff] %vm803, %v947
    %vm971 = vcmask 517120
    %972 = vst.msk [vmem:[#allocation3 + $0xf] sm:$0x3] %vm971, %v948
    %973 = vst.msk [vmem:[#allocation3 + $0x17] sm:$0xfc] %vm968, %v953
    %974 = vst.msk [vmem:[#allocation3 + $0x1f] sm:$0xff] %vm803, %v960
    %975 = vst.msk [vmem:[#allocation3 + $0x27] sm:$0x3] %vm971, %v961
    %v976 = vld [vmem:[#allocation2] sm:$0xff]
    %v977 = vld [vmem:[#allocation2 + $0x8] sm:$0xff]
    %v978 = vld [vmem:[#allocation2 + $0x18] sm:$0xff]
    %v979 = vld [vmem:[#allocation2 + $0x20] sm:$0xff]
    %v980 = vld [vmem:[#allocation3] sm:$0xff]
    %v981 = vld [vmem:[#allocation3 + $0x8] sm:$0xff]
    %v982 = vld [vmem:[#allocation3 + $0x18] sm:$0xff]
    %v983 = vld [vmem:[#allocation3 + $0x20] sm:$0xff]
    %v984 = vld [vmem:[#allocation2 + $0x1] sm:$0xff]
    %v985 = vld [vmem:[#allocation2 + $0x9] sm:$0xff]
    %v986 = vld [vmem:[#allocation2 + $0x19] sm:$0xff]
    %v987 = vld [vmem:[#allocation2 + $0x21] sm:$0xff]
    %v988 = vld [vmem:[#allocation3 + $0x1] sm:$0xff]
    %v989 = vld [vmem:[#allocation3 + $0x9] sm:$0xff]
    %v990 = vld [vmem:[#allocation3 + $0x19] sm:$0xff]
    %v991 = vld [vmem:[#allocation3 + $0x21] sm:$0xff]
    %v992 = vld [vmem:[#allocation2 + $0x2] sm:$0xff]
    %v993 = vld [vmem:[#allocation2 + $0xa] sm:$0xff]
    %v994 = vld [vmem:[#allocation2 + $0x1a] sm:$0xff]
    %v995 = vld [vmem:[#allocation2 + $0x22] sm:$0xff]
    %1000 = vrot.lane.b32.xlu0 %v980, 64
    %v1001 = vpop.permute.xlu0 %1000
    %1002 = vrot.lane.b32.xlu0 %v981, 64
    %v1003 = vpop.permute.xlu0 %1002
    %1004 = vrot.lane.b32.xlu0 %v982, 64
    %v1005 = vpop.permute.xlu0 %1004
    %1006 = vrot.lane.b32.xlu0 %v983, 64
    %v1007 = vpop.permute.xlu0 %1006
    %1016 = vrot.lane.b32.xlu0 %v988, 64
    %v1017 = vpop.permute.xlu0 %1016
    %1018 = vrot.lane.b32.xlu0 %v989, 64
    %v1019 = vpop.permute.xlu0 %1018
    %1020 = vrot.lane.b32.xlu0 %v990, 64
    %v1021 = vpop.permute.xlu0 %1020
    %1022 = vrot.lane.b32.xlu0 %v991, 64
    %v1023 = vpop.permute.xlu0 %1022
    %v1028 = vsel %vm803, %v976, %v1001
    %v1029 = vsel %vm803, %v977, %v1003
    %v1030 = vsel %vm803, %v978, %v1005
    %v1031 = vsel %vm803, %v979, %v1007
    %v1032 = vsel %vm803, %v984, %v1017
    %v1033 = vsel %vm803, %v985, %v1019
    %v1034 = vsel %vm803, %v986, %v1021
    %v1035 = vsel %vm803, %v987, %v1023
    %v1036 = vpack.c.bf16 %v1029, %v1028
    %v1037 = vpack.c.bf16 %v1033, %v1032
    %v1038 = vpack.c.bf16 %v993, %v992
    %v1039 = vpack.c.bf16 %v1031, %v1030
    %v1040 = vpack.c.bf16 %v1035, %v1034
    %v1041 = vpack.c.bf16 %v995, %v994
    %v1042 = vld [vmem:[#allocation12] sm:$0xf]
    %v1043 = vld [vmem:[#allocation12 + $0x4] sm:$0xf]
    %v1044 = vld [vmem:[#allocation12 + $0x8] sm:$0xf]
    %v1045 = vld [vmem:[#allocation12 + $0xc] sm:$0xf]
    %v1046 = vld [vmem:[#allocation12 + $0x10] sm:$0xf]
    %v1047 = vld [vmem:[#allocation12 + $0x14] sm:$0xf]
    %v1048 = vld [vmem:[#allocation12 + $0x18] sm:$0xf]
    %v1049 = vld [vmem:[#allocation12 + $0x1c] sm:$0xf]
    %v1050 = vld [vmem:[#allocation12 + $0x20] sm:$0xf]
    %v1051 = vld [vmem:[#allocation12 + $0x24] sm:$0xf]
    %v1052 = vld [vmem:[#allocation12 + $0x28] sm:$0xf]
    %v1053 = vld [vmem:[#allocation12 + $0x2c] sm:$0xf]
    %v1054 = vld [vmem:[#allocation12 + $0x30] sm:$0xf]
    %v1055 = vld [vmem:[#allocation12 + $0x34] sm:$0xf]
    %v1056 = vld [vmem:[#allocation12 + $0x38] sm:$0xf]
    %v1057 = vld [vmem:[#allocation12 + $0x3c] sm:$0xf]
    %v1058 = vld [vmem:[#allocation12 + $0x40] sm:$0xf]
    %v1059 = vld [vmem:[#allocation12 + $0x44] sm:$0xf]
    %v1060 = vld [vmem:[#allocation12 + $0x48] sm:$0xf]
    %v1061 = vld [vmem:[#allocation12 + $0x4c] sm:$0xf]
    %v1062 = vld [vmem:[#allocation12 + $0x50] sm:$0xf]
    %v1063 = vld [vmem:[#allocation12 + $0x54] sm:$0xf]
    %v1064 = vld [vmem:[#allocation12 + $0x58] sm:$0xf]
    %v1065 = vld [vmem:[#allocation12 + $0x5c] sm:$0xf]
    %v1066 = vld [vmem:[#allocation12 + $0x60] sm:$0xf]
    %v1067 = vld [vmem:[#allocation12 + $0x64] sm:$0xf]
    %v1068 = vld [vmem:[#allocation12 + $0x68] sm:$0xf]
    %v1069 = vld [vmem:[#allocation12 + $0x6c] sm:$0xf]
    %v1070 = vld [vmem:[#allocation12 + $0x70] sm:$0xf]
    %v1071 = vld [vmem:[#allocation12 + $0x74] sm:$0xf]
    %v1072 = vld [vmem:[#allocation12 + $0x78] sm:$0xf]
    %v1073 = vld [vmem:[#allocation12 + $0x7c] sm:$0xf]
    %v1074 = vld [vmem:[#allocation12 + $0x80] sm:$0xf]
    %v1075 = vld [vmem:[#allocation12 + $0x84] sm:$0xf]
    %v1076 = vld [vmem:[#allocation12 + $0x88] sm:$0xf]
    %v1077 = vld [vmem:[#allocation12 + $0x8c] sm:$0xf]
    %v1078 = vld [vmem:[#allocation12 + $0x90] sm:$0xf]
    %v1079 = vld [vmem:[#allocation12 + $0x94] sm:$0xf]
    %v1080 = vld [vmem:[#allocation12 + $0x98] sm:$0xf]
    %v1081 = vld [vmem:[#allocation12 + $0x9c] sm:$0xf]
    %v1082 = vld [vmem:[#allocation14] sm:$0x1]
    %v1084 = vlaneseq
    %v1085 = vshrl.u32 %v1084, 7
    %v1086 = vsub.s32 0, %v1085
    %v1087 = vrot.slane %v1082, %v1086
    %v1129 = vunpack.c.l.b16 %v1042
    %v1130 = vunpack.c.l.b16 %v1043
    %v1131 = vunpack.c.l.b16 %v1044
    %v1132 = vunpack.c.l.b16 %v1045
    %v1133 = vunpack.c.l.b16 %v1046
    %v1134 = vunpack.c.l.b16 %v1047
    %v1135 = vunpack.c.l.b16 %v1048
    %v1136 = vunpack.c.l.b16 %v1049
    %v1137 = vunpack.c.l.b16 %v1050
    %v1138 = vunpack.c.l.b16 %v1051
    %v1139 = vunpack.c.l.b16 %v1052
    %v1140 = vunpack.c.l.b16 %v1053
    %v1141 = vunpack.c.l.b16 %v1054
    %v1142 = vunpack.c.l.b16 %v1055
    %v1143 = vunpack.c.l.b16 %v1056
    %v1144 = vunpack.c.l.b16 %v1057
    %v1145 = vunpack.c.l.b16 %v1058
    %v1146 = vunpack.c.l.b16 %v1059
    %v1147 = vunpack.c.l.b16 %v1060
    %v1148 = vunpack.c.l.b16 %v1061
    %v1149 = vunpack.c.l.b16 %v1062
    %v1150 = vunpack.c.l.b16 %v1063
    %v1151 = vunpack.c.l.b16 %v1064
    %v1152 = vunpack.c.l.b16 %v1065
    %v1153 = vunpack.c.l.b16 %v1066
    %v1154 = vunpack.c.l.b16 %v1067
    %v1155 = vunpack.c.l.b16 %v1068
    %v1156 = vunpack.c.l.b16 %v1069
    %v1157 = vunpack.c.l.b16 %v1070
    %v1158 = vunpack.c.l.b16 %v1071
    %v1159 = vunpack.c.l.b16 %v1072
    %v1160 = vunpack.c.l.b16 %v1073
    %v1161 = vunpack.c.l.b16 %v1074
    %v1162 = vunpack.c.l.b16 %v1075
    %v1163 = vunpack.c.l.b16 %v1076
    %v1164 = vunpack.c.l.b16 %v1077
    %v1165 = vunpack.c.l.b16 %v1078
    %v1166 = vunpack.c.l.b16 %v1079
    %v1167 = vunpack.c.l.b16 %v1080
    %v1168 = vunpack.c.l.b16 %v1081
    %v1169 = vpack.c.b16 %v1130, %v1129
    %v1170 = vpack.c.b16 %v1132, %v1131
    %v1171 = vpack.c.b16 %v1134, %v1133
    %v1172 = vpack.c.b16 %v1136, %v1135
    %v1173 = vpack.c.b16 %v1138, %v1137
    %v1174 = vpack.c.b16 %v1140, %v1139
    %v1175 = vpack.c.b16 %v1142, %v1141
    %v1176 = vpack.c.b16 %v1144, %v1143
    %v1177 = vpack.c.b16 %v1146, %v1145
    %v1178 = vpack.c.b16 %v1148, %v1147
    %v1179 = vpack.c.b16 %v1150, %v1149
    %v1180 = vpack.c.b16 %v1152, %v1151
    %v1181 = vpack.c.b16 %v1154, %v1153
    %v1182 = vpack.c.b16 %v1156, %v1155
    %v1183 = vpack.c.b16 %v1158, %v1157
    %v1184 = vpack.c.b16 %v1160, %v1159
    %v1185 = vpack.c.b16 %v1162, %v1161
    %v1186 = vpack.c.b16 %v1164, %v1163
    %v1187 = vpack.c.b16 %v1166, %v1165
    %v1188 = vpack.c.b16 %v1168, %v1167
    %v1210 = vsel %vm803, %v1038, 0
    %v1213 = vsel %vm803, %v1041, 0
    %1215 = vmatprep.subr.bf16.mxu0 0
    %1216 = vmatpush1.bf16.msra.mxu0 %v1169
    %1217 = vmatprep.subr.bf16.mxu0 0
    %1218 = vmatpush1.bf16.msra.mxu0 %v1170
    %1219 = vmatprep.subr.bf16.mxu0 0
    %1220 = vmatpush1.bf16.msra.mxu0 %v1171
    %1221 = vmatprep.subr.bf16.mxu0 0
    %1222 = vmatpush1.bf16.msra.mxu0 %v1172
    %1223 = vmatprep.subr.bf16.mxu0 0
    %1224 = vmatpush1.bf16.msra.mxu0 %v1173
    %1225 = vmatprep.subr.bf16.mxu0 0
    %1226 = vmatpush1.bf16.msra.mxu0 %v1174
    %1227 = vmatprep.subr.bf16.mxu0 0
    %1228 = vmatpush1.bf16.msra.mxu0 %v1175
    %1229 = vmatprep.subr.bf16.mxu0 0
    %1230 = vmatpush1.bf16.msra.mxu0 %v1176
    %1231 = vmatprep.subr.bf16.mxu0 0
    %1232 = vmatpush1.bf16.msra.mxu0 %v1177
    %1233 = vmatprep.subr.bf16.mxu0 0
    %1234 = vmatpush1.bf16.msra.mxu0 %v1178
    %1235 = vmatprep.subr.bf16.mxu0 0
    %1236 = vmatpush1.bf16.msra.mxu0 %v1179
    %1237 = vmatprep.subr.bf16.mxu0 0
    %1238 = vmatpush1.bf16.msra.mxu0 %v1180
    %1239 = vmatprep.subr.bf16.mxu0 0
    %1240 = vmatpush1.bf16.msra.mxu0 %v1181
    %1241 = vmatprep.subr.bf16.mxu0 0
    %1242 = vmatpush1.bf16.msra.mxu0 %v1182
    %1243 = vmatprep.subr.bf16.mxu0 0
    %1244 = vmatpush1.bf16.msra.mxu0 %v1183
    %1245 = vmatprep.subr.bf16.mxu0 0
    %1246 = vmatpush1.bf16.msra.mxu0 %v1184
    %1247 = vmatprep.mubr.bf16.mxu0 %v1037
    %1248 = vmatmul.mubr.bf16.gmra.mrb[0].mxu0 %v1036
    %v1249 = vpop.f32.mrb[0].mxu0
    %v1250 = vadd.f32 %v1087, %v1249
    %v1251 = vpop.f32.mrb[0].mxu0
    %v1252 = vpop.f32.mrb[0].mxu0
    %v1253 = vadd.f32 %v1087, %v1252
    %v1254 = vpop.f32.mrb[0].mxu0
    %1255 = vmatprep.mubr.bf16.mxu0 %v1040
    %1256 = vmatmul.mubr.bf16.gmra.mrb[0].mxu0 %v1039
    %v1257 = vpop.f32.mrb[0].mxu0
    %v1258 = vadd.f32 %v1087, %v1257
    %v1259 = vpop.f32.mrb[0].mxu0
    %v1260 = vpop.f32.mrb[0].mxu0
    %v1261 = vadd.f32 %v1087, %v1260
    %v1262 = vpop.f32.mrb[0].mxu0
    %1263 = vdwg.mxu0
    %1264 = vmatprep.subr.bf16.mxu0 0
    %1265 = vmatpush1.bf16.msra.mxu0 %v1185
    %1266 = vmatprep.subr.bf16.mxu0 0
    %1267 = vmatpush1.bf16.msra.mxu0 %v1186
    %1268 = vmatprep.subr.bf16.mxu0 0
    %1269 = vmatpush1.bf16.msra.mxu0 %v1187
    %1270 = vmatprep.subr.bf16.mxu0 0
    %1271 = vmatpush1.bf16.msra.mxu0 %v1188
    %1272 = vmatprep.subr.bf16.mxu0 0
    %1273 = vmatpush1.bf16.msra.mxu0 0
    %1274 = vmatprep.subr.bf16.mxu0 0
    %1275 = vmatpush1.bf16.msra.mxu0 0
    %1276 = vmatprep.subr.bf16.mxu0 0
    %1277 = vmatpush1.bf16.msra.mxu0 0
    %1278 = vmatprep.subr.bf16.mxu0 0
    %1279 = vmatpush1.bf16.msra.mxu0 0
    %1280 = vmatprep.subr.bf16.mxu0 0
    %1281 = vmatpush1.bf16.msra.mxu0 0
    %1282 = vmatprep.subr.bf16.mxu0 0
    %1283 = vmatpush1.bf16.msra.mxu0 0
    %1284 = vmatprep.subr.bf16.mxu0 0
    %1285 = vmatpush1.bf16.msra.mxu0 0
    %1286 = vmatprep.subr.bf16.mxu0 0
    %1287 = vmatpush1.bf16.msra.mxu0 0
    %1288 = vmatprep.subr.bf16.mxu0 0
    %1289 = vmatpush1.bf16.msra.mxu0 0
    %1290 = vmatprep.subr.bf16.mxu0 0
    %1291 = vmatpush1.bf16.msra.mxu0 0
    %1292 = vmatprep.subr.bf16.mxu0 0
    %1293 = vmatpush1.bf16.msra.mxu0 0
    %1294 = vmatprep.subr.bf16.mxu0 0
    %1295 = vmatpush1.bf16.msra.mxu0 0
    %1296 = vmatprep.mubr.bf16.mxu0 0
    %1297 = vmatmul.mubr.bf16.gmra.mrb[0].mxu0 %v1210
    %v1298 = vpop.f32.mrb[0].mxu0
    %v1299 = vadd.f32 %v1250, %v1298
    %v1300 = vpop.f32.mrb[0].mxu0
    %v1301 = vpop.f32.mrb[0].mxu0
    %v1302 = vadd.f32 %v1253, %v1301
    %v1303 = vpop.f32.mrb[0].mxu0
    %1304 = vmatprep.mubr.bf16.mxu0 0
    %1305 = vmatmul.mubr.bf16.gmra.mrb[0].mxu0 %v1213
    %v1306 = vpop.f32.mrb[0].mxu0
    %v1307 = vadd.f32 %v1258, %v1306
    %v1308 = vpop.f32.mrb[0].mxu0
    %v1309 = vpop.f32.mrb[0].mxu0
    %v1310 = vadd.f32 %v1261, %v1309
    %v1311 = vpop.f32.mrb[0].mxu0
    %1312 = vdwg.mxu0
    %v1313 = vmax.f32 %v1299, 0.0
    %v1314 = vmax.f32 %v1302, 0.0
    %v1315 = vmax.f32 %v1307, 0.0
    %v1316 = vmax.f32 %v1310, 0.0
    %v1321 = vcombine.high %v1313, %v1313
    %v1322 = vcombine.high %v1314, %v1314
    %v1323 = vcombine.high %v1315, %v1315
    %v1324 = vcombine.high %v1316, %v1316
    %v1329 = vrot.slane %v1313, 5
    %v1330 = vrot.slane %v1329, 4
    %v1331 = vrot.slane %v1321, 5
    %v1332 = vrot.slane %v1331, 4
    %v1333 = vrot.slane %v1314, 5
    %v1334 = vrot.slane %v1333, 4
    %v1335 = vrot.slane %v1322, 5
    %v1336 = vrot.slane %v1335, 4
    %v1337 = vrot.slane %v1315, 5
    %v1338 = vrot.slane %v1337, 4
    %v1339 = vrot.slane %v1323, 5
    %v1340 = vrot.slane %v1339, 4
    %v1341 = vrot.slane %v1316, 5
    %v1342 = vrot.slane %v1341, 4
    %v1343 = vrot.slane %v1324, 5
    %v1344 = vrot.slane %v1343, 4
    %v1353 = vmax.f32 %v1313, %v1330
    %v1354 = vmax.f32 %v1321, %v1332
    %v1355 = vmax.f32 %v1314, %v1334
    %v1356 = vmax.f32 %v1322, %v1336
    %v1357 = vmax.f32 %v1315, %v1338
    %v1358 = vmax.f32 %v1323, %v1340
    %v1359 = vmax.f32 %v1316, %v1342
    %v1360 = vmax.f32 %v1324, %v1344
    %1361 = vst [vmem:[#allocation4] sm:$0x1] 0.0
    %1362 = vst [vmem:[#allocation4 + $0x8] sm:$0x1] 0.0
    %v1371 = vlaneseq
    %v1372 = vshrl.u32 %v1371, 7
    %v1373 = vsub.s32 2, %v1372
    %v1374 = vrot.slane %v1353, %v1373
    %v1375 = vlaneseq
    %v1376 = vshrl.u32 %v1375, 7
    %v1377 = vsub.s32 2, %v1376
    %v1378 = vrot.slane %v1354, %v1377
    %v1379 = vlaneseq
    %v1380 = vshrl.u32 %v1379, 7
    %v1381 = vsub.s32 2, %v1380
    %v1382 = vrot.slane %v1355, %v1381
    %v1383 = vlaneseq
    %v1384 = vshrl.u32 %v1383, 7
    %v1385 = vsub.s32 2, %v1384
    %v1386 = vrot.slane %v1356, %v1385
    %v1387 = vlaneseq
    %v1388 = vshrl.u32 %v1387, 7
    %v1389 = vsub.s32 2, %v1388
    %v1390 = vrot.slane %v1357, %v1389
    %v1391 = vlaneseq
    %v1392 = vshrl.u32 %v1391, 7
    %v1393 = vsub.s32 2, %v1392
    %v1394 = vrot.slane %v1358, %v1393
    %v1395 = vlaneseq
    %v1396 = vshrl.u32 %v1395, 7
    %v1397 = vsub.s32 2, %v1396
    %v1398 = vrot.slane %v1359, %v1397
    %v1399 = vlaneseq
    %v1400 = vshrl.u32 %v1399, 7
    %v1401 = vsub.s32 2, %v1400
    %v1402 = vrot.slane %v1360, %v1401
    %v1403 = vsel %vm768, %v1378, %v1374
    %v1404 = vsel %vm770, %v1382, %v1403
    %v1405 = vsel %vm772, %v1386, %v1404
    %v1406 = vsel %vm768, %v1394, %v1390
    %v1407 = vsel %vm770, %v1398, %v1406
    %v1408 = vsel %vm772, %v1402, %v1407
    %1411 = vst [vmem:[#allocation4 - $0x1] sm:$0x3c] %v1405
    %1412 = vst [vmem:[#allocation4 + $0x7] sm:$0x3c] %v1408
    %v1413 = vlaneseq
    %v1414 = vshrl.u32 %v1413, 7
    %v1415 = vsub.s32 0, %v1414
    %v1416 = vrot.slane %v1353, %v1415
    %v1417 = vlaneseq
    %v1418 = vshrl.u32 %v1417, 7
    %v1419 = vsub.s32 0, %v1418
    %v1420 = vrot.slane %v1354, %v1419
    %v1421 = vlaneseq
    %v1422 = vshrl.u32 %v1421, 7
    %v1423 = vsub.s32 0, %v1422
    %v1424 = vrot.slane %v1355, %v1423
    %v1425 = vlaneseq
    %v1426 = vshrl.u32 %v1425, 7
    %v1427 = vsub.s32 0, %v1426
    %v1428 = vrot.slane %v1356, %v1427
    %v1429 = vlaneseq
    %v1430 = vshrl.u32 %v1429, 7
    %v1431 = vsub.s32 0, %v1430
    %v1432 = vrot.slane %v1357, %v1431
    %v1433 = vlaneseq
    %v1434 = vshrl.u32 %v1433, 7
    %v1435 = vsub.s32 0, %v1434
    %v1436 = vrot.slane %v1358, %v1435
    %v1437 = vlaneseq
    %v1438 = vshrl.u32 %v1437, 7
    %v1439 = vsub.s32 0, %v1438
    %v1440 = vrot.slane %v1359, %v1439
    %v1441 = vlaneseq
    %v1442 = vshrl.u32 %v1441, 7
    %v1443 = vsub.s32 0, %v1442
    %v1444 = vrot.slane %v1360, %v1443
    %v1445 = vsel %vm764, %v1420, %v1416
    %v1446 = vsel %vm766, %v1424, %v1445
    %v1447 = vsel %vm768, %v1428, %v1446
    %v1448 = vsel %vm764, %v1436, %v1432
    %v1449 = vsel %vm766, %v1440, %v1448
    %v1450 = vsel %vm768, %v1444, %v1449
    %1453 = vst [vmem:[#allocation5] sm:$0xf] %v1447
    %1454 = vst [vmem:[#allocation5 + $0x8] sm:$0xf] %v1450
    %1455 = vst [vmem:[#allocation5 + $0x4] sm:$0x1] 0.0
    %1456 = vst [vmem:[#allocation5 + $0xc] sm:$0x1] 0.0
    %v1457 = vld [vmem:[#allocation4] sm:$0xf]
    %v1458 = vld [vmem:[#allocation4 + $0x8] sm:$0xf]
    %v1459 = vld [vmem:[#allocation5] sm:$0xf]
    %v1460 = vld [vmem:[#allocation5 + $0x8] sm:$0xf]
    %v1461 = vld [vmem:[#allocation4 + $0x1] sm:$0xf]
    %v1462 = vld [vmem:[#allocation4 + $0x9] sm:$0xf]
    %v1463 = vpack.c.bf16 %v1457, %v1457
    %v1464 = vpack.c.bf16 %v1459, %v1459
    %v1465 = vpack.c.bf16 %v1461, %v1461
    %v1466 = vpack.c.bf16 %v1458, %v1458
    %v1467 = vpack.c.bf16 %v1460, %v1460
    %v1468 = vpack.c.bf16 %v1462, %v1462
    %v1475 = vcombine.low %v1463, %v1464
    %v1477 = vunpack.c.l.s4 1983009808
    %v1478 = vunpack.c.0.s8 %v1477
    %v1479 = vlaneseq
    %v1480 = vshrl.u32 %v1479, 7
    %v1481 = vsub.s32 %v1478, %v1480
    %v1482 = vrot.slane %v1475, %v1481
    %v1484 = vunpack.c.l.s4 1983009808
    %v1485 = vunpack.c.0.s8 %v1484
    %v1486 = vlaneseq
    %v1487 = vshrl.u32 %v1486, 7
    %v1488 = vsub.s32 %v1485, %v1487
    %v1489 = vrot.slane %v1465, %v1488
    %v1490 = vcombine.low %v1482, %v1489
    %v1491 = vcombine.low %v1466, %v1467
    %v1493 = vunpack.c.l.s4 1983009808
    %v1494 = vunpack.c.0.s8 %v1493
    %v1495 = vlaneseq
    %v1496 = vshrl.u32 %v1495, 7
    %v1497 = vsub.s32 %v1494, %v1496
    %v1498 = vrot.slane %v1491, %v1497
    %v1500 = vunpack.c.l.s4 1983009808
    %v1501 = vunpack.c.0.s8 %v1500
    %v1502 = vlaneseq
    %v1503 = vshrl.u32 %v1502, 7
    %v1504 = vsub.s32 %v1501, %v1503
    %v1505 = vrot.slane %v1468, %v1504
    %v1506 = vcombine.low %v1498, %v1505
    %v1507 = vld [vmem:[#allocation15] sm:$0xff]
    %v1508 = vld [vmem:[#allocation15 + $0x8] sm:$0xff]
    %v1509 = vld [vmem:[#allocation15 + $0x10] sm:$0xff]
    %v1510 = vld [vmem:[#allocation15 + $0x18] sm:$0xff]
    %v1511 = vld [vmem:[#allocation15 + $0x20] sm:$0xff]
    %v1512 = vld [vmem:[#allocation15 + $0x28] sm:$0xff]
    %v1513 = vld [vmem:[#allocation15 + $0x30] sm:$0xff]
    %v1514 = vld [vmem:[#allocation15 + $0x38] sm:$0xff]
    %v1515 = vld [vmem:[#allocation15 + $0x40] sm:$0xff]
    %v1516 = vld [vmem:[#allocation15 + $0x48] sm:$0xff]
    %v1517 = vld [vmem:[#allocation15 + $0x50] sm:$0xff]
    %v1518 = vld [vmem:[#allocation15 + $0x58] sm:$0xff]
    %v1519 = vld [vmem:[#allocation15 + $0x60] sm:$0xff]
    %v1520 = vld [vmem:[#allocation15 + $0x68] sm:$0xff]
    %v1521 = vld [vmem:[#allocation15 + $0x70] sm:$0xff]
    %v1522 = vld [vmem:[#allocation15 + $0x78] sm:$0xff]
    %v1523 = vld [vmem:[#allocation15 + $0x80] sm:$0xff]
    %v1524 = vld [vmem:[#allocation15 + $0x88] sm:$0xff]
    %v1525 = vld [vmem:[#allocation15 + $0x90] sm:$0xff]
    %v1526 = vld [vmem:[#allocation15 + $0x98] sm:$0xff]
    %v1527 = vld [vmem:[#allocation15 + $0xa0] sm:$0xff]
    %v1528 = vld [vmem:[#allocation15 + $0xa8] sm:$0xff]
    %v1529 = vld [vmem:[#allocation15 + $0xb0] sm:$0xff]
    %v1530 = vld [vmem:[#allocation15 + $0xb8] sm:$0xff]
    %v1531 = vld [vmem:[#allocation15 + $0xc0] sm:$0xff]
    %v1532 = vld [vmem:[#allocation15 + $0xc8] sm:$0xff]
    %v1533 = vld [vmem:[#allocation15 + $0xd0] sm:$0xff]
    %v1534 = vld [vmem:[#allocation15 + $0xd8] sm:$0xff]
    %v1535 = vld [vmem:[#allocation15 + $0xe0] sm:$0xff]
    %v1536 = vld [vmem:[#allocation15 + $0xe8] sm:$0xff]
    %v1537 = vld [vmem:[#allocation15 + $0xf0] sm:$0xff]
    %v1538 = vld [vmem:[#allocation15 + $0xf8] sm:$0xff]
    %v1539 = vld [vmem:[#allocation15 + $0x100] sm:$0xff]
    %v1540 = vld [vmem:[#allocation15 + $0x108] sm:$0xff]
    %v1541 = vld [vmem:[#allocation15 + $0x110] sm:$0xff]
    %v1542 = vld [vmem:[#allocation15 + $0x118] sm:$0xff]
    %v1543 = vld [vmem:[#allocation15 + $0x120] sm:$0xff]
    %v1544 = vld [vmem:[#allocation15 + $0x128] sm:$0xff]
    %v1545 = vld [vmem:[#allocation15 + $0x130] sm:$0xff]
    %v1546 = vld [vmem:[#allocation15 + $0x138] sm:$0xff]
    %v1547 = vld [vmem:[#allocation15 + $0x140] sm:$0xff]
    %v1548 = vld [vmem:[#allocation15 + $0x148] sm:$0xff]
    %v1549 = vld [vmem:[#allocation15 + $0x150] sm:$0xff]
    %v1550 = vld [vmem:[#allocation15 + $0x158] sm:$0xff]
    %v1551 = vld [vmem:[#allocation15 + $0x160] sm:$0xff]
    %v1552 = vld [vmem:[#allocation15 + $0x168] sm:$0xff]
    %v1553 = vld [vmem:[#allocation15 + $0x170] sm:$0xff]
    %v1554 = vld [vmem:[#allocation15 + $0x178] sm:$0xff]
    %v1555 = vld [vmem:[#allocation17] sm:$0x3]
    %v1557 = vlaneseq
    %v1558 = vshrl.u32 %v1557, 7
    %v1559 = vsub.s32 0, %v1558
    %v1560 = vrot.slane %v1555, %v1559
    %v1561 = vlaneseq
    %v1562 = vshrl.u32 %v1561, 7
    %v1563 = vsub.s32 1, %v1562
    %v1564 = vrot.slane %v1555, %v1563
    %v1567 = vcombine.low %v1490, %v1506
    %v1568 = vcombine.high %v1490, %v1506
    %v1570 = vunpack.c.l.s4 1983009808
    %v1571 = vunpack.c.0.s8 %v1570
    %v1572 = vlaneseq
    %v1573 = vshrl.u32 %v1572, 7
    %v1574 = vsub.s32 %v1571, %v1573
    %v1575 = vrot.slane %v1567, %v1574
    %v1577 = vunpack.c.l.s4 1983009808
    %v1578 = vunpack.c.0.s8 %v1577
    %v1579 = vlaneseq
    %v1580 = vshrl.u32 %v1579, 7
    %v1581 = vsub.s32 %v1578, %v1580
    %v1582 = vrot.slane %v1568, %v1581
    %v1583 = vcombine.high %v1575, %v1575
    %v1635 = vunpack.c.l.b16 %v1507
    %v1636 = vunpack.c.h.b16 %v1507
    %v1637 = vunpack.c.l.b16 %v1508
    %v1638 = vunpack.c.h.b16 %v1508
    %v1639 = vunpack.c.l.b16 %v1509
    %v1640 = vunpack.c.h.b16 %v1509
    %v1641 = vunpack.c.l.b16 %v1510
    %v1642 = vunpack.c.h.b16 %v1510
    %v1643 = vunpack.c.l.b16 %v1511
    %v1644 = vunpack.c.h.b16 %v1511
    %v1645 = vunpack.c.l.b16 %v1512
    %v1646 = vunpack.c.h.b16 %v1512
    %v1647 = vunpack.c.l.b16 %v1513
    %v1648 = vunpack.c.h.b16 %v1513
    %v1649 = vunpack.c.l.b16 %v1514
    %v1650 = vunpack.c.h.b16 %v1514
    %v1651 = vunpack.c.l.b16 %v1515
    %v1652 = vunpack.c.h.b16 %v1515
    %v1653 = vunpack.c.l.b16 %v1516
    %v1654 = vunpack.c.h.b16 %v1516
    %v1655 = vunpack.c.l.b16 %v1517
    %v1656 = vunpack.c.h.b16 %v1517
    %v1657 = vunpack.c.l.b16 %v1518
    %v1658 = vunpack.c.h.b16 %v1518
    %v1659 = vunpack.c.l.b16 %v1519
    %v1660 = vunpack.c.h.b16 %v1519
    %v1661 = vunpack.c.l.b16 %v1520
    %v1662 = vunpack.c.h.b16 %v1520
    %v1663 = vunpack.c.l.b16 %v1521
    %v1664 = vunpack.c.h.b16 %v1521
    %v1665 = vunpack.c.l.b16 %v1522
    %v1666 = vunpack.c.h.b16 %v1522
    %v1667 = vunpack.c.l.b16 %v1523
    %v1668 = vunpack.c.h.b16 %v1523
    %v1669 = vunpack.c.l.b16 %v1524
    %v1670 = vunpack.c.h.b16 %v1524
    %v1671 = vunpack.c.l.b16 %v1525
    %v1672 = vunpack.c.h.b16 %v1525
    %v1673 = vunpack.c.l.b16 %v1526
    %v1674 = vunpack.c.h.b16 %v1526
    %v1675 = vunpack.c.l.b16 %v1527
    %v1676 = vunpack.c.h.b16 %v1527
    %v1677 = vunpack.c.l.b16 %v1528
    %v1678 = vunpack.c.h.b16 %v1528
    %v1679 = vunpack.c.l.b16 %v1529
    %v1680 = vunpack.c.h.b16 %v1529
    %v1681 = vunpack.c.l.b16 %v1530
    %v1682 = vunpack.c.h.b16 %v1530
    %v1683 = vunpack.c.l.b16 %v1531
    %v1684 = vunpack.c.h.b16 %v1531
    %v1685 = vunpack.c.l.b16 %v1532
    %v1686 = vunpack.c.h.b16 %v1532
    %v1687 = vunpack.c.l.b16 %v1533
    %v1688 = vunpack.c.h.b16 %v1533
    %v1689 = vunpack.c.l.b16 %v1534
    %v1690 = vunpack.c.h.b16 %v1534
    %v1691 = vunpack.c.l.b16 %v1535
    %v1692 = vunpack.c.h.b16 %v1535
    %v1693 = vunpack.c.l.b16 %v1536
    %v1694 = vunpack.c.h.b16 %v1536
    %v1695 = vunpack.c.l.b16 %v1537
    %v1696 = vunpack.c.h.b16 %v1537
    %v1697 = vunpack.c.l.b16 %v1538
    %v1698 = vunpack.c.h.b16 %v1538
    %v1699 = vunpack.c.l.b16 %v1539
    %v1700 = vunpack.c.h.b16 %v1539
    %v1701 = vunpack.c.l.b16 %v1540
    %v1702 = vunpack.c.h.b16 %v1540
    %v1703 = vunpack.c.l.b16 %v1541
    %v1704 = vunpack.c.h.b16 %v1541
    %v1705 = vunpack.c.l.b16 %v1542
    %v1706 = vunpack.c.h.b16 %v1542
    %v1707 = vunpack.c.l.b16 %v1543
    %v1708 = vunpack.c.h.b16 %v1543
    %v1709 = vunpack.c.l.b16 %v1544
    %v1710 = vunpack.c.h.b16 %v1544
    %v1711 = vunpack.c.l.b16 %v1545
    %v1712 = vunpack.c.h.b16 %v1545
    %v1713 = vunpack.c.l.b16 %v1546
    %v1714 = vunpack.c.h.b16 %v1546
    %v1715 = vunpack.c.l.b16 %v1547
    %v1716 = vunpack.c.h.b16 %v1547
    %v1717 = vunpack.c.l.b16 %v1548
    %v1718 = vunpack.c.h.b16 %v1548
    %v1719 = vunpack.c.l.b16 %v1549
    %v1720 = vunpack.c.h.b16 %v1549
    %v1721 = vunpack.c.l.b16 %v1550
    %v1722 = vunpack.c.h.b16 %v1550
    %v1723 = vunpack.c.l.b16 %v1551
    %v1724 = vunpack.c.h.b16 %v1551
    %v1725 = vunpack.c.l.b16 %v1552
    %v1726 = vunpack.c.h.b16 %v1552
    %v1727 = vunpack.c.l.b16 %v1553
    %v1728 = vunpack.c.h.b16 %v1553
    %v1729 = vunpack.c.l.b16 %v1554
    %v1730 = vunpack.c.h.b16 %v1554
    %v1731 = vpack.c.b16 %v1637, %v1635
    %v1732 = vpack.c.b16 %v1638, %v1636
    %v1733 = vpack.c.b16 %v1641, %v1639
    %v1734 = vpack.c.b16 %v1642, %v1640
    %v1735 = vpack.c.b16 %v1645, %v1643
    %v1736 = vpack.c.b16 %v1646, %v1644
    %v1737 = vpack.c.b16 %v1649, %v1647
    %v1738 = vpack.c.b16 %v1650, %v1648
    %v1739 = vpack.c.b16 %v1653, %v1651
    %v1740 = vpack.c.b16 %v1654, %v1652
    %v1741 = vpack.c.b16 %v1657, %v1655
    %v1742 = vpack.c.b16 %v1658, %v1656
    %v1743 = vpack.c.b16 %v1661, %v1659
    %v1744 = vpack.c.b16 %v1662, %v1660
    %v1745 = vpack.c.b16 %v1665, %v1663
    %v1746 = vpack.c.b16 %v1666, %v1664
    %v1747 = vpack.c.b16 %v1669, %v1667
    %v1748 = vpack.c.b16 %v1670, %v1668
    %v1749 = vpack.c.b16 %v1673, %v1671
    %v1750 = vpack.c.b16 %v1674, %v1672
    %v1751 = vpack.c.b16 %v1677, %v1675
    %v1752 = vpack.c.b16 %v1678, %v1676
    %v1753 = vpack.c.b16 %v1681, %v1679
    %v1754 = vpack.c.b16 %v1682, %v1680
    %v1755 = vpack.c.b16 %v1685, %v1683
    %v1756 = vpack.c.b16 %v1686, %v1684
    %v1757 = vpack.c.b16 %v1689, %v1687
    %v1758 = vpack.c.b16 %v1690, %v1688
    %v1759 = vpack.c.b16 %v1693, %v1691
    %v1760 = vpack.c.b16 %v1694, %v1692
    %v1761 = vpack.c.b16 %v1697, %v1695
    %v1762 = vpack.c.b16 %v1698, %v1696
    %v1763 = vpack.c.b16 %v1701, %v1699
    %v1764 = vpack.c.b16 %v1702, %v1700
    %v1765 = vpack.c.b16 %v1705, %v1703
    %v1766 = vpack.c.b16 %v1706, %v1704
    %v1767 = vpack.c.b16 %v1709, %v1707
    %v1768 = vpack.c.b16 %v1710, %v1708
    %v1769 = vpack.c.b16 %v1713, %v1711
    %v1770 = vpack.c.b16 %v1714, %v1712
    %v1771 = vpack.c.b16 %v1717, %v1715
    %v1772 = vpack.c.b16 %v1718, %v1716
    %v1773 = vpack.c.b16 %v1721, %v1719
    %v1774 = vpack.c.b16 %v1722, %v1720
    %v1775 = vpack.c.b16 %v1725, %v1723
    %v1776 = vpack.c.b16 %v1726, %v1724
    %v1777 = vpack.c.b16 %v1729, %v1727
    %v1778 = vpack.c.b16 %v1730, %v1728
    %1827 = vmatprep.subr.bf16.mxu0 %v1732
    %1828 = vmatpush1.bf16.msra.mxu0 %v1731
    %1829 = vmatprep.subr.bf16.mxu0 %v1734
    %1830 = vmatpush1.bf16.msra.mxu0 %v1733
    %1831 = vmatprep.subr.bf16.mxu0 %v1736
    %1832 = vmatpush1.bf16.msra.mxu0 %v1735
    %1833 = vmatprep.subr.bf16.mxu0 %v1738
    %1834 = vmatpush1.bf16.msra.mxu0 %v1737
    %1835 = vmatprep.subr.bf16.mxu0 %v1740
    %1836 = vmatpush1.bf16.msra.mxu0 %v1739
    %1837 = vmatprep.subr.bf16.mxu0 %v1742
    %1838 = vmatpush1.bf16.msra.mxu0 %v1741
    %1839 = vmatprep.subr.bf16.mxu0 %v1744
    %1840 = vmatpush1.bf16.msra.mxu0 %v1743
    %1841 = vmatprep.subr.bf16.mxu0 %v1746
    %1842 = vmatpush1.bf16.msra.mxu0 %v1745
    %1843 = vmatprep.subr.bf16.mxu0 %v1748
    %1844 = vmatpush1.bf16.msra.mxu0 %v1747
    %1845 = vmatprep.subr.bf16.mxu0 %v1750
    %1846 = vmatpush1.bf16.msra.mxu0 %v1749
    %1847 = vmatprep.subr.bf16.mxu0 %v1752
    %1848 = vmatpush1.bf16.msra.mxu0 %v1751
    %1849 = vmatprep.subr.bf16.mxu0 %v1754
    %1850 = vmatpush1.bf16.msra.mxu0 %v1753
    %1851 = vmatprep.subr.bf16.mxu0 %v1756
    %1852 = vmatpush1.bf16.msra.mxu0 %v1755
    %1853 = vmatprep.subr.bf16.mxu0 %v1758
    %1854 = vmatpush1.bf16.msra.mxu0 %v1757
    %1855 = vmatprep.subr.bf16.mxu0 %v1760
    %1856 = vmatpush1.bf16.msra.mxu0 %v1759
    %1857 = vmatprep.subr.bf16.mxu0 %v1762
    %1858 = vmatpush1.bf16.msra.mxu0 %v1761
    %1859 = vmatprep.mubr.bf16.mxu0 %v1583
    %1860 = vmatmul.mubr.bf16.gmra.mrb[0].mxu0 %v1575
    %v1861 = vpop.f32.mrb[0].mxu0
    %v1862 = vadd.f32 %v1560, %v1861
    %v1863 = vpop.f32.mrb[0].mxu0
    %v1864 = vadd.f32 %v1564, %v1863
    %v1865 = vpop.f32.mrb[0].mxu0
    %v1866 = vpop.f32.mrb[0].mxu0
    %1867 = vdwg.mxu0
    %1868 = vmatprep.subr.bf16.mxu0 %v1764
    %1869 = vmatpush1.bf16.msra.mxu0 %v1763
    %1870 = vmatprep.subr.bf16.mxu0 %v1766
    %1871 = vmatpush1.bf16.msra.mxu0 %v1765
    %1872 = vmatprep.subr.bf16.mxu0 %v1768
    %1873 = vmatpush1.bf16.msra.mxu0 %v1767
    %1874 = vmatprep.subr.bf16.mxu0 %v1770
    %1875 = vmatpush1.bf16.msra.mxu0 %v1769
    %1876 = vmatprep.subr.bf16.mxu0 %v1772
    %1877 = vmatpush1.bf16.msra.mxu0 %v1771
    %1878 = vmatprep.subr.bf16.mxu0 %v1774
    %1879 = vmatpush1.bf16.msra.mxu0 %v1773
    %1880 = vmatprep.subr.bf16.mxu0 %v1776
    %1881 = vmatpush1.bf16.msra.mxu0 %v1775
    %1882 = vmatprep.subr.bf16.mxu0 %v1778
    %1883 = vmatpush1.bf16.msra.mxu0 %v1777
    %1884 = vmatprep.subr.bf16.mxu0 0
    %1885 = vmatpush1.bf16.msra.mxu0 0
    %1886 = vmatprep.subr.bf16.mxu0 0
    %1887 = vmatpush1.bf16.msra.mxu0 0
    %1888 = vmatprep.subr.bf16.mxu0 0
    %1889 = vmatpush1.bf16.msra.mxu0 0
    %1890 = vmatprep.subr.bf16.mxu0 0
    %1891 = vmatpush1.bf16.msra.mxu0 0
    %1892 = vmatprep.subr.bf16.mxu0 0
    %1893 = vmatpush1.bf16.msra.mxu0 0
    %1894 = vmatprep.subr.bf16.mxu0 0
    %1895 = vmatpush1.bf16.msra.mxu0 0
    %1896 = vmatprep.subr.bf16.mxu0 0
    %1897 = vmatpush1.bf16.msra.mxu0 0
    %1898 = vmatprep.subr.bf16.mxu0 0
    %1899 = vmatpush1.bf16.msra.mxu0 0
    %1900 = vmatprep.mubr.bf16.mxu0 0
    %1901 = vmatmul.mubr.bf16.gmra.mrb[0].mxu0 %v1582
    %v1902 = vpop.f32.mrb[0].mxu0
    %v1903 = vadd.f32 %v1862, %v1902
    %v1904 = vpop.f32.mrb[0].mxu0
    %v1905 = vadd.f32 %v1864, %v1904
    %v1906 = vpop.f32.mrb[0].mxu0
    %v1907 = vpop.f32.mrb[0].mxu0
    %1908 = vdwg.mxu0
    %v1909 = vmax.f32 %v1903, 0.0
    %v1910 = vmax.f32 %v1905, 0.0
    %v1913 = vcombine.low %v1909, %v1910
    %v1914 = vcombine.high %v1909, %v1910
    %v1916 = vunpack.c.l.s4 1983009808
    %v1917 = vunpack.c.0.s8 %v1916
    %v1918 = vlaneseq
    %v1919 = vshrl.u32 %v1918, 7
    %v1920 = vsub.s32 %v1917, %v1919
    %v1921 = vrot.slane %v1913, %v1920
    %v1923 = vunpack.c.l.s4 1983009808
    %v1924 = vunpack.c.0.s8 %v1923
    %v1925 = vlaneseq
    %v1926 = vshrl.u32 %v1925, 7
    %v1927 = vsub.s32 %v1924, %v1926
    %v1928 = vrot.slane %v1914, %v1927
    %v1929 = vcombine.high %v1921, %v1921
    %v1930 = vcombine.high %v1928, %v1928
    %v1935 = vrot.slane %v1921, 7
    %v1936 = vrot.slane %v1935, 2
    %v1937 = vrot.slane %v1929, 7
    %v1938 = vrot.slane %v1937, 2
    %v1939 = vrot.slane %v1928, 7
    %v1940 = vrot.slane %v1939, 2
    %v1941 = vrot.slane %v1930, 7
    %v1942 = vrot.slane %v1941, 2
    %v1947 = vmax.f32 %v1921, %v1936
    %v1948 = vmax.f32 %v1929, %v1938
    %v1949 = vmax.f32 %v1928, %v1940
    %v1950 = vmax.f32 %v1930, %v1942
    %v1953 = vlaneseq
    %v1954 = vshrl.u32 %v1953, 7
    %v1955 = vsub.s32 0, %v1954
    %v1956 = vrot.slane %v1947, %v1955
    %v1957 = vlaneseq
    %v1958 = vshrl.u32 %v1957, 7
    %v1959 = vsub.s32 2, %v1958
    %v1960 = vrot.slane %v1947, %v1959
    %v1961 = vlaneseq
    %v1962 = vshrl.u32 %v1961, 7
    %v1963 = vsub.s32 0, %v1962
    %v1964 = vrot.slane %v1949, %v1963
    %v1965 = vlaneseq
    %v1966 = vshrl.u32 %v1965, 7
    %v1967 = vsub.s32 2, %v1966
    %v1968 = vrot.slane %v1949, %v1967
    %v1969 = vsel %vm764, %v1964, %v1956
    %v1970 = vsel %vm764, %v1968, %v1960
    %v1975 = vlaneseq
    %v1976 = vshrl.u32 %v1975, 7
    %v1977 = vsub.s32 0, %v1976
    %v1978 = vrot.slane %v1948, %v1977
    %v1979 = vlaneseq
    %v1980 = vshrl.u32 %v1979, 7
    %v1981 = vsub.s32 2, %v1980
    %v1982 = vrot.slane %v1948, %v1981
    %v1983 = vlaneseq
    %v1984 = vshrl.u32 %v1983, 7
    %v1985 = vsub.s32 0, %v1984
    %v1986 = vrot.slane %v1950, %v1985
    %v1987 = vlaneseq
    %v1988 = vshrl.u32 %v1987, 7
    %v1989 = vsub.s32 2, %v1988
    %v1990 = vrot.slane %v1950, %v1989
    %v1991 = vsel %vm764, %v1986, %v1978
    %v1992 = vsel %vm764, %v1990, %v1982
    %v1995 = vpack.c.bf16 %v1969, %v1969
    %v1996 = vpack.c.bf16 %v1970, %v1970
    %v1997 = vpack.c.bf16 %v1991, %v1991
    %v1998 = vpack.c.bf16 %v1992, %v1992
    %v1999 = vld [vmem:[#allocation18] sm:$0xff]
    %v2000 = vld [vmem:[#allocation18 + $0x8] sm:$0xff]
    %v2001 = vld [vmem:[#allocation18 + $0x10] sm:$0xff]
    %v2002 = vld [vmem:[#allocation18 + $0x18] sm:$0xff]
    %v2003 = vld [vmem:[#allocation18 + $0x20] sm:$0xff]
    %v2004 = vld [vmem:[#allocation18 + $0x28] sm:$0xff]
    %v2005 = vld [vmem:[#allocation18 + $0x30] sm:$0xff]
    %v2006 = vld [vmem:[#allocation18 + $0x38] sm:$0xff]
    %v2007 = vld [vmem:[#allocation18 + $0x40] sm:$0xff]
    %v2008 = vld [vmem:[#allocation18 + $0x48] sm:$0xff]
    %v2009 = vld [vmem:[#allocation18 + $0x50] sm:$0xff]
    %v2010 = vld [vmem:[#allocation18 + $0x58] sm:$0xff]
    %v2011 = vld [vmem:[#allocation18 + $0x60] sm:$0xff]
    %v2012 = vld [vmem:[#allocation18 + $0x68] sm:$0xff]
    %v2013 = vld [vmem:[#allocation18 + $0x70] sm:$0xff]
    %v2014 = vld [vmem:[#allocation18 + $0x78] sm:$0xff]
    %v2015 = vld [vmem:[#allocation18 + $0x80] sm:$0xff]
    %v2016 = vld [vmem:[#allocation18 + $0x88] sm:$0xff]
    %v2017 = vld [vmem:[#allocation18 + $0x90] sm:$0xff]
    %v2018 = vld [vmem:[#allocation18 + $0x98] sm:$0xff]
    %v2019 = vld [vmem:[#allocation18 + $0xa0] sm:$0xff]
    %v2020 = vld [vmem:[#allocation18 + $0xa8] sm:$0xff]
    %v2021 = vld [vmem:[#allocation18 + $0xb0] sm:$0xff]
    %v2022 = vld [vmem:[#allocation18 + $0xb8] sm:$0xff]
    %v2023 = vld [vmem:[#allocation18 + $0xc0] sm:$0xff]
    %v2024 = vld [vmem:[#allocation18 + $0xc8] sm:$0xff]
    %v2025 = vld [vmem:[#allocation18 + $0xd0] sm:$0xff]
    %v2026 = vld [vmem:[#allocation18 + $0xd8] sm:$0xff]
    %v2027 = vld [vmem:[#allocation18 + $0xe0] sm:$0xff]
    %v2028 = vld [vmem:[#allocation18 + $0xe8] sm:$0xff]
    %v2029 = vld [vmem:[#allocation18 + $0xf0] sm:$0xff]
    %v2030 = vld [vmem:[#allocation18 + $0xf8] sm:$0xff]
    %v2031 = vld [vmem:[#allocation18 + $0x100] sm:$0xff]
    %v2032 = vld [vmem:[#allocation18 + $0x108] sm:$0xff]
    %v2033 = vld [vmem:[#allocation18 + $0x110] sm:$0xff]
    %v2034 = vld [vmem:[#allocation18 + $0x118] sm:$0xff]
    %v2035 = vld [vmem:[#allocation18 + $0x120] sm:$0xff]
    %v2036 = vld [vmem:[#allocation18 + $0x128] sm:$0xff]
    %v2037 = vld [vmem:[#allocation18 + $0x130] sm:$0xff]
    %v2038 = vld [vmem:[#allocation18 + $0x138] sm:$0xff]
    %v2039 = vld [vmem:[#allocation18 + $0x140] sm:$0xff]
    %v2040 = vld [vmem:[#allocation18 + $0x148] sm:$0xff]
    %v2041 = vld [vmem:[#allocation18 + $0x150] sm:$0xff]
    %v2042 = vld [vmem:[#allocation18 + $0x158] sm:$0xff]
    %v2043 = vld [vmem:[#allocation18 + $0x160] sm:$0xff]
    %v2044 = vld [vmem:[#allocation18 + $0x168] sm:$0xff]
    %v2045 = vld [vmem:[#allocation18 + $0x170] sm:$0xff]
    %v2046 = vld [vmem:[#allocation18 + $0x178] sm:$0xff]
    %v2047 = vld [vmem:[#allocation18 + $0x180] sm:$0xff]
    %v2048 = vld [vmem:[#allocation18 + $0x188] sm:$0xff]
    %v2049 = vld [vmem:[#allocation18 + $0x190] sm:$0xff]
    %v2050 = vld [vmem:[#allocation18 + $0x198] sm:$0xff]
    %v2051 = vld [vmem:[#allocation18 + $0x1a0] sm:$0xff]
    %v2052 = vld [vmem:[#allocation18 + $0x1a8] sm:$0xff]
    %v2053 = vld [vmem:[#allocation18 + $0x1b0] sm:$0xff]
    %v2054 = vld [vmem:[#allocation18 + $0x1b8] sm:$0xff]
    %v2055 = vld [vmem:[#allocation18 + $0x1c0] sm:$0xff]
    %v2056 = vld [vmem:[#allocation18 + $0x1c8] sm:$0xff]
    %v2057 = vld [vmem:[#allocation18 + $0x1d0] sm:$0xff]
    %v2058 = vld [vmem:[#allocation18 + $0x1d8] sm:$0xff]
    %v2059 = vld [vmem:[#allocation18 + $0x1e0] sm:$0xff]
    %v2060 = vld [vmem:[#allocation18 + $0x1e8] sm:$0xff]
    %v2061 = vld [vmem:[#allocation18 + $0x1f0] sm:$0xff]
    %v2062 = vld [vmem:[#allocation18 + $0x1f8] sm:$0xff]
    %v2063 = vld [vmem:[#allocation18 + $0x200] sm:$0xff]
    %v2064 = vld [vmem:[#allocation18 + $0x208] sm:$0xff]
    %v2065 = vld [vmem:[#allocation18 + $0x210] sm:$0xff]
    %v2066 = vld [vmem:[#allocation18 + $0x218] sm:$0xff]
    %v2067 = vld [vmem:[#allocation18 + $0x220] sm:$0xff]
    %v2068 = vld [vmem:[#allocation18 + $0x228] sm:$0xff]
    %v2069 = vld [vmem:[#allocation18 + $0x230] sm:$0xff]
    %v2070 = vld [vmem:[#allocation18 + $0x238] sm:$0xff]
    %v2071 = vld [vmem:[#allocation18 + $0x240] sm:$0xff]
    %v2072 = vld [vmem:[#allocation18 + $0x248] sm:$0xff]
    %v2073 = vld [vmem:[#allocation18 + $0x250] sm:$0xff]
    %v2074 = vld [vmem:[#allocation18 + $0x258] sm:$0xff]
    %v2075 = vld [vmem:[#allocation18 + $0x260] sm:$0xff]
    %v2076 = vld [vmem:[#allocation18 + $0x268] sm:$0xff]
    %v2077 = vld [vmem:[#allocation18 + $0x270] sm:$0xff]
    %v2078 = vld [vmem:[#allocation18 + $0x278] sm:$0xff]
    %v2079 = vld [vmem:[#allocation18 + $0x280] sm:$0xff]
    %v2080 = vld [vmem:[#allocation18 + $0x288] sm:$0xff]
    %v2081 = vld [vmem:[#allocation18 + $0x290] sm:$0xff]
    %v2082 = vld [vmem:[#allocation18 + $0x298] sm:$0xff]
    %v2083 = vld [vmem:[#allocation18 + $0x2a0] sm:$0xff]
    %v2084 = vld [vmem:[#allocation18 + $0x2a8] sm:$0xff]
    %v2085 = vld [vmem:[#allocation18 + $0x2b0] sm:$0xff]
    %v2086 = vld [vmem:[#allocation18 + $0x2b8] sm:$0xff]
    %v2087 = vld [vmem:[#allocation18 + $0x2c0] sm:$0xff]
    %v2088 = vld [vmem:[#allocation18 + $0x2c8] sm:$0xff]
    %v2089 = vld [vmem:[#allocation18 + $0x2d0] sm:$0xff]
    %v2090 = vld [vmem:[#allocation18 + $0x2d8] sm:$0xff]
    %v2091 = vld [vmem:[#allocation18 + $0x2e0] sm:$0xff]
    %v2092 = vld [vmem:[#allocation18 + $0x2e8] sm:$0xff]
    %v2093 = vld [vmem:[#allocation18 + $0x2f0] sm:$0xff]
    %v2094 = vld [vmem:[#allocation18 + $0x2f8] sm:$0xff]
    %v2095 = vld [vmem:[#allocation18 + $0x300] sm:$0xff]
    %v2096 = vld [vmem:[#allocation18 + $0x308] sm:$0xff]
    %v2097 = vld [vmem:[#allocation18 + $0x310] sm:$0xff]
    %v2098 = vld [vmem:[#allocation18 + $0x318] sm:$0xff]
    %v2099 = vld [vmem:[#allocation18 + $0x320] sm:$0xff]
    %v2100 = vld [vmem:[#allocation18 + $0x328] sm:$0xff]
    %v2101 = vld [vmem:[#allocation18 + $0x330] sm:$0xff]
    %v2102 = vld [vmem:[#allocation18 + $0x338] sm:$0xff]
    %v2103 = vld [vmem:[#allocation18 + $0x340] sm:$0xff]
    %v2104 = vld [vmem:[#allocation18 + $0x348] sm:$0xff]
    %v2105 = vld [vmem:[#allocation18 + $0x350] sm:$0xff]
    %v2106 = vld [vmem:[#allocation18 + $0x358] sm:$0xff]
    %v2107 = vld [vmem:[#allocation18 + $0x360] sm:$0xff]
    %v2108 = vld [vmem:[#allocation18 + $0x368] sm:$0xff]
    %v2109 = vld [vmem:[#allocation18 + $0x370] sm:$0xff]
    %v2110 = vld [vmem:[#allocation18 + $0x378] sm:$0xff]
    %v2111 = vld [vmem:[#allocation18 + $0x380] sm:$0xff]
    %v2112 = vld [vmem:[#allocation18 + $0x388] sm:$0xff]
    %v2113 = vld [vmem:[#allocation18 + $0x390] sm:$0xff]
    %v2114 = vld [vmem:[#allocation18 + $0x398] sm:$0xff]
    %v2115 = vld [vmem:[#allocation18 + $0x3a0] sm:$0xff]
    %v2116 = vld [vmem:[#allocation18 + $0x3a8] sm:$0xff]
    %v2117 = vld [vmem:[#allocation18 + $0x3b0] sm:$0xff]
    %v2118 = vld [vmem:[#allocation18 + $0x3b8] sm:$0xff]
    %v2119 = vld [vmem:[#allocation18 + $0x3c0] sm:$0xff]
    %v2120 = vld [vmem:[#allocation18 + $0x3c8] sm:$0xff]
    %v2121 = vld [vmem:[#allocation18 + $0x3d0] sm:$0xff]
    %v2122 = vld [vmem:[#allocation18 + $0x3d8] sm:$0xff]
    %v2123 = vld [vmem:[#allocation18 + $0x3e0] sm:$0xff]
    %v2124 = vld [vmem:[#allocation18 + $0x3e8] sm:$0xff]
    %v2125 = vld [vmem:[#allocation18 + $0x3f0] sm:$0xff]
    %v2126 = vld [vmem:[#allocation18 + $0x3f8] sm:$0xff]
    %v2127 = vld [vmem:[#allocation20] sm:$0xf]
    %v2129 = vlaneseq
    %v2130 = vshrl.u32 %v2129, 7
    %v2131 = vsub.s32 0, %v2130
    %v2132 = vrot.slane %v2127, %v2131
    %v2133 = vlaneseq
    %v2134 = vshrl.u32 %v2133, 7
    %v2135 = vsub.s32 1, %v2134
    %v2136 = vrot.slane %v2127, %v2135
    %v2137 = vlaneseq
    %v2138 = vshrl.u32 %v2137, 7
    %v2139 = vsub.s32 2, %v2138
    %v2140 = vrot.slane %v2127, %v2139
    %v2141 = vlaneseq
    %v2142 = vshrl.u32 %v2141, 7
    %v2143 = vsub.s32 3, %v2142
    %v2144 = vrot.slane %v2127, %v2143
    %v2277 = vunpack.c.l.b16 %v1999
    %v2278 = vunpack.c.h.b16 %v1999
    %v2279 = vunpack.c.l.b16 %v2000
    %v2280 = vunpack.c.h.b16 %v2000
    %v2281 = vunpack.c.l.b16 %v2001
    %v2282 = vunpack.c.h.b16 %v2001
    %v2283 = vunpack.c.l.b16 %v2002
    %v2284 = vunpack.c.h.b16 %v2002
    %v2285 = vunpack.c.l.b16 %v2003
    %v2286 = vunpack.c.h.b16 %v2003
    %v2287 = vunpack.c.l.b16 %v2004
    %v2288 = vunpack.c.h.b16 %v2004
    %v2289 = vunpack.c.l.b16 %v2005
    %v2290 = vunpack.c.h.b16 %v2005
    %v2291 = vunpack.c.l.b16 %v2006
    %v2292 = vunpack.c.h.b16 %v2006
    %v2293 = vunpack.c.l.b16 %v2007
    %v2294 = vunpack.c.h.b16 %v2007
    %v2295 = vunpack.c.l.b16 %v2008
    %v2296 = vunpack.c.h.b16 %v2008
    %v2297 = vunpack.c.l.b16 %v2009
    %v2298 = vunpack.c.h.b16 %v2009
    %v2299 = vunpack.c.l.b16 %v2010
    %v2300 = vunpack.c.h.b16 %v2010
    %v2301 = vunpack.c.l.b16 %v2011
    %v2302 = vunpack.c.h.b16 %v2011
    %v2303 = vunpack.c.l.b16 %v2012
    %v2304 = vunpack.c.h.b16 %v2012
    %v2305 = vunpack.c.l.b16 %v2013
    %v2306 = vunpack.c.h.b16 %v2013
    %v2307 = vunpack.c.l.b16 %v2014
    %v2308 = vunpack.c.h.b16 %v2014
    %v2309 = vunpack.c.l.b16 %v2015
    %v2310 = vunpack.c.h.b16 %v2015
    %v2311 = vunpack.c.l.b16 %v2016
    %v2312 = vunpack.c.h.b16 %v2016
    %v2313 = vunpack.c.l.b16 %v2017
    %v2314 = vunpack.c.h.b16 %v2017
    %v2315 = vunpack.c.l.b16 %v2018
    %v2316 = vunpack.c.h.b16 %v2018
    %v2317 = vunpack.c.l.b16 %v2019
    %v2318 = vunpack.c.h.b16 %v2019
    %v2319 = vunpack.c.l.b16 %v2020
    %v2320 = vunpack.c.h.b16 %v2020
    %v2321 = vunpack.c.l.b16 %v2021
    %v2322 = vunpack.c.h.b16 %v2021
    %v2323 = vunpack.c.l.b16 %v2022
    %v2324 = vunpack.c.h.b16 %v2022
    %v2325 = vunpack.c.l.b16 %v2023
    %v2326 = vunpack.c.h.b16 %v2023
    %v2327 = vunpack.c.l.b16 %v2024
    %v2328 = vunpack.c.h.b16 %v2024
    %v2329 = vunpack.c.l.b16 %v2025
    %v2330 = vunpack.c.h.b16 %v2025
    %v2331 = vunpack.c.l.b16 %v2026
    %v2332 = vunpack.c.h.b16 %v2026
    %v2333 = vunpack.c.l.b16 %v2027
    %v2334 = vunpack.c.h.b16 %v2027
    %v2335 = vunpack.c.l.b16 %v2028
    %v2336 = vunpack.c.h.b16 %v2028
    %v2337 = vunpack.c.l.b16 %v2029
    %v2338 = vunpack.c.h.b16 %v2029
    %v2339 = vunpack.c.l.b16 %v2030
    %v2340 = vunpack.c.h.b16 %v2030
    %v2341 = vunpack.c.l.b16 %v2031
    %v2342 = vunpack.c.h.b16 %v2031
    %v2343 = vunpack.c.l.b16 %v2032
    %v2344 = vunpack.c.h.b16 %v2032
    %v2345 = vunpack.c.l.b16 %v2033
    %v2346 = vunpack.c.h.b16 %v2033
    %v2347 = vunpack.c.l.b16 %v2034
    %v2348 = vunpack.c.h.b16 %v2034
    %v2349 = vunpack.c.l.b16 %v2035
    %v2350 = vunpack.c.h.b16 %v2035
    %v2351 = vunpack.c.l.b16 %v2036
    %v2352 = vunpack.c.h.b16 %v2036
    %v2353 = vunpack.c.l.b16 %v2037
    %v2354 = vunpack.c.h.b16 %v2037
    %v2355 = vunpack.c.l.b16 %v2038
    %v2356 = vunpack.c.h.b16 %v2038
    %v2357 = vunpack.c.l.b16 %v2039
    %v2358 = vunpack.c.h.b16 %v2039
    %v2359 = vunpack.c.l.b16 %v2040
    %v2360 = vunpack.c.h.b16 %v2040
    %v2361 = vunpack.c.l.b16 %v2041
    %v2362 = vunpack.c.h.b16 %v2041
    %v2363 = vunpack.c.l.b16 %v2042
    %v2364 = vunpack.c.h.b16 %v2042
    %v2365 = vunpack.c.l.b16 %v2043
    %v2366 = vunpack.c.h.b16 %v2043
    %v2367 = vunpack.c.l.b16 %v2044
    %v2368 = vunpack.c.h.b16 %v2044
    %v2369 = vunpack.c.l.b16 %v2045
    %v2370 = vunpack.c.h.b16 %v2045
    %v2371 = vunpack.c.l.b16 %v2046
    %v2372 = vunpack.c.h.b16 %v2046
    %v2373 = vunpack.c.l.b16 %v2047
    %v2374 = vunpack.c.h.b16 %v2047
    %v2375 = vunpack.c.l.b16 %v2048
    %v2376 = vunpack.c.h.b16 %v2048
    %v2377 = vunpack.c.l.b16 %v2049
    %v2378 = vunpack.c.h.b16 %v2049
    %v2379 = vunpack.c.l.b16 %v2050
    %v2380 = vunpack.c.h.b16 %v2050
    %v2381 = vunpack.c.l.b16 %v2051
    %v2382 = vunpack.c.h.b16 %v2051
    %v2383 = vunpack.c.l.b16 %v2052
    %v2384 = vunpack.c.h.b16 %v2052
    %v2385 = vunpack.c.l.b16 %v2053
    %v2386 = vunpack.c.h.b16 %v2053
    %v2387 = vunpack.c.l.b16 %v2054
    %v2388 = vunpack.c.h.b16 %v2054
    %v2389 = vunpack.c.l.b16 %v2055
    %v2390 = vunpack.c.h.b16 %v2055
    %v2391 = vunpack.c.l.b16 %v2056
    %v2392 = vunpack.c.h.b16 %v2056
    %v2393 = vunpack.c.l.b16 %v2057
    %v2394 = vunpack.c.h.b16 %v2057
    %v2395 = vunpack.c.l.b16 %v2058
    %v2396 = vunpack.c.h.b16 %v2058
    %v2397 = vunpack.c.l.b16 %v2059
    %v2398 = vunpack.c.h.b16 %v2059
    %v2399 = vunpack.c.l.b16 %v2060
    %v2400 = vunpack.c.h.b16 %v2060
    %v2401 = vunpack.c.l.b16 %v2061
    %v2402 = vunpack.c.h.b16 %v2061
    %v2403 = vunpack.c.l.b16 %v2062
    %v2404 = vunpack.c.h.b16 %v2062
    %v2405 = vunpack.c.l.b16 %v2063
    %v2406 = vunpack.c.h.b16 %v2063
    %v2407 = vunpack.c.l.b16 %v2064
    %v2408 = vunpack.c.h.b16 %v2064
    %v2409 = vunpack.c.l.b16 %v2065
    %v2410 = vunpack.c.h.b16 %v2065
    %v2411 = vunpack.c.l.b16 %v2066
    %v2412 = vunpack.c.h.b16 %v2066
    %v2413 = vunpack.c.l.b16 %v2067
    %v2414 = vunpack.c.h.b16 %v2067
    %v2415 = vunpack.c.l.b16 %v2068
    %v2416 = vunpack.c.h.b16 %v2068
    %v2417 = vunpack.c.l.b16 %v2069
    %v2418 = vunpack.c.h.b16 %v2069
    %v2419 = vunpack.c.l.b16 %v2070
    %v2420 = vunpack.c.h.b16 %v2070
    %v2421 = vunpack.c.l.b16 %v2071
    %v2422 = vunpack.c.h.b16 %v2071
    %v2423 = vunpack.c.l.b16 %v2072
    %v2424 = vunpack.c.h.b16 %v2072
    %v2425 = vunpack.c.l.b16 %v2073
    %v2426 = vunpack.c.h.b16 %v2073
    %v2427 = vunpack.c.l.b16 %v2074
    %v2428 = vunpack.c.h.b16 %v2074
    %v2429 = vunpack.c.l.b16 %v2075
    %v2430 = vunpack.c.h.b16 %v2075
    %v2431 = vunpack.c.l.b16 %v2076
    %v2432 = vunpack.c.h.b16 %v2076
    %v2433 = vunpack.c.l.b16 %v2077
    %v2434 = vunpack.c.h.b16 %v2077
    %v2435 = vunpack.c.l.b16 %v2078
    %v2436 = vunpack.c.h.b16 %v2078
    %v2437 = vunpack.c.l.b16 %v2079
    %v2438 = vunpack.c.h.b16 %v2079
    %v2439 = vunpack.c.l.b16 %v2080
    %v2440 = vunpack.c.h.b16 %v2080
    %v2441 = vunpack.c.l.b16 %v2081
    %v2442 = vunpack.c.h.b16 %v2081
    %v2443 = vunpack.c.l.b16 %v2082
    %v2444 = vunpack.c.h.b16 %v2082
    %v2445 = vunpack.c.l.b16 %v2083
    %v2446 = vunpack.c.h.b16 %v2083
    %v2447 = vunpack.c.l.b16 %v2084
    %v2448 = vunpack.c.h.b16 %v2084
    %v2449 = vunpack.c.l.b16 %v2085
    %v2450 = vunpack.c.h.b16 %v2085
    %v2451 = vunpack.c.l.b16 %v2086
    %v2452 = vunpack.c.h.b16 %v2086
    %v2453 = vunpack.c.l.b16 %v2087
    %v2454 = vunpack.c.h.b16 %v2087
    %v2455 = vunpack.c.l.b16 %v2088
    %v2456 = vunpack.c.h.b16 %v2088
    %v2457 = vunpack.c.l.b16 %v2089
    %v2458 = vunpack.c.h.b16 %v2089
    %v2459 = vunpack.c.l.b16 %v2090
    %v2460 = vunpack.c.h.b16 %v2090
    %v2461 = vunpack.c.l.b16 %v2091
    %v2462 = vunpack.c.h.b16 %v2091
    %v2463 = vunpack.c.l.b16 %v2092
    %v2464 = vunpack.c.h.b16 %v2092
    %v2465 = vunpack.c.l.b16 %v2093
    %v2466 = vunpack.c.h.b16 %v2093
    %v2467 = vunpack.c.l.b16 %v2094
    %v2468 = vunpack.c.h.b16 %v2094
    %v2469 = vunpack.c.l.b16 %v2095
    %v2470 = vunpack.c.h.b16 %v2095
    %v2471 = vunpack.c.l.b16 %v2096
    %v2472 = vunpack.c.h.b16 %v2096
    %v2473 = vunpack.c.l.b16 %v2097
    %v2474 = vunpack.c.h.b16 %v2097
    %v2475 = vunpack.c.l.b16 %v2098
    %v2476 = vunpack.c.h.b16 %v2098
    %v2477 = vunpack.c.l.b16 %v2099
    %v2478 = vunpack.c.h.b16 %v2099
    %v2479 = vunpack.c.l.b16 %v2100
    %v2480 = vunpack.c.h.b16 %v2100
    %v2481 = vunpack.c.l.b16 %v2101
    %v2482 = vunpack.c.h.b16 %v2101
    %v2483 = vunpack.c.l.b16 %v2102
    %v2484 = vunpack.c.h.b16 %v2102
    %v2485 = vunpack.c.l.b16 %v2103
    %v2486 = vunpack.c.h.b16 %v2103
    %v2487 = vunpack.c.l.b16 %v2104
    %v2488 = vunpack.c.h.b16 %v2104
    %v2489 = vunpack.c.l.b16 %v2105
    %v2490 = vunpack.c.h.b16 %v2105
    %v2491 = vunpack.c.l.b16 %v2106
    %v2492 = vunpack.c.h.b16 %v2106
    %v2493 = vunpack.c.l.b16 %v2107
    %v2494 = vunpack.c.h.b16 %v2107
    %v2495 = vunpack.c.l.b16 %v2108
    %v2496 = vunpack.c.h.b16 %v2108
    %v2497 = vunpack.c.l.b16 %v2109
    %v2498 = vunpack.c.h.b16 %v2109
    %v2499 = vunpack.c.l.b16 %v2110
    %v2500 = vunpack.c.h.b16 %v2110
    %v2501 = vunpack.c.l.b16 %v2111
    %v2502 = vunpack.c.h.b16 %v2111
    %v2503 = vunpack.c.l.b16 %v2112
    %v2504 = vunpack.c.h.b16 %v2112
    %v2505 = vunpack.c.l.b16 %v2113
    %v2506 = vunpack.c.h.b16 %v2113
    %v2507 = vunpack.c.l.b16 %v2114
    %v2508 = vunpack.c.h.b16 %v2114
    %v2509 = vunpack.c.l.b16 %v2115
    %v2510 = vunpack.c.h.b16 %v2115
    %v2511 = vunpack.c.l.b16 %v2116
    %v2512 = vunpack.c.h.b16 %v2116
    %v2513 = vunpack.c.l.b16 %v2117
    %v2514 = vunpack.c.h.b16 %v2117
    %v2515 = vunpack.c.l.b16 %v2118
    %v2516 = vunpack.c.h.b16 %v2118
    %v2517 = vunpack.c.l.b16 %v2119
    %v2518 = vunpack.c.h.b16 %v2119
    %v2519 = vunpack.c.l.b16 %v2120
    %v2520 = vunpack.c.h.b16 %v2120
    %v2521 = vunpack.c.l.b16 %v2121
    %v2522 = vunpack.c.h.b16 %v2121
    %v2523 = vunpack.c.l.b16 %v2122
    %v2524 = vunpack.c.h.b16 %v2122
    %v2525 = vunpack.c.l.b16 %v2123
    %v2526 = vunpack.c.h.b16 %v2123
    %v2527 = vunpack.c.l.b16 %v2124
    %v2528 = vunpack.c.h.b16 %v2124
    %v2529 = vunpack.c.l.b16 %v2125
    %v2530 = vunpack.c.h.b16 %v2125
    %v2531 = vunpack.c.l.b16 %v2126
    %v2532 = vunpack.c.h.b16 %v2126
    %v2533 = vpack.c.b16 %v2281, %v2277
    %v2534 = vpack.c.b16 %v2282, %v2278
    %v2535 = vpack.c.b16 %v2283, %v2279
    %v2536 = vpack.c.b16 %v2284, %v2280
    %v2537 = vpack.c.b16 %v2289, %v2285
    %v2538 = vpack.c.b16 %v2290, %v2286
    %v2539 = vpack.c.b16 %v2291, %v2287
    %v2540 = vpack.c.b16 %v2292, %v2288
    %v2541 = vpack.c.b16 %v2297, %v2293
    %v2542 = vpack.c.b16 %v2298, %v2294
    %v2543 = vpack.c.b16 %v2299, %v2295
    %v2544 = vpack.c.b16 %v2300, %v2296
    %v2545 = vpack.c.b16 %v2305, %v2301
    %v2546 = vpack.c.b16 %v2306, %v2302
    %v2547 = vpack.c.b16 %v2307, %v2303
    %v2548 = vpack.c.b16 %v2308, %v2304
    %v2549 = vpack.c.b16 %v2313, %v2309
    %v2550 = vpack.c.b16 %v2314, %v2310
    %v2551 = vpack.c.b16 %v2315, %v2311
    %v2552 = vpack.c.b16 %v2316, %v2312
    %v2553 = vpack.c.b16 %v2321, %v2317
    %v2554 = vpack.c.b16 %v2322, %v2318
    %v2555 = vpack.c.b16 %v2323, %v2319
    %v2556 = vpack.c.b16 %v2324, %v2320
    %v2557 = vpack.c.b16 %v2329, %v2325
    %v2558 = vpack.c.b16 %v2330, %v2326
    %v2559 = vpack.c.b16 %v2331, %v2327
    %v2560 = vpack.c.b16 %v2332, %v2328
    %v2561 = vpack.c.b16 %v2337, %v2333
    %v2562 = vpack.c.b16 %v2338, %v2334
    %v2563 = vpack.c.b16 %v2339, %v2335
    %v2564 = vpack.c.b16 %v2340, %v2336
    %v2565 = vpack.c.b16 %v2345, %v2341
    %v2566 = vpack.c.b16 %v2346, %v2342
    %v2567 = vpack.c.b16 %v2347, %v2343
    %v2568 = vpack.c.b16 %v2348, %v2344
    %v2569 = vpack.c.b16 %v2353, %v2349
    %v2570 = vpack.c.b16 %v2354, %v2350
    %v2571 = vpack.c.b16 %v2355, %v2351
    %v2572 = vpack.c.b16 %v2356, %v2352
    %v2573 = vpack.c.b16 %v2361, %v2357
    %v2574 = vpack.c.b16 %v2362, %v2358
    %v2575 = vpack.c.b16 %v2363, %v2359
    %v2576 = vpack.c.b16 %v2364, %v2360
    %v2577 = vpack.c.b16 %v2369, %v2365
    %v2578 = vpack.c.b16 %v2370, %v2366
    %v2579 = vpack.c.b16 %v2371, %v2367
    %v2580 = vpack.c.b16 %v2372, %v2368
    %v2581 = vpack.c.b16 %v2377, %v2373
    %v2582 = vpack.c.b16 %v2378, %v2374
    %v2583 = vpack.c.b16 %v2379, %v2375
    %v2584 = vpack.c.b16 %v2380, %v2376
    %v2585 = vpack.c.b16 %v2385, %v2381
    %v2586 = vpack.c.b16 %v2386, %v2382
    %v2587 = vpack.c.b16 %v2387, %v2383
    %v2588 = vpack.c.b16 %v2388, %v2384
    %v2589 = vpack.c.b16 %v2393, %v2389
    %v2590 = vpack.c.b16 %v2394, %v2390
    %v2591 = vpack.c.b16 %v2395, %v2391
    %v2592 = vpack.c.b16 %v2396, %v2392
    %v2593 = vpack.c.b16 %v2401, %v2397
    %v2594 = vpack.c.b16 %v2402, %v2398
    %v2595 = vpack.c.b16 %v2403, %v2399
    %v2596 = vpack.c.b16 %v2404, %v2400
    %v2597 = vpack.c.b16 %v2409, %v2405
    %v2598 = vpack.c.b16 %v2410, %v2406
    %v2599 = vpack.c.b16 %v2411, %v2407
    %v2600 = vpack.c.b16 %v2412, %v2408
    %v2601 = vpack.c.b16 %v2417, %v2413
    %v2602 = vpack.c.b16 %v2418, %v2414
    %v2603 = vpack.c.b16 %v2419, %v2415
    %v2604 = vpack.c.b16 %v2420, %v2416
    %v2605 = vpack.c.b16 %v2425, %v2421
    %v2606 = vpack.c.b16 %v2426, %v2422
    %v2607 = vpack.c.b16 %v2427, %v2423
    %v2608 = vpack.c.b16 %v2428, %v2424
    %v2609 = vpack.c.b16 %v2433, %v2429
    %v2610 = vpack.c.b16 %v2434, %v2430
    %v2611 = vpack.c.b16 %v2435, %v2431
    %v2612 = vpack.c.b16 %v2436, %v2432
    %v2613 = vpack.c.b16 %v2441, %v2437
    %v2614 = vpack.c.b16 %v2442, %v2438
    %v2615 = vpack.c.b16 %v2443, %v2439
    %v2616 = vpack.c.b16 %v2444, %v2440
    %v2617 = vpack.c.b16 %v2449, %v2445
    %v2618 = vpack.c.b16 %v2450, %v2446
    %v2619 = vpack.c.b16 %v2451, %v2447
    %v2620 = vpack.c.b16 %v2452, %v2448
    %v2621 = vpack.c.b16 %v2457, %v2453
    %v2622 = vpack.c.b16 %v2458, %v2454
    %v2623 = vpack.c.b16 %v2459, %v2455
    %v2624 = vpack.c.b16 %v2460, %v2456
    %v2625 = vpack.c.b16 %v2465, %v2461
    %v2626 = vpack.c.b16 %v2466, %v2462
    %v2627 = vpack.c.b16 %v2467, %v2463
    %v2628 = vpack.c.b16 %v2468, %v2464
    %v2629 = vpack.c.b16 %v2473, %v2469
    %v2630 = vpack.c.b16 %v2474, %v2470
    %v2631 = vpack.c.b16 %v2475, %v2471
    %v2632 = vpack.c.b16 %v2476, %v2472
    %v2633 = vpack.c.b16 %v2481, %v2477
    %v2634 = vpack.c.b16 %v2482, %v2478
    %v2635 = vpack.c.b16 %v2483, %v2479
    %v2636 = vpack.c.b16 %v2484, %v2480
    %v2637 = vpack.c.b16 %v2489, %v2485
    %v2638 = vpack.c.b16 %v2490, %v2486
    %v2639 = vpack.c.b16 %v2491, %v2487
    %v2640 = vpack.c.b16 %v2492, %v2488
    %v2641 = vpack.c.b16 %v2497, %v2493
    %v2642 = vpack.c.b16 %v2498, %v2494
    %v2643 = vpack.c.b16 %v2499, %v2495
    %v2644 = vpack.c.b16 %v2500, %v2496
    %v2645 = vpack.c.b16 %v2505, %v2501
    %v2646 = vpack.c.b16 %v2506, %v2502
    %v2647 = vpack.c.b16 %v2507, %v2503
    %v2648 = vpack.c.b16 %v2508, %v2504
    %v2649 = vpack.c.b16 %v2513, %v2509
    %v2650 = vpack.c.b16 %v2514, %v2510
    %v2651 = vpack.c.b16 %v2515, %v2511
    %v2652 = vpack.c.b16 %v2516, %v2512
    %v2653 = vpack.c.b16 %v2521, %v2517
    %v2654 = vpack.c.b16 %v2522, %v2518
    %v2655 = vpack.c.b16 %v2523, %v2519
    %v2656 = vpack.c.b16 %v2524, %v2520
    %v2657 = vpack.c.b16 %v2529, %v2525
    %v2658 = vpack.c.b16 %v2530, %v2526
    %v2659 = vpack.c.b16 %v2531, %v2527
    %v2660 = vpack.c.b16 %v2532, %v2528
    %2789 = vmatprep.subr.bf16.mxu0 %v2534
    %2790 = vmatpush1.bf16.msra.mxu0 %v2533
    %2791 = vmatprep.subr.bf16.mxu0 %v2538
    %2792 = vmatpush1.bf16.msra.mxu0 %v2537
    %2793 = vmatprep.subr.bf16.mxu0 %v2542
    %2794 = vmatpush1.bf16.msra.mxu0 %v2541
    %2795 = vmatprep.subr.bf16.mxu0 %v2546
    %2796 = vmatpush1.bf16.msra.mxu0 %v2545
    %2797 = vmatprep.subr.bf16.mxu0 %v2550
    %2798 = vmatpush1.bf16.msra.mxu0 %v2549
    %2799 = vmatprep.subr.bf16.mxu0 %v2554
    %2800 = vmatpush1.bf16.msra.mxu0 %v2553
    %2801 = vmatprep.subr.bf16.mxu0 %v2558
    %2802 = vmatpush1.bf16.msra.mxu0 %v2557
    %2803 = vmatprep.subr.bf16.mxu0 %v2562
    %2804 = vmatpush1.bf16.msra.mxu0 %v2561
    %2805 = vmatprep.subr.bf16.mxu0 %v2566
    %2806 = vmatpush1.bf16.msra.mxu0 %v2565
    %2807 = vmatprep.subr.bf16.mxu0 %v2570
    %2808 = vmatpush1.bf16.msra.mxu0 %v2569
    %2809 = vmatprep.subr.bf16.mxu0 %v2574
    %2810 = vmatpush1.bf16.msra.mxu0 %v2573
    %2811 = vmatprep.subr.bf16.mxu0 %v2578
    %2812 = vmatpush1.bf16.msra.mxu0 %v2577
    %2813 = vmatprep.subr.bf16.mxu0 %v2582
    %2814 = vmatpush1.bf16.msra.mxu0 %v2581
    %2815 = vmatprep.subr.bf16.mxu0 %v2586
    %2816 = vmatpush1.bf16.msra.mxu0 %v2585
    %2817 = vmatprep.subr.bf16.mxu0 %v2590
    %2818 = vmatpush1.bf16.msra.mxu0 %v2589
    %2819 = vmatprep.subr.bf16.mxu0 %v2594
    %2820 = vmatpush1.bf16.msra.mxu0 %v2593
    %2821 = vmatprep.mubr.bf16.mxu0 %v1996
    %2822 = vmatmul.mubr.bf16.gmra.mrb[0].mxu0 %v1995
    %v2823 = vpop.f32.mrb[0].mxu0
    %v2824 = vadd.f32 %v2132, %v2823
    %v2825 = vpop.f32.mrb[0].mxu0
    %v2826 = vadd.f32 %v2136, %v2825
    %v2827 = vpop.f32.mrb[0].mxu0
    %v2828 = vpop.f32.mrb[0].mxu0
    %2829 = vdwg.mxu0
    %2830 = vmatprep.subr.bf16.mxu0 %v2598
    %2831 = vmatpush1.bf16.msra.mxu0 %v2597
    %2832 = vmatprep.subr.bf16.mxu0 %v2602
    %2833 = vmatpush1.bf16.msra.mxu0 %v2601
    %2834 = vmatprep.subr.bf16.mxu0 %v2606
    %2835 = vmatpush1.bf16.msra.mxu0 %v2605
    %2836 = vmatprep.subr.bf16.mxu0 %v2610
    %2837 = vmatpush1.bf16.msra.mxu0 %v2609
    %2838 = vmatprep.subr.bf16.mxu0 %v2614
    %2839 = vmatpush1.bf16.msra.mxu0 %v2613
    %2840 = vmatprep.subr.bf16.mxu0 %v2618
    %2841 = vmatpush1.bf16.msra.mxu0 %v2617
    %2842 = vmatprep.subr.bf16.mxu0 %v2622
    %2843 = vmatpush1.bf16.msra.mxu0 %v2621
    %2844 = vmatprep.subr.bf16.mxu0 %v2626
    %2845 = vmatpush1.bf16.msra.mxu0 %v2625
    %2846 = vmatprep.subr.bf16.mxu0 %v2630
    %2847 = vmatpush1.bf16.msra.mxu0 %v2629
    %2848 = vmatprep.subr.bf16.mxu0 %v2634
    %2849 = vmatpush1.bf16.msra.mxu0 %v2633
    %2850 = vmatprep.subr.bf16.mxu0 %v2638
    %2851 = vmatpush1.bf16.msra.mxu0 %v2637
    %2852 = vmatprep.subr.bf16.mxu0 %v2642
    %2853 = vmatpush1.bf16.msra.mxu0 %v2641
    %2854 = vmatprep.subr.bf16.mxu0 %v2646
    %2855 = vmatpush1.bf16.msra.mxu0 %v2645
    %2856 = vmatprep.subr.bf16.mxu0 %v2650
    %2857 = vmatpush1.bf16.msra.mxu0 %v2649
    %2858 = vmatprep.subr.bf16.mxu0 %v2654
    %2859 = vmatpush1.bf16.msra.mxu0 %v2653
    %2860 = vmatprep.subr.bf16.mxu0 %v2658
    %2861 = vmatpush1.bf16.msra.mxu0 %v2657
    %2862 = vmatprep.mubr.bf16.mxu0 %v1998
    %2863 = vmatmul.mubr.bf16.gmra.mrb[0].mxu0 %v1997
    %v2864 = vpop.f32.mrb[0].mxu0
    %v2865 = vadd.f32 %v2824, %v2864
    %v2866 = vpop.f32.mrb[0].mxu0
    %v2867 = vadd.f32 %v2826, %v2866
    %v2868 = vpop.f32.mrb[0].mxu0
    %v2869 = vpop.f32.mrb[0].mxu0
    %2870 = vdwg.mxu0
    %2871 = vmatprep.subr.bf16.mxu0 %v2536
    %2872 = vmatpush1.bf16.msra.mxu0 %v2535
    %2873 = vmatprep.subr.bf16.mxu0 %v2540
    %2874 = vmatpush1.bf16.msra.mxu0 %v2539
    %2875 = vmatprep.subr.bf16.mxu0 %v2544
    %2876 = vmatpush1.bf16.msra.mxu0 %v2543
    %2877 = vmatprep.subr.bf16.mxu0 %v2548
    %2878 = vmatpush1.bf16.msra.mxu0 %v2547
    %2879 = vmatprep.subr.bf16.mxu0 %v2552
    %2880 = vmatpush1.bf16.msra.mxu0 %v2551
    %2881 = vmatprep.subr.bf16.mxu0 %v2556
    %2882 = vmatpush1.bf16.msra.mxu0 %v2555
    %2883 = vmatprep.subr.bf16.mxu0 %v2560
    %2884 = vmatpush1.bf16.msra.mxu0 %v2559
    %2885 = vmatprep.subr.bf16.mxu0 %v2564
    %2886 = vmatpush1.bf16.msra.mxu0 %v2563
    %2887 = vmatprep.subr.bf16.mxu0 %v2568
    %2888 = vmatpush1.bf16.msra.mxu0 %v2567
    %2889 = vmatprep.subr.bf16.mxu0 %v2572
    %2890 = vmatpush1.bf16.msra.mxu0 %v2571
    %2891 = vmatprep.subr.bf16.mxu0 %v2576
    %2892 = vmatpush1.bf16.msra.mxu0 %v2575
    %2893 = vmatprep.subr.bf16.mxu0 %v2580
    %2894 = vmatpush1.bf16.msra.mxu0 %v2579
    %2895 = vmatprep.subr.bf16.mxu0 %v2584
    %2896 = vmatpush1.bf16.msra.mxu0 %v2583
    %2897 = vmatprep.subr.bf16.mxu0 %v2588
    %2898 = vmatpush1.bf16.msra.mxu0 %v2587
    %2899 = vmatprep.subr.bf16.mxu0 %v2592
    %2900 = vmatpush1.bf16.msra.mxu0 %v2591
    %2901 = vmatprep.subr.bf16.mxu0 %v2596
    %2902 = vmatpush1.bf16.msra.mxu0 %v2595
    %2903 = vmatprep.mubr.bf16.mxu0 %v1996
    %2904 = vmatmul.mubr.bf16.gmra.mrb[0].mxu0 %v1995
    %v2905 = vpop.f32.mrb[0].mxu0
    %v2906 = vadd.f32 %v2140, %v2905
    %v2907 = vpop.f32.mrb[0].mxu0
    %v2908 = vadd.f32 %v2144, %v2907
    %v2909 = vpop.f32.mrb[0].mxu0
    %v2910 = vpop.f32.mrb[0].mxu0
    %2911 = vdwg.mxu0
    %2912 = vmatprep.subr.bf16.mxu0 %v2600
    %2913 = vmatpush1.bf16.msra.mxu0 %v2599
    %2914 = vmatprep.subr.bf16.mxu0 %v2604
    %2915 = vmatpush1.bf16.msra.mxu0 %v2603
    %2916 = vmatprep.subr.bf16.mxu0 %v2608
    %2917 = vmatpush1.bf16.msra.mxu0 %v2607
    %2918 = vmatprep.subr.bf16.mxu0 %v2612
    %2919 = vmatpush1.bf16.msra.mxu0 %v2611
    %2920 = vmatprep.subr.bf16.mxu0 %v2616
    %2921 = vmatpush1.bf16.msra.mxu0 %v2615
    %2922 = vmatprep.subr.bf16.mxu0 %v2620
    %2923 = vmatpush1.bf16.msra.mxu0 %v2619
    %2924 = vmatprep.subr.bf16.mxu0 %v2624
    %2925 = vmatpush1.bf16.msra.mxu0 %v2623
    %2926 = vmatprep.subr.bf16.mxu0 %v2628
    %2927 = vmatpush1.bf16.msra.mxu0 %v2627
    %2928 = vmatprep.subr.bf16.mxu0 %v2632
    %2929 = vmatpush1.bf16.msra.mxu0 %v2631
    %2930 = vmatprep.subr.bf16.mxu0 %v2636
    %2931 = vmatpush1.bf16.msra.mxu0 %v2635
    %2932 = vmatprep.subr.bf16.mxu0 %v2640
    %2933 = vmatpush1.bf16.msra.mxu0 %v2639
    %2934 = vmatprep.subr.bf16.mxu0 %v2644
    %2935 = vmatpush1.bf16.msra.mxu0 %v2643
    %2936 = vmatprep.subr.bf16.mxu0 %v2648
    %2937 = vmatpush1.bf16.msra.mxu0 %v2647
    %2938 = vmatprep.subr.bf16.mxu0 %v2652
    %2939 = vmatpush1.bf16.msra.mxu0 %v2651
    %2940 = vmatprep.subr.bf16.mxu0 %v2656
    %2941 = vmatpush1.bf16.msra.mxu0 %v2655
    %2942 = vmatprep.subr.bf16.mxu0 %v2660
    %2943 = vmatpush1.bf16.msra.mxu0 %v2659
    %2944 = vmatprep.mubr.bf16.mxu0 %v1998
    %2945 = vmatmul.mubr.bf16.gmra.mrb[0].mxu0 %v1997
    %v2946 = vpop.f32.mrb[0].mxu0
    %v2947 = vadd.f32 %v2906, %v2946
    %v2948 = vpop.f32.mrb[0].mxu0
    %v2949 = vadd.f32 %v2908, %v2948
    %v2950 = vpop.f32.mrb[0].mxu0
    %v2951 = vpop.f32.mrb[0].mxu0
    %2952 = vdwg.mxu0
    %v2953 = vmax.f32 %v2865, 0.0
    %v2954 = vmax.f32 %v2867, 0.0
    %v2955 = vmax.f32 %v2947, 0.0
    %v2956 = vmax.f32 %v2949, 0.0
    %v2957 = vpack.c.bf16 %v2953, %v2953
    %v2958 = vpack.c.bf16 %v2954, %v2954
    %v2959 = vpack.c.bf16 %v2955, %v2955
    %v2960 = vpack.c.bf16 %v2956, %v2956
    %v2961 = vld [vmem:[#allocation21] sm:$0xff]
    %v2962 = vld [vmem:[#allocation21 + $0x8] sm:$0xff]
    %v2963 = vld [vmem:[#allocation21 + $0x10] sm:$0xff]
    %v2964 = vld [vmem:[#allocation21 + $0x18] sm:$0xff]
    %v2965 = vld [vmem:[#allocation21 + $0x20] sm:$0xff]
    %v2966 = vld [vmem:[#allocation21 + $0x28] sm:$0xff]
    %v2967 = vld [vmem:[#allocation21 + $0x30] sm:$0xff]
    %v2968 = vld [vmem:[#allocation21 + $0x38] sm:$0xff]
    %v2969 = vld [vmem:[#allocation21 + $0x40] sm:$0xff]
    %v2970 = vld [vmem:[#allocation21 + $0x48] sm:$0xff]
    %v2971 = vld [vmem:[#allocation21 + $0x50] sm:$0xff]
    %v2972 = vld [vmem:[#allocation21 + $0x58] sm:$0xff]
    %v2973 = vld [vmem:[#allocation21 + $0x60] sm:$0xff]
    %v2974 = vld [vmem:[#allocation21 + $0x68] sm:$0xff]
    %v2975 = vld [vmem:[#allocation21 + $0x70] sm:$0xff]
    %v2976 = vld [vmem:[#allocation21 + $0x78] sm:$0xff]
    %v2977 = vld [vmem:[#allocation21 + $0x80] sm:$0xff]
    %v2978 = vld [vmem:[#allocation21 + $0x88] sm:$0xff]
    %v2979 = vld [vmem:[#allocation21 + $0x90] sm:$0xff]
    %v2980 = vld [vmem:[#allocation21 + $0x98] sm:$0xff]
    %v2981 = vld [vmem:[#allocation21 + $0xa0] sm:$0xff]
    %v2982 = vld [vmem:[#allocation21 + $0xa8] sm:$0xff]
    %v2983 = vld [vmem:[#allocation21 + $0xb0] sm:$0xff]
    %v2984 = vld [vmem:[#allocation21 + $0xb8] sm:$0xff]
    %v2985 = vld [vmem:[#allocation21 + $0xc0] sm:$0xff]
    %v2986 = vld [vmem:[#allocation21 + $0xc8] sm:$0xff]
    %v2987 = vld [vmem:[#allocation21 + $0xd0] sm:$0xff]
    %v2988 = vld [vmem:[#allocation21 + $0xd8] sm:$0xff]
    %v2989 = vld [vmem:[#allocation21 + $0xe0] sm:$0xff]
    %v2990 = vld [vmem:[#allocation21 + $0xe8] sm:$0xff]
    %v2991 = vld [vmem:[#allocation21 + $0xf0] sm:$0xff]
    %v2992 = vld [vmem:[#allocation21 + $0xf8] sm:$0xff]
    %v2993 = vld [vmem:[#allocation21 + $0x100] sm:$0xff]
    %v2994 = vld [vmem:[#allocation21 + $0x108] sm:$0xff]
    %v2995 = vld [vmem:[#allocation21 + $0x110] sm:$0xff]
    %v2996 = vld [vmem:[#allocation21 + $0x118] sm:$0xff]
    %v2997 = vld [vmem:[#allocation21 + $0x120] sm:$0xff]
    %v2998 = vld [vmem:[#allocation21 + $0x128] sm:$0xff]
    %v2999 = vld [vmem:[#allocation21 + $0x130] sm:$0xff]
    %v3000 = vld [vmem:[#allocation21 + $0x138] sm:$0xff]
    %v3001 = vld [vmem:[#allocation21 + $0x140] sm:$0xff]
    %v3002 = vld [vmem:[#allocation21 + $0x148] sm:$0xff]
    %v3003 = vld [vmem:[#allocation21 + $0x150] sm:$0xff]
    %v3004 = vld [vmem:[#allocation21 + $0x158] sm:$0xff]
    %v3005 = vld [vmem:[#allocation21 + $0x160] sm:$0xff]
    %v3006 = vld [vmem:[#allocation21 + $0x168] sm:$0xff]
    %v3007 = vld [vmem:[#allocation21 + $0x170] sm:$0xff]
    %v3008 = vld [vmem:[#allocation21 + $0x178] sm:$0xff]
    %v3009 = vld [vmem:[#allocation21 + $0x180] sm:$0xff]
    %v3010 = vld [vmem:[#allocation21 + $0x188] sm:$0xff]
    %v3011 = vld [vmem:[#allocation21 + $0x190] sm:$0xff]
    %v3012 = vld [vmem:[#allocation21 + $0x198] sm:$0xff]
    %v3013 = vld [vmem:[#allocation21 + $0x1a0] sm:$0xff]
    %v3014 = vld [vmem:[#allocation21 + $0x1a8] sm:$0xff]
    %v3015 = vld [vmem:[#allocation21 + $0x1b0] sm:$0xff]
    %v3016 = vld [vmem:[#allocation21 + $0x1b8] sm:$0xff]
    %v3017 = vld [vmem:[#allocation21 + $0x1c0] sm:$0xff]
    %v3018 = vld [vmem:[#allocation21 + $0x1c8] sm:$0xff]
    %v3019 = vld [vmem:[#allocation21 + $0x1d0] sm:$0xff]
    %v3020 = vld [vmem:[#allocation21 + $0x1d8] sm:$0xff]
    %v3021 = vld [vmem:[#allocation21 + $0x1e0] sm:$0xff]
    %v3022 = vld [vmem:[#allocation21 + $0x1e8] sm:$0xff]
    %v3023 = vld [vmem:[#allocation21 + $0x1f0] sm:$0xff]
    %v3024 = vld [vmem:[#allocation21 + $0x1f8] sm:$0xff]
    %v3025 = vld [vmem:[#allocation23] sm:$0x3]
    %v3027 = vlaneseq
    %v3028 = vshrl.u32 %v3027, 7
    %v3029 = vsub.s32 0, %v3028
    %v3030 = vrot.slane %v3025, %v3029
    %v3031 = vlaneseq
    %v3032 = vshrl.u32 %v3031, 7
    %v3033 = vsub.s32 1, %v3032
    %v3034 = vrot.slane %v3025, %v3033
    %v3101 = vunpack.c.l.b16 %v2961
    %v3102 = vunpack.c.h.b16 %v2961
    %v3103 = vunpack.c.l.b16 %v2962
    %v3104 = vunpack.c.h.b16 %v2962
    %v3105 = vunpack.c.l.b16 %v2963
    %v3106 = vunpack.c.h.b16 %v2963
    %v3107 = vunpack.c.l.b16 %v2964
    %v3108 = vunpack.c.h.b16 %v2964
    %v3109 = vunpack.c.l.b16 %v2965
    %v3110 = vunpack.c.h.b16 %v2965
    %v3111 = vunpack.c.l.b16 %v2966
    %v3112 = vunpack.c.h.b16 %v2966
    %v3113 = vunpack.c.l.b16 %v2967
    %v3114 = vunpack.c.h.b16 %v2967
    %v3115 = vunpack.c.l.b16 %v2968
    %v3116 = vunpack.c.h.b16 %v2968
    %v3117 = vunpack.c.l.b16 %v2969
    %v3118 = vunpack.c.h.b16 %v2969
    %v3119 = vunpack.c.l.b16 %v2970
    %v3120 = vunpack.c.h.b16 %v2970
    %v3121 = vunpack.c.l.b16 %v2971
    %v3122 = vunpack.c.h.b16 %v2971
    %v3123 = vunpack.c.l.b16 %v2972
    %v3124 = vunpack.c.h.b16 %v2972
    %v3125 = vunpack.c.l.b16 %v2973
    %v3126 = vunpack.c.h.b16 %v2973
    %v3127 = vunpack.c.l.b16 %v2974
    %v3128 = vunpack.c.h.b16 %v2974
    %v3129 = vunpack.c.l.b16 %v2975
    %v3130 = vunpack.c.h.b16 %v2975
    %v3131 = vunpack.c.l.b16 %v2976
    %v3132 = vunpack.c.h.b16 %v2976
    %v3133 = vunpack.c.l.b16 %v2977
    %v3134 = vunpack.c.h.b16 %v2977
    %v3135 = vunpack.c.l.b16 %v2978
    %v3136 = vunpack.c.h.b16 %v2978
    %v3137 = vunpack.c.l.b16 %v2979
    %v3138 = vunpack.c.h.b16 %v2979
    %v3139 = vunpack.c.l.b16 %v2980
    %v3140 = vunpack.c.h.b16 %v2980
    %v3141 = vunpack.c.l.b16 %v2981
    %v3142 = vunpack.c.h.b16 %v2981
    %v3143 = vunpack.c.l.b16 %v2982
    %v3144 = vunpack.c.h.b16 %v2982
    %v3145 = vunpack.c.l.b16 %v2983
    %v3146 = vunpack.c.h.b16 %v2983
    %v3147 = vunpack.c.l.b16 %v2984
    %v3148 = vunpack.c.h.b16 %v2984
    %v3149 = vunpack.c.l.b16 %v2985
    %v3150 = vunpack.c.h.b16 %v2985
    %v3151 = vunpack.c.l.b16 %v2986
    %v3152 = vunpack.c.h.b16 %v2986
    %v3153 = vunpack.c.l.b16 %v2987
    %v3154 = vunpack.c.h.b16 %v2987
    %v3155 = vunpack.c.l.b16 %v2988
    %v3156 = vunpack.c.h.b16 %v2988
    %v3157 = vunpack.c.l.b16 %v2989
    %v3158 = vunpack.c.h.b16 %v2989
    %v3159 = vunpack.c.l.b16 %v2990
    %v3160 = vunpack.c.h.b16 %v2990
    %v3161 = vunpack.c.l.b16 %v2991
    %v3162 = vunpack.c.h.b16 %v2991
    %v3163 = vunpack.c.l.b16 %v2992
    %v3164 = vunpack.c.h.b16 %v2992
    %v3165 = vunpack.c.l.b16 %v2993
    %v3166 = vunpack.c.h.b16 %v2993
    %v3167 = vunpack.c.l.b16 %v2994
    %v3168 = vunpack.c.h.b16 %v2994
    %v3169 = vunpack.c.l.b16 %v2995
    %v3170 = vunpack.c.h.b16 %v2995
    %v3171 = vunpack.c.l.b16 %v2996
    %v3172 = vunpack.c.h.b16 %v2996
    %v3173 = vunpack.c.l.b16 %v2997
    %v3174 = vunpack.c.h.b16 %v2997
    %v3175 = vunpack.c.l.b16 %v2998
    %v3176 = vunpack.c.h.b16 %v2998
    %v3177 = vunpack.c.l.b16 %v2999
    %v3178 = vunpack.c.h.b16 %v2999
    %v3179 = vunpack.c.l.b16 %v3000
    %v3180 = vunpack.c.h.b16 %v3000
    %v3181 = vunpack.c.l.b16 %v3001
    %v3182 = vunpack.c.h.b16 %v3001
    %v3183 = vunpack.c.l.b16 %v3002
    %v3184 = vunpack.c.h.b16 %v3002
    %v3185 = vunpack.c.l.b16 %v3003
    %v3186 = vunpack.c.h.b16 %v3003
    %v3187 = vunpack.c.l.b16 %v3004
    %v3188 = vunpack.c.h.b16 %v3004
    %v3189 = vunpack.c.l.b16 %v3005
    %v3190 = vunpack.c.h.b16 %v3005
    %v3191 = vunpack.c.l.b16 %v3006
    %v3192 = vunpack.c.h.b16 %v3006
    %v3193 = vunpack.c.l.b16 %v3007
    %v3194 = vunpack.c.h.b16 %v3007
    %v3195 = vunpack.c.l.b16 %v3008
    %v3196 = vunpack.c.h.b16 %v3008
    %v3197 = vunpack.c.l.b16 %v3009
    %v3198 = vunpack.c.h.b16 %v3009
    %v3199 = vunpack.c.l.b16 %v3010
    %v3200 = vunpack.c.h.b16 %v3010
    %v3201 = vunpack.c.l.b16 %v3011
    %v3202 = vunpack.c.h.b16 %v3011
    %v3203 = vunpack.c.l.b16 %v3012
    %v3204 = vunpack.c.h.b16 %v3012
    %v3205 = vunpack.c.l.b16 %v3013
    %v3206 = vunpack.c.h.b16 %v3013
    %v3207 = vunpack.c.l.b16 %v3014
    %v3208 = vunpack.c.h.b16 %v3014
    %v3209 = vunpack.c.l.b16 %v3015
    %v3210 = vunpack.c.h.b16 %v3015
    %v3211 = vunpack.c.l.b16 %v3016
    %v3212 = vunpack.c.h.b16 %v3016
    %v3213 = vunpack.c.l.b16 %v3017
    %v3214 = vunpack.c.h.b16 %v3017
    %v3215 = vunpack.c.l.b16 %v3018
    %v3216 = vunpack.c.h.b16 %v3018
    %v3217 = vunpack.c.l.b16 %v3019
    %v3218 = vunpack.c.h.b16 %v3019
    %v3219 = vunpack.c.l.b16 %v3020
    %v3220 = vunpack.c.h.b16 %v3020
    %v3221 = vunpack.c.l.b16 %v3021
    %v3222 = vunpack.c.h.b16 %v3021
    %v3223 = vunpack.c.l.b16 %v3022
    %v3224 = vunpack.c.h.b16 %v3022
    %v3225 = vunpack.c.l.b16 %v3023
    %v3226 = vunpack.c.h.b16 %v3023
    %v3227 = vunpack.c.l.b16 %v3024
    %v3228 = vunpack.c.h.b16 %v3024
    %v3229 = vpack.c.b16 %v3103, %v3101
    %v3230 = vpack.c.b16 %v3104, %v3102
    %v3231 = vpack.c.b16 %v3107, %v3105
    %v3232 = vpack.c.b16 %v3108, %v3106
    %v3233 = vpack.c.b16 %v3111, %v3109
    %v3234 = vpack.c.b16 %v3112, %v3110
    %v3235 = vpack.c.b16 %v3115, %v3113
    %v3236 = vpack.c.b16 %v3116, %v3114
    %v3237 = vpack.c.b16 %v3119, %v3117
    %v3238 = vpack.c.b16 %v3120, %v3118
    %v3239 = vpack.c.b16 %v3123, %v3121
    %v3240 = vpack.c.b16 %v3124, %v3122
    %v3241 = vpack.c.b16 %v3127, %v3125
    %v3242 = vpack.c.b16 %v3128, %v3126
    %v3243 = vpack.c.b16 %v3131, %v3129
    %v3244 = vpack.c.b16 %v3132, %v3130
    %v3245 = vpack.c.b16 %v3135, %v3133
    %v3246 = vpack.c.b16 %v3136, %v3134
    %v3247 = vpack.c.b16 %v3139, %v3137
    %v3248 = vpack.c.b16 %v3140, %v3138
    %v3249 = vpack.c.b16 %v3143, %v3141
    %v3250 = vpack.c.b16 %v3144, %v3142
    %v3251 = vpack.c.b16 %v3147, %v3145
    %v3252 = vpack.c.b16 %v3148, %v3146
    %v3253 = vpack.c.b16 %v3151, %v3149
    %v3254 = vpack.c.b16 %v3152, %v3150
    %v3255 = vpack.c.b16 %v3155, %v3153
    %v3256 = vpack.c.b16 %v3156, %v3154
    %v3257 = vpack.c.b16 %v3159, %v3157
    %v3258 = vpack.c.b16 %v3160, %v3158
    %v3259 = vpack.c.b16 %v3163, %v3161
    %v3260 = vpack.c.b16 %v3164, %v3162
    %v3261 = vpack.c.b16 %v3167, %v3165
    %v3262 = vpack.c.b16 %v3168, %v3166
    %v3263 = vpack.c.b16 %v3171, %v3169
    %v3264 = vpack.c.b16 %v3172, %v3170
    %v3265 = vpack.c.b16 %v3175, %v3173
    %v3266 = vpack.c.b16 %v3176, %v3174
    %v3267 = vpack.c.b16 %v3179, %v3177
    %v3268 = vpack.c.b16 %v3180, %v3178
    %v3269 = vpack.c.b16 %v3183, %v3181
    %v3270 = vpack.c.b16 %v3184, %v3182
    %v3271 = vpack.c.b16 %v3187, %v3185
    %v3272 = vpack.c.b16 %v3188, %v3186
    %v3273 = vpack.c.b16 %v3191, %v3189
    %v3274 = vpack.c.b16 %v3192, %v3190
    %v3275 = vpack.c.b16 %v3195, %v3193
    %v3276 = vpack.c.b16 %v3196, %v3194
    %v3277 = vpack.c.b16 %v3199, %v3197
    %v3278 = vpack.c.b16 %v3200, %v3198
    %v3279 = vpack.c.b16 %v3203, %v3201
    %v3280 = vpack.c.b16 %v3204, %v3202
    %v3281 = vpack.c.b16 %v3207, %v3205
    %v3282 = vpack.c.b16 %v3208, %v3206
    %v3283 = vpack.c.b16 %v3211, %v3209
    %v3284 = vpack.c.b16 %v3212, %v3210
    %v3285 = vpack.c.b16 %v3215, %v3213
    %v3286 = vpack.c.b16 %v3216, %v3214
    %v3287 = vpack.c.b16 %v3219, %v3217
    %v3288 = vpack.c.b16 %v3220, %v3218
    %v3289 = vpack.c.b16 %v3223, %v3221
    %v3290 = vpack.c.b16 %v3224, %v3222
    %v3291 = vpack.c.b16 %v3227, %v3225
    %v3292 = vpack.c.b16 %v3228, %v3226
    %3357 = vmatprep.subr.bf16.mxu0 %v3230
    %3358 = vmatpush1.bf16.msra.mxu0 %v3229
    %3359 = vmatprep.subr.bf16.mxu0 %v3232
    %3360 = vmatpush1.bf16.msra.mxu0 %v3231
    %3361 = vmatprep.subr.bf16.mxu0 %v3234
    %3362 = vmatpush1.bf16.msra.mxu0 %v3233
    %3363 = vmatprep.subr.bf16.mxu0 %v3236
    %3364 = vmatpush1.bf16.msra.mxu0 %v3235
    %3365 = vmatprep.subr.bf16.mxu0 %v3238
    %3366 = vmatpush1.bf16.msra.mxu0 %v3237
    %3367 = vmatprep.subr.bf16.mxu0 %v3240
    %3368 = vmatpush1.bf16.msra.mxu0 %v3239
    %3369 = vmatprep.subr.bf16.mxu0 %v3242
    %3370 = vmatpush1.bf16.msra.mxu0 %v3241
    %3371 = vmatprep.subr.bf16.mxu0 %v3244
    %3372 = vmatpush1.bf16.msra.mxu0 %v3243
    %3373 = vmatprep.subr.bf16.mxu0 %v3246
    %3374 = vmatpush1.bf16.msra.mxu0 %v3245
    %3375 = vmatprep.subr.bf16.mxu0 %v3248
    %3376 = vmatpush1.bf16.msra.mxu0 %v3247
    %3377 = vmatprep.subr.bf16.mxu0 %v3250
    %3378 = vmatpush1.bf16.msra.mxu0 %v3249
    %3379 = vmatprep.subr.bf16.mxu0 %v3252
    %3380 = vmatpush1.bf16.msra.mxu0 %v3251
    %3381 = vmatprep.subr.bf16.mxu0 %v3254
    %3382 = vmatpush1.bf16.msra.mxu0 %v3253
    %3383 = vmatprep.subr.bf16.mxu0 %v3256
    %3384 = vmatpush1.bf16.msra.mxu0 %v3255
    %3385 = vmatprep.subr.bf16.mxu0 %v3258
    %3386 = vmatpush1.bf16.msra.mxu0 %v3257
    %3387 = vmatprep.subr.bf16.mxu0 %v3260
    %3388 = vmatpush1.bf16.msra.mxu0 %v3259
    %3389 = vmatprep.mubr.bf16.mxu0 %v2958
    %3390 = vmatmul.mubr.bf16.gmra.mrb[0].mxu0 %v2957
    %v3391 = vpop.f32.mrb[0].mxu0
    %v3392 = vadd.f32 %v3030, %v3391
    %v3393 = vpop.f32.mrb[0].mxu0
    %v3394 = vadd.f32 %v3034, %v3393
    %v3395 = vpop.f32.mrb[0].mxu0
    %v3396 = vpop.f32.mrb[0].mxu0
    %3397 = vdwg.mxu0
    %3398 = vmatprep.subr.bf16.mxu0 %v3262
    %3399 = vmatpush1.bf16.msra.mxu0 %v3261
    %3400 = vmatprep.subr.bf16.mxu0 %v3264
    %3401 = vmatpush1.bf16.msra.mxu0 %v3263
    %3402 = vmatprep.subr.bf16.mxu0 %v3266
    %3403 = vmatpush1.bf16.msra.mxu0 %v3265
    %3404 = vmatprep.subr.bf16.mxu0 %v3268
    %3405 = vmatpush1.bf16.msra.mxu0 %v3267
    %3406 = vmatprep.subr.bf16.mxu0 %v3270
    %3407 = vmatpush1.bf16.msra.mxu0 %v3269
    %3408 = vmatprep.subr.bf16.mxu0 %v3272
    %3409 = vmatpush1.bf16.msra.mxu0 %v3271
    %3410 = vmatprep.subr.bf16.mxu0 %v3274
    %3411 = vmatpush1.bf16.msra.mxu0 %v3273
    %3412 = vmatprep.subr.bf16.mxu0 %v3276
    %3413 = vmatpush1.bf16.msra.mxu0 %v3275
    %3414 = vmatprep.subr.bf16.mxu0 %v3278
    %3415 = vmatpush1.bf16.msra.mxu0 %v3277
    %3416 = vmatprep.subr.bf16.mxu0 %v3280
    %3417 = vmatpush1.bf16.msra.mxu0 %v3279
    %3418 = vmatprep.subr.bf16.mxu0 %v3282
    %3419 = vmatpush1.bf16.msra.mxu0 %v3281
    %3420 = vmatprep.subr.bf16.mxu0 %v3284
    %3421 = vmatpush1.bf16.msra.mxu0 %v3283
    %3422 = vmatprep.subr.bf16.mxu0 %v3286
    %3423 = vmatpush1.bf16.msra.mxu0 %v3285
    %3424 = vmatprep.subr.bf16.mxu0 %v3288
    %3425 = vmatpush1.bf16.msra.mxu0 %v3287
    %3426 = vmatprep.subr.bf16.mxu0 %v3290
    %3427 = vmatpush1.bf16.msra.mxu0 %v3289
    %3428 = vmatprep.subr.bf16.mxu0 %v3292
    %3429 = vmatpush1.bf16.msra.mxu0 %v3291
    %3430 = vmatprep.mubr.bf16.mxu0 %v2960
    %3431 = vmatmul.mubr.bf16.gmra.mrb[0].mxu0 %v2959
    %v3432 = vpop.f32.mrb[0].mxu0
    %v3433 = vadd.f32 %v3392, %v3432
    %v3434 = vpop.f32.mrb[0].mxu0
    %v3435 = vadd.f32 %v3394, %v3434
    %v3436 = vpop.f32.mrb[0].mxu0
    %v3437 = vpop.f32.mrb[0].mxu0
    %3438 = vdwg.mxu0
    %v3439 = vmax.f32 %v3433, 0.0
    %v3440 = vmax.f32 %v3435, 0.0
    %v3441 = vld [vmem:[#allocation24] sm:$0xff]
    %v3442 = vld [vmem:[#allocation24 + $0x8] sm:$0xff]
    %v3443 = vld [vmem:[#allocation24 + $0x10] sm:$0xff]
    %v3444 = vld [vmem:[#allocation24 + $0x18] sm:$0xff]
    %v3445 = vld [vmem:[#allocation24 + $0x20] sm:$0xff]
    %v3446 = vld [vmem:[#allocation24 + $0x28] sm:$0xff]
    %v3447 = vld [vmem:[#allocation24 + $0x30] sm:$0xff]
    %v3448 = vld [vmem:[#allocation24 + $0x38] sm:$0xff]
    %v3449 = vld [vmem:[#allocation24 + $0x40] sm:$0xff]
    %v3450 = vld [vmem:[#allocation24 + $0x48] sm:$0xff]
    %v3451 = vld [vmem:[#allocation24 + $0x50] sm:$0xff]
    %v3452 = vld [vmem:[#allocation24 + $0x58] sm:$0xff]
    %v3453 = vld [vmem:[#allocation24 + $0x60] sm:$0xff]
    %v3454 = vld [vmem:[#allocation24 + $0x68] sm:$0xff]
    %v3455 = vld [vmem:[#allocation24 + $0x70] sm:$0xff]
    %v3456 = vld [vmem:[#allocation24 + $0x78] sm:$0xff]
    %v3457 = vld [vmem:[#allocation24 + $0x80] sm:$0xff]
    %v3458 = vld [vmem:[#allocation24 + $0x88] sm:$0xff]
    %v3459 = vld [vmem:[#allocation24 + $0x90] sm:$0xff]
    %v3460 = vld [vmem:[#allocation24 + $0x98] sm:$0xff]
    %v3461 = vld [vmem:[#allocation24 + $0xa0] sm:$0xff]
    %v3462 = vld [vmem:[#allocation24 + $0xa8] sm:$0xff]
    %v3463 = vld [vmem:[#allocation24 + $0xb0] sm:$0xff]
    %v3464 = vld [vmem:[#allocation24 + $0xb8] sm:$0xff]
    %v3465 = vld [vmem:[#allocation24 + $0xc0] sm:$0xff]
    %v3466 = vld [vmem:[#allocation24 + $0xc8] sm:$0xff]
    %v3467 = vld [vmem:[#allocation24 + $0xd0] sm:$0xff]
    %v3468 = vld [vmem:[#allocation24 + $0xd8] sm:$0xff]
    %v3469 = vld [vmem:[#allocation24 + $0xe0] sm:$0xff]
    %v3470 = vld [vmem:[#allocation24 + $0xe8] sm:$0xff]
    %v3471 = vld [vmem:[#allocation24 + $0xf0] sm:$0xff]
    %v3472 = vld [vmem:[#allocation24 + $0xf8] sm:$0xff]
    %v3473 = vld [vmem:[#allocation26] sm:$0x1]
    %v3475 = vlaneseq
    %v3476 = vshrl.u32 %v3475, 7
    %v3477 = vsub.s32 0, %v3476
    %v3478 = vrot.slane %v3473, %v3477
    %3480 = vmatprep.subr.mxu0 0.0
    %3481 = vmatpush1.msra.mxu0 %v3441
    %3482 = vmatprep.subr.mxu0 0.0
    %3483 = vmatpush1.msra.mxu0 %v3442
    %3484 = vmatprep.subr.mxu0 0.0
    %3485 = vmatpush1.msra.mxu0 %v3443
    %3486 = vmatprep.subr.mxu0 0.0
    %3487 = vmatpush1.msra.mxu0 %v3444
    %3488 = vmatprep.subr.mxu0 0.0
    %3489 = vmatpush1.msra.mxu0 %v3445
    %3490 = vmatprep.subr.mxu0 0.0
    %3491 = vmatpush1.msra.mxu0 %v3446
    %3492 = vmatprep.subr.mxu0 0.0
    %3493 = vmatpush1.msra.mxu0 %v3447
    %3494 = vmatprep.subr.mxu0 0.0
    %3495 = vmatpush1.msra.mxu0 %v3448
    %3496 = vmatprep.subr.mxu0 0.0
    %3497 = vmatpush1.msra.mxu0 %v3449
    %3498 = vmatprep.subr.mxu0 0.0
    %3499 = vmatpush1.msra.mxu0 %v3450
    %3500 = vmatprep.subr.mxu0 0.0
    %3501 = vmatpush1.msra.mxu0 %v3451
    %3502 = vmatprep.subr.mxu0 0.0
    %3503 = vmatpush1.msra.mxu0 %v3452
    %3504 = vmatprep.subr.mxu0 0.0
    %3505 = vmatpush1.msra.mxu0 %v3453
    %3506 = vmatprep.subr.mxu0 0.0
    %3507 = vmatpush1.msra.mxu0 %v3454
    %3508 = vmatprep.subr.mxu0 0.0
    %3509 = vmatpush1.msra.mxu0 %v3455
    %3510 = vmatprep.subr.mxu0 0.0
    %3511 = vmatpush1.msra.mxu0 %v3456
    %3512 = vmatprep.subr.mxu0 0.0
    %3513 = vmatpush1.msra.mxu0 %v3457
    %3514 = vmatprep.subr.mxu0 0.0
    %3515 = vmatpush1.msra.mxu0 %v3458
    %3516 = vmatprep.subr.mxu0 0.0
    %3517 = vmatpush1.msra.mxu0 %v3459
    %3518 = vmatprep.subr.mxu0 0.0
    %3519 = vmatpush1.msra.mxu0 %v3460
    %3520 = vmatprep.subr.mxu0 0.0
    %3521 = vmatpush1.msra.mxu0 %v3461
    %3522 = vmatprep.subr.mxu0 0.0
    %3523 = vmatpush1.msra.mxu0 %v3462
    %3524 = vmatprep.subr.mxu0 0.0
    %3525 = vmatpush1.msra.mxu0 %v3463
    %3526 = vmatprep.subr.mxu0 0.0
    %3527 = vmatpush1.msra.mxu0 %v3464
    %3528 = vmatprep.subr.mxu0 0.0
    %3529 = vmatpush1.msra.mxu0 %v3465
    %3530 = vmatprep.subr.mxu0 0.0
    %3531 = vmatpush1.msra.mxu0 %v3466
    %3532 = vmatprep.subr.mxu0 0.0
    %3533 = vmatpush1.msra.mxu0 %v3467
    %3534 = vmatprep.subr.mxu0 0.0
    %3535 = vmatpush1.msra.mxu0 %v3468
    %3536 = vmatprep.subr.mxu0 0.0
    %3537 = vmatpush1.msra.mxu0 %v3469
    %3538 = vmatprep.subr.mxu0 0.0
    %3539 = vmatpush1.msra.mxu0 %v3470
    %3540 = vmatprep.subr.mxu0 0.0
    %3541 = vmatpush1.msra.mxu0 %v3471
    %3542 = vmatprep.subr.mxu0 0.0
    %3543 = vmatpush1.msra.mxu0 %v3472
    %3544 = vmatprep.mubr.f32.mxu0 %v3440
    %3545 = vmatmul.mubr.f32.gmra.mrb[0].mxu0 %v3439
    %v3546 = vpop.f32.mrb[0].mxu0
    %v3547 = vadd.f32 %v3478, %v3546
    %v3548 = vpop.f32.mrb[0].mxu0
    %3549 = vdwg.mxu0
    %3550 = vst [vmem:[#allocation27] sm:$0x3] %v3547
    // Predicated region
    $region106: #{signal_classifier_forward.1} parent=1 // pred_check
      _
    $region107: #{signal_classifier_forward.1} parent=1 // pred_check_branch
      %3552 = sbr.rel (0) target = $region109
    $region108: #{signal_classifier_forward.1} parent=1 // pred_region
      %s3554 = ssub.s32 32, 32
      %3555 = vsyncadd [#allocation8], %s3554
      %s3557 = sshll.u32 [#allocation27], 4
      %s3558 = int_to_ptr.vmem [resolvable:$true] %s3557
      %3560 = dma.vmem_to_hbm [thread:$0]  %s3558, 32, %s13, [#allocation8]
    $region109: #{signal_classifier_forward.1} parent=1 // pred_fallthru
      _
    // Predicated region
    $region110: #{signal_classifier_forward.1} parent=1 // pred_check
      _
    $region111: #{signal_classifier_forward.1} parent=1 // pred_check_branch
      %3562 = sbr.rel (0) target = $region113
    $region112: #{signal_classifier_forward.1} parent=1 // pred_region
      %3563 = dma.done [#allocation8], 32
    $region113: #{signal_classifier_forward.1} parent=1 // pred_fallthru
      _
    %3564 = vsyncpa [#allocation7], 1
    %3565 = vsyncpa [#allocation10], 1
    %3566 = vsyncpa [#allocation13], 1
    %3567 = vsyncpa [#allocation16], 1
    %3568 = vsyncpa [#allocation19], 1
    %3569 = vsyncpa [#allocation22], 1
    %3570 = vsyncpa [#allocation25], 1
    %3571 = vsyncpa [#allocation8], 1

</llo_original>
